<compile_context>
chip_gen: v7x
topology: tpu7x:2x2x1
jax: 0.10.0
libtpu: 0.0.40
codegen_flags: <defaults>
</compile_context>

<pallas_src>
import jax
import jax.numpy as jnp
from jax.experimental import pallas as pl
from jax.experimental.pallas import tpu as pltpu


# ---------------------------------------------------------------------------
# Kernel: one batch tile (feature-major, batch on lanes), full sequence in VMEM.
# ---------------------------------------------------------------------------
def path_encoder_kernel(len_ref, x_ref, wi_ref, bin_ref, wh_ref, bhn_ref,
                        out_ref, gi_ref):
    # Shapes (tile = batch columns on lanes):
    #   len_ref : (1, tile)     int32  valid length per path
    #   x_ref   : (T, H, tile)  f32    raw embeddings, time-major / feature-major
    #   wi_ref  : (6H, H)       f32    input->gates, rows [r_f,r_b,z_f,z_b,n_f,n_b]
    #   bin_ref : (6H, 1)       f32    bi (+ bh folded for r,z gates)
    #   wh_ref  : (6H, 2H)      f32    block-diagonal hidden->gates, cols [h_f | h_b]
    #   bhn_ref : (2H, 1)       f32    recurrent n-gate bias [fwd; bwd]
    #   out_ref : (2H, tile)    f32    final hidden [h_f; h_b]
    #   gi_ref  : (T, 6H, tile) f32    VMEM scratch: precomputed input projections
    T = x_ref.shape[0]
    H = x_ref.shape[1]
    tile = x_ref.shape[2]
    unroll = True if T <= 16 else 2

    lengths = len_ref[...]                       # (1, tile) int32
    wi = wi_ref[...]                             # (6H, H)
    wh = wh_ref[...]                             # (6H, 2H)
    # Hoisted broadcasts (loop-invariant; JAX does not CSE broadcast_in_dim).
    b_in = jnp.broadcast_to(bin_ref[...], (6 * H, tile))
    bhn = jnp.broadcast_to(bhn_ref[...], (2 * H, tile))
    row_is_fwd = jax.lax.broadcasted_iota(jnp.int32, (2 * H, 1), 0) < H

    # ---- Prologue: fused input projection for the whole tile ---------------
    # One (6H, H) @ (H, tile) MXU matmul per timestep, off the serial critical
    # path. Backward-direction rows are scattered to the reversed time slot so
    # the recurrence reads a single contiguous (6H, tile) slab per step.
    # All sublane slices are multiples of 8 (H % 8 == 0) -> aligned stores.
    def project(t, _):
        g = jnp.dot(wi, x_ref[t], preferred_element_type=jnp.float32) + b_in
        tb = T - 1 - t
        gi_ref[t, 0:H, :] = g[0:H]                   # r_f
        gi_ref[t, 2 * H:3 * H, :] = g[2 * H:3 * H]   # z_f
        gi_ref[t, 4 * H:5 * H, :] = g[4 * H:5 * H]   # n_f
        gi_ref[tb, H:2 * H, :] = g[H:2 * H]          # r_b (time-reversed slot)
        gi_ref[tb, 3 * H:4 * H, :] = g[3 * H:4 * H]  # z_b
        gi_ref[tb, 5 * H:6 * H, :] = g[5 * H:6 * H]  # n_b
        return 0

    jax.lax.fori_loop(0, T, project, 0, unroll=unroll)

    # ---- Serial bidirectional recurrence: ONE fused matmul per timestep ----
    def step(t, h):
        gi = gi_ref[t]                                              # (6H, tile)
        gh = jnp.dot(wh, h, preferred_element_type=jnp.float32)     # (6H, tile)
        r = jax.nn.sigmoid(gi[0:2 * H] + gh[0:2 * H])
        z = jax.nn.sigmoid(gi[2 * H:4 * H] + gh[2 * H:4 * H])
        n = jnp.tanh(gi[4 * H:6 * H] + r * (gh[4 * H:6 * H] + bhn))
        h_new = (1.0 - z) * n + z * h
        # Forward rows freeze once t >= L; backward rows stay 0 until
        # T-1-t < L, then consume x[L-1 .. 0] — exact pack_padded semantics.
        t_row = jnp.where(row_is_fwd, t, T - 1 - t)                 # (2H, 1)
        return jnp.where(t_row < lengths, h_new, h)

    h0 = jnp.zeros((2 * H, tile), jnp.float32)
    out_ref[...] = jax.lax.fori_loop(0, T, step, h0, unroll=unroll)


# ---------------------------------------------------------------------------
# Wrapper: fuse per-gate PyTorch-layout params into feature-major fused matrices.
# Row order of the 6H gate axis: [r_f, r_b, z_f, z_b, n_f, n_b].
# ---------------------------------------------------------------------------
def _fuse_params(p, H):
    zeros = jnp.zeros((H, H), jnp.float32)

    def gT(w, g):                  # (H,H) -> (out_feature, in_feature)
        return jnp.transpose(w[g])

    def col(b):                    # (1,H) -> (H,1)
        return jnp.transpose(b)

    wi_all = jnp.concatenate([
        gT(p["wi_f"], 0), gT(p["wi_b"], 0),
        gT(p["wi_f"], 1), gT(p["wi_b"], 1),
        gT(p["wi_f"], 2), gT(p["wi_b"], 2)], axis=0)                 # (6H, H)

    def rowf(w):
        return jnp.concatenate([w, zeros], axis=1)                   # acts on h_f

    def rowb(w):
        return jnp.concatenate([zeros, w], axis=1)                   # acts on h_b

    wh_blk = jnp.concatenate([
        rowf(gT(p["wh_f"], 0)), rowb(gT(p["wh_b"], 0)),
        rowf(gT(p["wh_f"], 1)), rowb(gT(p["wh_b"], 1)),
        rowf(gT(p["wh_f"], 2)), rowb(gT(p["wh_b"], 2))], axis=0)     # (6H, 2H)

    # Fold bh_r / bh_z into the input projection; bh_n must stay inside r*(...).
    b_in = jnp.concatenate([
        col(p["bi_f"][0] + p["bh_f"][0]), col(p["bi_b"][0] + p["bh_b"][0]),
        col(p["bi_f"][1] + p["bh_f"][1]), col(p["bi_b"][1] + p["bh_b"][1]),
        col(p["bi_f"][2]),                col(p["bi_b"][2])], axis=0)  # (6H, 1)
    bhn = jnp.concatenate([col(p["bh_f"][2]), col(p["bh_b"][2])], axis=0)  # (2H, 1)
    return wi_all, b_in, wh_blk, bhn


def path_encoder_forward(rel_path_emb, src_lengths, params):
    B, n1, n2, T, H = rel_path_emb.shape
    assert H % 8 == 0, "hidden_size must be a multiple of 8 for sublane alignment"
    bsz = B * n1 * n2
    x = rel_path_emb.reshape(bsz, T, H)
    lengths = src_lengths.reshape(bsz).astype(jnp.int32)

    wi_all, b_in, wh_blk, bhn = _fuse_params(params, H)

    # Feature-major / time-major layout so batch maps to lanes inside the kernel.
    x_fm = jnp.transpose(x, (1, 2, 0))        # (T, H, bsz)

    LANE = 128
    # VMEM bytes per batch column: x (double-buffered) + gi scratch + out (x2).
    per_col = 4 * (2 * T * H + 6 * T * H + 2 * 2 * H)
    budget = 24 * 1024 * 1024                 # safe on v7x (64 MiB VMEM); raise on v5e/v6e
    cap = max(LANE, (budget // per_col) // LANE * LANE)

    bsz_pad = pl.cdiv(bsz, LANE) * LANE
    tile = min(cap, bsz_pad)
    # Ensure >= 2 grid steps when possible so "parallel" feeds both v7x TensorCores.
    if bsz_pad >= 2 * LANE:
        tile = min(tile, pl.cdiv(bsz_pad // 2, LANE) * LANE)
    num_tiles = pl.cdiv(bsz_pad, tile)
    bsz_pad = num_tiles * tile

    if bsz_pad != bsz:
        pad = bsz_pad - bsz
        x_fm = jnp.pad(x_fm, ((0, 0), (0, 0), (0, pad)))
        lengths = jnp.pad(lengths, (0, pad))      # length 0 -> hidden stays zero
    len2d = lengths.reshape(1, bsz_pad)

    out = pl.pallas_call(
        path_encoder_kernel,
        out_shape=jax.ShapeDtypeStruct((2 * H, bsz_pad), jnp.float32),
        grid_spec=pltpu.PrefetchScalarGridSpec(
            num_scalar_prefetch=0,
            grid=(num_tiles,),
            in_specs=[
                pl.BlockSpec((1, tile), lambda b: (0, b)),           # lengths
                pl.BlockSpec((T, H, tile), lambda b: (0, 0, b)),     # x (raw)
                pl.BlockSpec((6 * H, H), lambda b: (0, 0)),          # Wi_all
                pl.BlockSpec((6 * H, 1), lambda b: (0, 0)),          # b_in
                pl.BlockSpec((6 * H, 2 * H), lambda b: (0, 0)),      # Wh block-diag
                pl.BlockSpec((2 * H, 1), lambda b: (0, 0)),          # bh_n
            ],
            out_specs=pl.BlockSpec((2 * H, tile), lambda b: (0, b)),
            scratch_shapes=[pltpu.VMEM((T, 6 * H, tile), jnp.float32)],
        ),
        compiler_params=pltpu.CompilerParams(
            dimension_semantics=("parallel",),      # batch tiles are independent
            vmem_limit_bytes=48 * 1024 * 1024),
    )(len2d, x_fm, wi_all, b_in, wh_blk, bhn)

    # (2H, bsz_pad) -> (bsz, 2H): columns [h_fwd | h_bwd], matching combine_bidir.
    return out[:, :bsz].T


# ---------------------------------------------------------------------------
# Parameters & pure-JAX reference (per-gate, PyTorch GRU layout)
# ---------------------------------------------------------------------------
def init_params(key, H):
    ks = jax.random.split(key, 8)
    scale = 1.0 / float(H) ** 0.5

    def u(k, shape):
        return jax.random.uniform(k, shape, jnp.float32, -scale, scale)

    return dict(
        wi_f=u(ks[0], (3, H, H)), wh_f=u(ks[1], (3, H, H)),
        bi_f=u(ks[2], (3, 1, H)), bh_f=u(ks[3], (3, 1, H)),
        wi_b=u(ks[4], (3, H, H)), wh_b=u(ks[5], (3, H, H)),
        bi_b=u(ks[6], (3, 1, H)), bh_b=u(ks[7], (3, 1, H)),
    )


def ref_forward(rel_path_emb, src_lengths, p):
    """Pure-JAX reference with identical semantics (length-masked bi-GRU)."""
    B, n1, n2, T, H = rel_path_emb.shape
    bsz = B * n1 * n2
    x = rel_path_emb.reshape(bsz, T, H).transpose(1, 0, 2)
    lengths = src_lengths.reshape(bsz).astype(jnp.int32)

    def cell(xt, h, wi, wh, bi, bh):
        gi_r = xt @ wi[0] + bi[0]
        gi_z = xt @ wi[1] + bi[1]
        gi_n = xt @ wi[2] + bi[2]
        gh_r = h @ wh[0] + bh[0]
        gh_z = h @ wh[1] + bh[1]
        gh_n = h @ wh[2] + bh[2]
        r = jax.nn.sigmoid(gi_r + gh_r)
        z = jax.nn.sigmoid(gi_z + gh_z)
        n = jnp.tanh(gi_n + r * gh_n)
        return (1.0 - z) * n + z * h

    h_f = jnp.zeros((bsz, H), jnp.float32)
    for t in range(T):
        hn = cell(x[t], h_f, p["wi_f"], p["wh_f"], p["bi_f"], p["bh_f"])
        h_f = jnp.where((t < lengths)[:, None], hn, h_f)
    h_b = jnp.zeros((bsz, H), jnp.float32)
    for t in range(T - 1, -1, -1):
        hn = cell(x[t], h_b, p["wi_b"], p["wh_b"], p["bi_b"], p["bh_b"])
        h_b = jnp.where((t < lengths)[:, None], hn, h_b)
    return jnp.concatenate([h_f, h_b], axis=-1)


if __name__ == "__main__":
    key = jax.random.PRNGKey(0)
    B, n1, n2, T, H = 2, 2, 2, 6, 32
    k1, k2, k3 = jax.random.split(key, 3)

    rel_path_emb = jax.random.normal(k1, (B, n1, n2, T, H), jnp.float32)
    src_lengths = jax.random.randint(k2, (B, n1, n2), 1, T + 1)
    params = init_params(k3, H)

    out = path_encoder_forward(rel_path_emb, src_lengths, params)
    out = jax.block_until_ready(out)

    ref = ref_forward(rel_path_emb, src_lengths, params)
    max_err = float(jnp.max(jnp.abs(out - ref)))
    assert out.shape == (B * n1 * n2, 2 * H), out.shape
    assert max_err < 2e-4, f"mismatch vs reference: {max_err}"

    print("KERNEL_OK")
</pallas_src>

<mosaic_0001>
module attributes {stable_mosaic.version = 11 : i64} {
  func.func @path_encoder_kernel(%arg0: i32, %arg1: memref<1x128xi32, #tpu.memory_space<vmem>>, %arg2: memref<6x32x128xf32, #tpu.memory_space<vmem>>, %arg3: memref<192x32xf32, #tpu.memory_space<vmem>>, %arg4: memref<192x1xf32, #tpu.memory_space<vmem>>, %arg5: memref<192x64xf32, #tpu.memory_space<vmem>>, %arg6: memref<64x1xf32, #tpu.memory_space<vmem>>, %arg7: memref<64x128xf32, #tpu.memory_space<vmem>>, %arg8: memref<6x192x128xf32, #tpu.memory_space<vmem>>) attributes {dimension_semantics = [#tpu.dimension_semantics<parallel>], iteration_bounds = array<i64: 1>, scalar_prefetch = 0 : i64, scratch_operands = 1 : i64, tpu.core_type = #tpu.core_type<tc>, window_params = [{transform_indices = @transform_0, window_bounds = array<i64: 1, 128>}, {transform_indices = @transform_1, window_bounds = array<i64: 6, 32, 128>}, {pipeline_mode = #tpu.pipeline_mode<synchronous>, transform_indices = @transform_2, window_bounds = array<i64: 192, 32>}, {pipeline_mode = #tpu.pipeline_mode<synchronous>, transform_indices = @transform_3, window_bounds = array<i64: 192, 1>}, {pipeline_mode = #tpu.pipeline_mode<synchronous>, transform_indices = @transform_4, window_bounds = array<i64: 192, 64>}, {pipeline_mode = #tpu.pipeline_mode<synchronous>, transform_indices = @transform_5, window_bounds = array<i64: 64, 1>}, {transform_indices = @transform_6, window_bounds = array<i64: 64, 128>}]} {
    %c0 = arith.constant 0 : index
    %c0_0 = arith.constant 0 : index
    %0 = vector.load %arg1[%c0, %c0_0] : memref<1x128xi32, #tpu.memory_space<vmem>>, vector<1x128xi32>
    %c0_1 = arith.constant 0 : index
    %c0_2 = arith.constant 0 : index
    %1 = vector.load %arg3[%c0_1, %c0_2] : memref<192x32xf32, #tpu.memory_space<vmem>>, vector<192x32xf32>
    %c0_3 = arith.constant 0 : index
    %c0_4 = arith.constant 0 : index
    %2 = vector.load %arg5[%c0_3, %c0_4] : memref<192x64xf32, #tpu.memory_space<vmem>>, vector<192x64xf32>
    %c0_5 = arith.constant 0 : index
    %c0_6 = arith.constant 0 : index
    %3 = vector.load %arg4[%c0_5, %c0_6] : memref<192x1xf32, #tpu.memory_space<vmem>>, vector<192x1xf32>
    %4 = vector.shape_cast %3 : vector<192x1xf32> to vector<192x1xf32>
    %5 = vector.broadcast %4 : vector<192x1xf32> to vector<192x128xf32>
    %c0_7 = arith.constant 0 : index
    %c0_8 = arith.constant 0 : index
    %6 = vector.load %arg6[%c0_7, %c0_8] : memref<64x1xf32, #tpu.memory_space<vmem>>, vector<64x1xf32>
    %7 = vector.shape_cast %6 : vector<64x1xf32> to vector<64x1xf32>
    %8 = vector.broadcast %7 : vector<64x1xf32> to vector<64x128xf32>
    %9 = tpu.iota {dimensions = array<i32: 0>} : vector<64x1xi32>
    %c32_i32 = arith.constant 32 : i32
    %10 = vector.broadcast %c32_i32 : i32 to vector<64x1xi32>
    %11 = arith.cmpi slt, %9, %10 : vector<64x1xi32>
    %c0_i32 = arith.constant 0 : i32
    %12 = arith.index_cast %c0_i32 : i32 to index
    %c0_9 = arith.constant 0 : index
    %c0_10 = arith.constant 0 : index
    %13 = vector.load %arg2[%12, %c0_9, %c0_10] : memref<6x32x128xf32, #tpu.memory_space<vmem>>, vector<1x32x128xf32>
    %14 = vector.shape_cast %13 : vector<1x32x128xf32> to vector<32x128xf32>
    %cst = arith.constant dense<0.000000e+00> : vector<192x128xf32>
    %15 = tpu.matmul %1, %14, %cst {dimension_numbers = #tpu.dot_dimension_numbers<[1], [0], [0], [1], [0, 0, 1, 1], [], []>} : vector<192x32xf32>, vector<32x128xf32>, vector<192x128xf32> -> vector<192x128xf32>
    %16 = arith.addf %15, %5 : vector<192x128xf32>
    %c5_i32 = arith.constant 5 : i32
    %17 = arith.subi %c5_i32, %c0_i32 : i32
    %18 = vector.extract_strided_slice %16 {offsets = [0, 0], sizes = [32, 128], strides = [1, 1]} : vector<192x128xf32> to vector<32x128xf32>
    %19 = arith.index_cast %c0_i32 : i32 to index
    %c0_11 = arith.constant 0 : index
    %c0_12 = arith.constant 0 : index
    %20 = vector.load %arg8[%19, %c0_11, %c0_12] : memref<6x192x128xf32, #tpu.memory_space<vmem>>, vector<1x32x128xf32>
    %21 = vector.shape_cast %20 : vector<1x32x128xf32> to vector<32x128xf32>
    %22 = vector.shape_cast %18 : vector<32x128xf32> to vector<1x32x128xf32>
    tpu.vector_store %arg8[%19, %c0_11, %c0_12], %22 {strides = array<i32>} : memref<6x192x128xf32, #tpu.memory_space<vmem>>, vector<1x32x128xf32>,
    %23 = vector.extract_strided_slice %16 {offsets = [64, 0], sizes = [32, 128], strides = [1, 1]} : vector<192x128xf32> to vector<32x128xf32>
    %24 = arith.index_cast %c0_i32 : i32 to index
    %c64 = arith.constant 64 : index
    %c0_13 = arith.constant 0 : index
    %25 = vector.load %arg8[%24, %c64, %c0_13] : memref<6x192x128xf32, #tpu.memory_space<vmem>>, vector<1x32x128xf32>
    %26 = vector.shape_cast %25 : vector<1x32x128xf32> to vector<32x128xf32>
    %27 = vector.shape_cast %23 : vector<32x128xf32> to vector<1x32x128xf32>
    tpu.vector_store %arg8[%24, %c64, %c0_13], %27 {strides = array<i32>} : memref<6x192x128xf32, #tpu.memory_space<vmem>>, vector<1x32x128xf32>,
    %28 = vector.extract_strided_slice %16 {offsets = [128, 0], sizes = [32, 128], strides = [1, 1]} : vector<192x128xf32> to vector<32x128xf32>
    %29 = arith.index_cast %c0_i32 : i32 to index
    %c128 = arith.constant 128 : index
    %c0_14 = arith.constant 0 : index
    %30 = vector.load %arg8[%29, %c128, %c0_14] : memref<6x192x128xf32, #tpu.memory_space<vmem>>, vector<1x32x128xf32>
    %31 = vector.shape_cast %30 : vector<1x32x128xf32> to vector<32x128xf32>
    %32 = vector.shape_cast %28 : vector<32x128xf32> to vector<1x32x128xf32>
    tpu.vector_store %arg8[%29, %c128, %c0_14], %32 {strides = array<i32>} : memref<6x192x128xf32, #tpu.memory_space<vmem>>, vector<1x32x128xf32>,
    %33 = vector.extract_strided_slice %16 {offsets = [32, 0], sizes = [32, 128], strides = [1, 1]} : vector<192x128xf32> to vector<32x128xf32>
    %34 = arith.index_cast %17 : i32 to index
    %c32 = arith.constant 32 : index
    %c0_15 = arith.constant 0 : index
    %35 = vector.load %arg8[%34, %c32, %c0_15] : memref<6x192x128xf32, #tpu.memory_space<vmem>>, vector<1x32x128xf32>
    %36 = vector.shape_cast %35 : vector<1x32x128xf32> to vector<32x128xf32>
    %37 = vector.shape_cast %33 : vector<32x128xf32> to vector<1x32x128xf32>
    tpu.vector_store %arg8[%34, %c32, %c0_15], %37 {strides = array<i32>} : memref<6x192x128xf32, #tpu.memory_space<vmem>>, vector<1x32x128xf32>,
    %38 = vector.extract_strided_slice %16 {offsets = [96, 0], sizes = [32, 128], strides = [1, 1]} : vector<192x128xf32> to vector<32x128xf32>
    %39 = arith.index_cast %17 : i32 to index
    %c96 = arith.constant 96 : index
    %c0_16 = arith.constant 0 : index
    %40 = vector.load %arg8[%39, %c96, %c0_16] : memref<6x192x128xf32, #tpu.memory_space<vmem>>, vector<1x32x128xf32>
    %41 = vector.shape_cast %40 : vector<1x32x128xf32> to vector<32x128xf32>
    %42 = vector.shape_cast %38 : vector<32x128xf32> to vector<1x32x128xf32>
    tpu.vector_store %arg8[%39, %c96, %c0_16], %42 {strides = array<i32>} : memref<6x192x128xf32, #tpu.memory_space<vmem>>, vector<1x32x128xf32>,
    %43 = vector.extract_strided_slice %16 {offsets = [160, 0], sizes = [32, 128], strides = [1, 1]} : vector<192x128xf32> to vector<32x128xf32>
    %44 = arith.index_cast %17 : i32 to index
    %c160 = arith.constant 160 : index
    %c0_17 = arith.constant 0 : index
    %45 = vector.load %arg8[%44, %c160, %c0_17] : memref<6x192x128xf32, #tpu.memory_space<vmem>>, vector<1x32x128xf32>
    %46 = vector.shape_cast %45 : vector<1x32x128xf32> to vector<32x128xf32>
    %47 = vector.shape_cast %43 : vector<32x128xf32> to vector<1x32x128xf32>
    tpu.vector_store %arg8[%44, %c160, %c0_17], %47 {strides = array<i32>} : memref<6x192x128xf32, #tpu.memory_space<vmem>>, vector<1x32x128xf32>,
    %c1_i32 = arith.constant 1 : i32
    %48 = arith.index_cast %c1_i32 : i32 to index
    %c0_18 = arith.constant 0 : index
    %c0_19 = arith.constant 0 : index
    %49 = vector.load %arg2[%48, %c0_18, %c0_19] : memref<6x32x128xf32, #tpu.memory_space<vmem>>, vector<1x32x128xf32>
    %50 = vector.shape_cast %49 : vector<1x32x128xf32> to vector<32x128xf32>
    %cst_20 = arith.constant dense<0.000000e+00> : vector<192x128xf32>
    %51 = tpu.matmul %1, %50, %cst_20 {dimension_numbers = #tpu.dot_dimension_numbers<[1], [0], [0], [1], [0, 0, 1, 1], [], []>} : vector<192x32xf32>, vector<32x128xf32>, vector<192x128xf32> -> vector<192x128xf32>
    %52 = arith.addf %51, %5 : vector<192x128xf32>
    %c5_i32_21 = arith.constant 5 : i32
    %53 = arith.subi %c5_i32_21, %c1_i32 : i32
    %54 = vector.extract_strided_slice %52 {offsets = [0, 0], sizes = [32, 128], strides = [1, 1]} : vector<192x128xf32> to vector<32x128xf32>
    %55 = arith.index_cast %c1_i32 : i32 to index
    %c0_22 = arith.constant 0 : index
    %c0_23 = arith.constant 0 : index
    %56 = vector.load %arg8[%55, %c0_22, %c0_23] : memref<6x192x128xf32, #tpu.memory_space<vmem>>, vector<1x32x128xf32>
    %57 = vector.shape_cast %56 : vector<1x32x128xf32> to vector<32x128xf32>
    %58 = vector.shape_cast %54 : vector<32x128xf32> to vector<1x32x128xf32>
    tpu.vector_store %arg8[%55, %c0_22, %c0_23], %58 {strides = array<i32>} : memref<6x192x128xf32, #tpu.memory_space<vmem>>, vector<1x32x128xf32>,
    %59 = vector.extract_strided_slice %52 {offsets = [64, 0], sizes = [32, 128], strides = [1, 1]} : vector<192x128xf32> to vector<32x128xf32>
    %60 = arith.index_cast %c1_i32 : i32 to index
    %c64_24 = arith.constant 64 : index
    %c0_25 = arith.constant 0 : index
    %61 = vector.load %arg8[%60, %c64_24, %c0_25] : memref<6x192x128xf32, #tpu.memory_space<vmem>>, vector<1x32x128xf32>
    %62 = vector.shape_cast %61 : vector<1x32x128xf32> to vector<32x128xf32>
    %63 = vector.shape_cast %59 : vector<32x128xf32> to vector<1x32x128xf32>
    tpu.vector_store %arg8[%60, %c64_24, %c0_25], %63 {strides = array<i32>} : memref<6x192x128xf32, #tpu.memory_space<vmem>>, vector<1x32x128xf32>,
    %64 = vector.extract_strided_slice %52 {offsets = [128, 0], sizes = [32, 128], strides = [1, 1]} : vector<192x128xf32> to vector<32x128xf32>
    %65 = arith.index_cast %c1_i32 : i32 to index
    %c128_26 = arith.constant 128 : index
    %c0_27 = arith.constant 0 : index
    %66 = vector.load %arg8[%65, %c128_26, %c0_27] : memref<6x192x128xf32, #tpu.memory_space<vmem>>, vector<1x32x128xf32>
    %67 = vector.shape_cast %66 : vector<1x32x128xf32> to vector<32x128xf32>
    %68 = vector.shape_cast %64 : vector<32x128xf32> to vector<1x32x128xf32>
    tpu.vector_store %arg8[%65, %c128_26, %c0_27], %68 {strides = array<i32>} : memref<6x192x128xf32, #tpu.memory_space<vmem>>, vector<1x32x128xf32>,
    %69 = vector.extract_strided_slice %52 {offsets = [32, 0], sizes = [32, 128], strides = [1, 1]} : vector<192x128xf32> to vector<32x128xf32>
    %70 = arith.index_cast %53 : i32 to index
    %c32_28 = arith.constant 32 : index
    %c0_29 = arith.constant 0 : index
    %71 = vector.load %arg8[%70, %c32_28, %c0_29] : memref<6x192x128xf32, #tpu.memory_space<vmem>>, vector<1x32x128xf32>
    %72 = vector.shape_cast %71 : vector<1x32x128xf32> to vector<32x128xf32>
    %73 = vector.shape_cast %69 : vector<32x128xf32> to vector<1x32x128xf32>
    tpu.vector_store %arg8[%70, %c32_28, %c0_29], %73 {strides = array<i32>} : memref<6x192x128xf32, #tpu.memory_space<vmem>>, vector<1x32x128xf32>,
    %74 = vector.extract_strided_slice %52 {offsets = [96, 0], sizes = [32, 128], strides = [1, 1]} : vector<192x128xf32> to vector<32x128xf32>
    %75 = arith.index_cast %53 : i32 to index
    %c96_30 = arith.constant 96 : index
    %c0_31 = arith.constant 0 : index
    %76 = vector.load %arg8[%75, %c96_30, %c0_31] : memref<6x192x128xf32, #tpu.memory_space<vmem>>, vector<1x32x128xf32>
    %77 = vector.shape_cast %76 : vector<1x32x128xf32> to vector<32x128xf32>
    %78 = vector.shape_cast %74 : vector<32x128xf32> to vector<1x32x128xf32>
    tpu.vector_store %arg8[%75, %c96_30, %c0_31], %78 {strides = array<i32>} : memref<6x192x128xf32, #tpu.memory_space<vmem>>, vector<1x32x128xf32>,
    %79 = vector.extract_strided_slice %52 {offsets = [160, 0], sizes = [32, 128], strides = [1, 1]} : vector<192x128xf32> to vector<32x128xf32>
    %80 = arith.index_cast %53 : i32 to index
    %c160_32 = arith.constant 160 : index
    %c0_33 = arith.constant 0 : index
    %81 = vector.load %arg8[%80, %c160_32, %c0_33] : memref<6x192x128xf32, #tpu.memory_space<vmem>>, vector<1x32x128xf32>
    %82 = vector.shape_cast %81 : vector<1x32x128xf32> to vector<32x128xf32>
    %83 = vector.shape_cast %79 : vector<32x128xf32> to vector<1x32x128xf32>
    tpu.vector_store %arg8[%80, %c160_32, %c0_33], %83 {strides = array<i32>} : memref<6x192x128xf32, #tpu.memory_space<vmem>>, vector<1x32x128xf32>,
    %c2_i32 = arith.constant 2 : i32
    %84 = arith.index_cast %c2_i32 : i32 to index
    %c0_34 = arith.constant 0 : index
    %c0_35 = arith.constant 0 : index
    %85 = vector.load %arg2[%84, %c0_34, %c0_35] : memref<6x32x128xf32, #tpu.memory_space<vmem>>, vector<1x32x128xf32>
    %86 = vector.shape_cast %85 : vector<1x32x128xf32> to vector<32x128xf32>
    %cst_36 = arith.constant dense<0.000000e+00> : vector<192x128xf32>
    %87 = tpu.matmul %1, %86, %cst_36 {dimension_numbers = #tpu.dot_dimension_numbers<[1], [0], [0], [1], [0, 0, 1, 1], [], []>} : vector<192x32xf32>, vector<32x128xf32>, vector<192x128xf32> -> vector<192x128xf32>
    %88 = arith.addf %87, %5 : vector<192x128xf32>
    %c5_i32_37 = arith.constant 5 : i32
    %89 = arith.subi %c5_i32_37, %c2_i32 : i32
    %90 = vector.extract_strided_slice %88 {offsets = [0, 0], sizes = [32, 128], strides = [1, 1]} : vector<192x128xf32> to vector<32x128xf32>
    %91 = arith.index_cast %c2_i32 : i32 to index
    %c0_38 = arith.constant 0 : index
    %c0_39 = arith.constant 0 : index
    %92 = vector.load %arg8[%91, %c0_38, %c0_39] : memref<6x192x128xf32, #tpu.memory_space<vmem>>, vector<1x32x128xf32>
    %93 = vector.shape_cast %92 : vector<1x32x128xf32> to vector<32x128xf32>
    %94 = vector.shape_cast %90 : vector<32x128xf32> to vector<1x32x128xf32>
    tpu.vector_store %arg8[%91, %c0_38, %c0_39], %94 {strides = array<i32>} : memref<6x192x128xf32, #tpu.memory_space<vmem>>, vector<1x32x128xf32>,
    %95 = vector.extract_strided_slice %88 {offsets = [64, 0], sizes = [32, 128], strides = [1, 1]} : vector<192x128xf32> to vector<32x128xf32>
    %96 = arith.index_cast %c2_i32 : i32 to index
    %c64_40 = arith.constant 64 : index
    %c0_41 = arith.constant 0 : index
    %97 = vector.load %arg8[%96, %c64_40, %c0_41] : memref<6x192x128xf32, #tpu.memory_space<vmem>>, vector<1x32x128xf32>
    %98 = vector.shape_cast %97 : vector<1x32x128xf32> to vector<32x128xf32>
    %99 = vector.shape_cast %95 : vector<32x128xf32> to vector<1x32x128xf32>
    tpu.vector_store %arg8[%96, %c64_40, %c0_41], %99 {strides = array<i32>} : memref<6x192x128xf32, #tpu.memory_space<vmem>>, vector<1x32x128xf32>,
    %100 = vector.extract_strided_slice %88 {offsets = [128, 0], sizes = [32, 128], strides = [1, 1]} : vector<192x128xf32> to vector<32x128xf32>
    %101 = arith.index_cast %c2_i32 : i32 to index
    %c128_42 = arith.constant 128 : index
    %c0_43 = arith.constant 0 : index
    %102 = vector.load %arg8[%101, %c128_42, %c0_43] : memref<6x192x128xf32, #tpu.memory_space<vmem>>, vector<1x32x128xf32>
    %103 = vector.shape_cast %102 : vector<1x32x128xf32> to vector<32x128xf32>
    %104 = vector.shape_cast %100 : vector<32x128xf32> to vector<1x32x128xf32>
    tpu.vector_store %arg8[%101, %c128_42, %c0_43], %104 {strides = array<i32>} : memref<6x192x128xf32, #tpu.memory_space<vmem>>, vector<1x32x128xf32>,
    %105 = vector.extract_strided_slice %88 {offsets = [32, 0], sizes = [32, 128], strides = [1, 1]} : vector<192x128xf32> to vector<32x128xf32>
    %106 = arith.index_cast %89 : i32 to index
    %c32_44 = arith.constant 32 : index
    %c0_45 = arith.constant 0 : index
    %107 = vector.load %arg8[%106, %c32_44, %c0_45] : memref<6x192x128xf32, #tpu.memory_space<vmem>>, vector<1x32x128xf32>
    %108 = vector.shape_cast %107 : vector<1x32x128xf32> to vector<32x128xf32>
    %109 = vector.shape_cast %105 : vector<32x128xf32> to vector<1x32x128xf32>
    tpu.vector_store %arg8[%106, %c32_44, %c0_45], %109 {strides = array<i32>} : memref<6x192x128xf32, #tpu.memory_space<vmem>>, vector<1x32x128xf32>,
    %110 = vector.extract_strided_slice %88 {offsets = [96, 0], sizes = [32, 128], strides = [1, 1]} : vector<192x128xf32> to vector<32x128xf32>
    %111 = arith.index_cast %89 : i32 to index
    %c96_46 = arith.constant 96 : index
    %c0_47 = arith.constant 0 : index
    %112 = vector.load %arg8[%111, %c96_46, %c0_47] : memref<6x192x128xf32, #tpu.memory_space<vmem>>, vector<1x32x128xf32>
    %113 = vector.shape_cast %112 : vector<1x32x128xf32> to vector<32x128xf32>
    %114 = vector.shape_cast %110 : vector<32x128xf32> to vector<1x32x128xf32>
    tpu.vector_store %arg8[%111, %c96_46, %c0_47], %114 {strides = array<i32>} : memref<6x192x128xf32, #tpu.memory_space<vmem>>, vector<1x32x128xf32>,
    %115 = vector.extract_strided_slice %88 {offsets = [160, 0], sizes = [32, 128], strides = [1, 1]} : vector<192x128xf32> to vector<32x128xf32>
    %116 = arith.index_cast %89 : i32 to index
    %c160_48 = arith.constant 160 : index
    %c0_49 = arith.constant 0 : index
    %117 = vector.load %arg8[%116, %c160_48, %c0_49] : memref<6x192x128xf32, #tpu.memory_space<vmem>>, vector<1x32x128xf32>
    %118 = vector.shape_cast %117 : vector<1x32x128xf32> to vector<32x128xf32>
    %119 = vector.shape_cast %115 : vector<32x128xf32> to vector<1x32x128xf32>
    tpu.vector_store %arg8[%116, %c160_48, %c0_49], %119 {strides = array<i32>} : memref<6x192x128xf32, #tpu.memory_space<vmem>>, vector<1x32x128xf32>,
    %c3_i32 = arith.constant 3 : i32
    %120 = arith.index_cast %c3_i32 : i32 to index
    %c0_50 = arith.constant 0 : index
    %c0_51 = arith.constant 0 : index
    %121 = vector.load %arg2[%120, %c0_50, %c0_51] : memref<6x32x128xf32, #tpu.memory_space<vmem>>, vector<1x32x128xf32>
    %122 = vector.shape_cast %121 : vector<1x32x128xf32> to vector<32x128xf32>
    %cst_52 = arith.constant dense<0.000000e+00> : vector<192x128xf32>
    %123 = tpu.matmul %1, %122, %cst_52 {dimension_numbers = #tpu.dot_dimension_numbers<[1], [0], [0], [1], [0, 0, 1, 1], [], []>} : vector<192x32xf32>, vector<32x128xf32>, vector<192x128xf32> -> vector<192x128xf32>
    %124 = arith.addf %123, %5 : vector<192x128xf32>
    %c5_i32_53 = arith.constant 5 : i32
    %125 = arith.subi %c5_i32_53, %c3_i32 : i32
    %126 = vector.extract_strided_slice %124 {offsets = [0, 0], sizes = [32, 128], strides = [1, 1]} : vector<192x128xf32> to vector<32x128xf32>
    %127 = arith.index_cast %c3_i32 : i32 to index
    %c0_54 = arith.constant 0 : index
    %c0_55 = arith.constant 0 : index
    %128 = vector.load %arg8[%127, %c0_54, %c0_55] : memref<6x192x128xf32, #tpu.memory_space<vmem>>, vector<1x32x128xf32>
    %129 = vector.shape_cast %128 : vector<1x32x128xf32> to vector<32x128xf32>
    %130 = vector.shape_cast %126 : vector<32x128xf32> to vector<1x32x128xf32>
    tpu.vector_store %arg8[%127, %c0_54, %c0_55], %130 {strides = array<i32>} : memref<6x192x128xf32, #tpu.memory_space<vmem>>, vector<1x32x128xf32>,
    %131 = vector.extract_strided_slice %124 {offsets = [64, 0], sizes = [32, 128], strides = [1, 1]} : vector<192x128xf32> to vector<32x128xf32>
    %132 = arith.index_cast %c3_i32 : i32 to index
    %c64_56 = arith.constant 64 : index
    %c0_57 = arith.constant 0 : index
    %133 = vector.load %arg8[%132, %c64_56, %c0_57] : memref<6x192x128xf32, #tpu.memory_space<vmem>>, vector<1x32x128xf32>
    %134 = vector.shape_cast %133 : vector<1x32x128xf32> to vector<32x128xf32>
    %135 = vector.shape_cast %131 : vector<32x128xf32> to vector<1x32x128xf32>
    tpu.vector_store %arg8[%132, %c64_56, %c0_57], %135 {strides = array<i32>} : memref<6x192x128xf32, #tpu.memory_space<vmem>>, vector<1x32x128xf32>,
    %136 = vector.extract_strided_slice %124 {offsets = [128, 0], sizes = [32, 128], strides = [1, 1]} : vector<192x128xf32> to vector<32x128xf32>
    %137 = arith.index_cast %c3_i32 : i32 to index
    %c128_58 = arith.constant 128 : index
    %c0_59 = arith.constant 0 : index
    %138 = vector.load %arg8[%137, %c128_58, %c0_59] : memref<6x192x128xf32, #tpu.memory_space<vmem>>, vector<1x32x128xf32>
    %139 = vector.shape_cast %138 : vector<1x32x128xf32> to vector<32x128xf32>
    %140 = vector.shape_cast %136 : vector<32x128xf32> to vector<1x32x128xf32>
    tpu.vector_store %arg8[%137, %c128_58, %c0_59], %140 {strides = array<i32>} : memref<6x192x128xf32, #tpu.memory_space<vmem>>, vector<1x32x128xf32>,
    %141 = vector.extract_strided_slice %124 {offsets = [32, 0], sizes = [32, 128], strides = [1, 1]} : vector<192x128xf32> to vector<32x128xf32>
    %142 = arith.index_cast %125 : i32 to index
    %c32_60 = arith.constant 32 : index
    %c0_61 = arith.constant 0 : index
    %143 = vector.load %arg8[%142, %c32_60, %c0_61] : memref<6x192x128xf32, #tpu.memory_space<vmem>>, vector<1x32x128xf32>
    %144 = vector.shape_cast %143 : vector<1x32x128xf32> to vector<32x128xf32>
    %145 = vector.shape_cast %141 : vector<32x128xf32> to vector<1x32x128xf32>
    tpu.vector_store %arg8[%142, %c32_60, %c0_61], %145 {strides = array<i32>} : memref<6x192x128xf32, #tpu.memory_space<vmem>>, vector<1x32x128xf32>,
    %146 = vector.extract_strided_slice %124 {offsets = [96, 0], sizes = [32, 128], strides = [1, 1]} : vector<192x128xf32> to vector<32x128xf32>
    %147 = arith.index_cast %125 : i32 to index
    %c96_62 = arith.constant 96 : index
    %c0_63 = arith.constant 0 : index
    %148 = vector.load %arg8[%147, %c96_62, %c0_63] : memref<6x192x128xf32, #tpu.memory_space<vmem>>, vector<1x32x128xf32>
    %149 = vector.shape_cast %148 : vector<1x32x128xf32> to vector<32x128xf32>
    %150 = vector.shape_cast %146 : vector<32x128xf32> to vector<1x32x128xf32>
    tpu.vector_store %arg8[%147, %c96_62, %c0_63], %150 {strides = array<i32>} : memref<6x192x128xf32, #tpu.memory_space<vmem>>, vector<1x32x128xf32>,
    %151 = vector.extract_strided_slice %124 {offsets = [160, 0], sizes = [32, 128], strides = [1, 1]} : vector<192x128xf32> to vector<32x128xf32>
    %152 = arith.index_cast %125 : i32 to index
    %c160_64 = arith.constant 160 : index
    %c0_65 = arith.constant 0 : index
    %153 = vector.load %arg8[%152, %c160_64, %c0_65] : memref<6x192x128xf32, #tpu.memory_space<vmem>>, vector<1x32x128xf32>
    %154 = vector.shape_cast %153 : vector<1x32x128xf32> to vector<32x128xf32>
    %155 = vector.shape_cast %151 : vector<32x128xf32> to vector<1x32x128xf32>
    tpu.vector_store %arg8[%152, %c160_64, %c0_65], %155 {strides = array<i32>} : memref<6x192x128xf32, #tpu.memory_space<vmem>>, vector<1x32x128xf32>,
    %c4_i32 = arith.constant 4 : i32
    %156 = arith.index_cast %c4_i32 : i32 to index
    %c0_66 = arith.constant 0 : index
    %c0_67 = arith.constant 0 : index
    %157 = vector.load %arg2[%156, %c0_66, %c0_67] : memref<6x32x128xf32, #tpu.memory_space<vmem>>, vector<1x32x128xf32>
    %158 = vector.shape_cast %157 : vector<1x32x128xf32> to vector<32x128xf32>
    %cst_68 = arith.constant dense<0.000000e+00> : vector<192x128xf32>
    %159 = tpu.matmul %1, %158, %cst_68 {dimension_numbers = #tpu.dot_dimension_numbers<[1], [0], [0], [1], [0, 0, 1, 1], [], []>} : vector<192x32xf32>, vector<32x128xf32>, vector<192x128xf32> -> vector<192x128xf32>
    %160 = arith.addf %159, %5 : vector<192x128xf32>
    %c5_i32_69 = arith.constant 5 : i32
    %161 = arith.subi %c5_i32_69, %c4_i32 : i32
    %162 = vector.extract_strided_slice %160 {offsets = [0, 0], sizes = [32, 128], strides = [1, 1]} : vector<192x128xf32> to vector<32x128xf32>
    %163 = arith.index_cast %c4_i32 : i32 to index
    %c0_70 = arith.constant 0 : index
    %c0_71 = arith.constant 0 : index
    %164 = vector.load %arg8[%163, %c0_70, %c0_71] : memref<6x192x128xf32, #tpu.memory_space<vmem>>, vector<1x32x128xf32>
    %165 = vector.shape_cast %164 : vector<1x32x128xf32> to vector<32x128xf32>
    %166 = vector.shape_cast %162 : vector<32x128xf32> to vector<1x32x128xf32>
    tpu.vector_store %arg8[%163, %c0_70, %c0_71], %166 {strides = array<i32>} : memref<6x192x128xf32, #tpu.memory_space<vmem>>, vector<1x32x128xf32>,
    %167 = vector.extract_strided_slice %160 {offsets = [64, 0], sizes = [32, 128], strides = [1, 1]} : vector<192x128xf32> to vector<32x128xf32>
    %168 = arith.index_cast %c4_i32 : i32 to index
    %c64_72 = arith.constant 64 : index
    %c0_73 = arith.constant 0 : index
    %169 = vector.load %arg8[%168, %c64_72, %c0_73] : memref<6x192x128xf32, #tpu.memory_space<vmem>>, vector<1x32x128xf32>
    %170 = vector.shape_cast %169 : vector<1x32x128xf32> to vector<32x128xf32>
    %171 = vector.shape_cast %167 : vector<32x128xf32> to vector<1x32x128xf32>
    tpu.vector_store %arg8[%168, %c64_72, %c0_73], %171 {strides = array<i32>} : memref<6x192x128xf32, #tpu.memory_space<vmem>>, vector<1x32x128xf32>,
    %172 = vector.extract_strided_slice %160 {offsets = [128, 0], sizes = [32, 128], strides = [1, 1]} : vector<192x128xf32> to vector<32x128xf32>
    %173 = arith.index_cast %c4_i32 : i32 to index
    %c128_74 = arith.constant 128 : index
    %c0_75 = arith.constant 0 : index
    %174 = vector.load %arg8[%173, %c128_74, %c0_75] : memref<6x192x128xf32, #tpu.memory_space<vmem>>, vector<1x32x128xf32>
    %175 = vector.shape_cast %174 : vector<1x32x128xf32> to vector<32x128xf32>
    %176 = vector.shape_cast %172 : vector<32x128xf32> to vector<1x32x128xf32>
    tpu.vector_store %arg8[%173, %c128_74, %c0_75], %176 {strides = array<i32>} : memref<6x192x128xf32, #tpu.memory_space<vmem>>, vector<1x32x128xf32>,
    %177 = vector.extract_strided_slice %160 {offsets = [32, 0], sizes = [32, 128], strides = [1, 1]} : vector<192x128xf32> to vector<32x128xf32>
    %178 = arith.index_cast %161 : i32 to index
    %c32_76 = arith.constant 32 : index
    %c0_77 = arith.constant 0 : index
    %179 = vector.load %arg8[%178, %c32_76, %c0_77] : memref<6x192x128xf32, #tpu.memory_space<vmem>>, vector<1x32x128xf32>
    %180 = vector.shape_cast %179 : vector<1x32x128xf32> to vector<32x128xf32>
    %181 = vector.shape_cast %177 : vector<32x128xf32> to vector<1x32x128xf32>
    tpu.vector_store %arg8[%178, %c32_76, %c0_77], %181 {strides = array<i32>} : memref<6x192x128xf32, #tpu.memory_space<vmem>>, vector<1x32x128xf32>,
    %182 = vector.extract_strided_slice %160 {offsets = [96, 0], sizes = [32, 128], strides = [1, 1]} : vector<192x128xf32> to vector<32x128xf32>
    %183 = arith.index_cast %161 : i32 to index
    %c96_78 = arith.constant 96 : index
    %c0_79 = arith.constant 0 : index
    %184 = vector.load %arg8[%183, %c96_78, %c0_79] : memref<6x192x128xf32, #tpu.memory_space<vmem>>, vector<1x32x128xf32>
    %185 = vector.shape_cast %184 : vector<1x32x128xf32> to vector<32x128xf32>
    %186 = vector.shape_cast %182 : vector<32x128xf32> to vector<1x32x128xf32>
    tpu.vector_store %arg8[%183, %c96_78, %c0_79], %186 {strides = array<i32>} : memref<6x192x128xf32, #tpu.memory_space<vmem>>, vector<1x32x128xf32>,
    %187 = vector.extract_strided_slice %160 {offsets = [160, 0], sizes = [32, 128], strides = [1, 1]} : vector<192x128xf32> to vector<32x128xf32>
    %188 = arith.index_cast %161 : i32 to index
    %c160_80 = arith.constant 160 : index
    %c0_81 = arith.constant 0 : index
    %189 = vector.load %arg8[%188, %c160_80, %c0_81] : memref<6x192x128xf32, #tpu.memory_space<vmem>>, vector<1x32x128xf32>
    %190 = vector.shape_cast %189 : vector<1x32x128xf32> to vector<32x128xf32>
    %191 = vector.shape_cast %187 : vector<32x128xf32> to vector<1x32x128xf32>
    tpu.vector_store %arg8[%188, %c160_80, %c0_81], %191 {strides = array<i32>} : memref<6x192x128xf32, #tpu.memory_space<vmem>>, vector<1x32x128xf32>,
    %c5_i32_82 = arith.constant 5 : i32
    %192 = arith.index_cast %c5_i32_82 : i32 to index
    %c0_83 = arith.constant 0 : index
    %c0_84 = arith.constant 0 : index
    %193 = vector.load %arg2[%192, %c0_83, %c0_84] : memref<6x32x128xf32, #tpu.memory_space<vmem>>, vector<1x32x128xf32>
    %194 = vector.shape_cast %193 : vector<1x32x128xf32> to vector<32x128xf32>
    %cst_85 = arith.constant dense<0.000000e+00> : vector<192x128xf32>
    %195 = tpu.matmul %1, %194, %cst_85 {dimension_numbers = #tpu.dot_dimension_numbers<[1], [0], [0], [1], [0, 0, 1, 1], [], []>} : vector<192x32xf32>, vector<32x128xf32>, vector<192x128xf32> -> vector<192x128xf32>
    %196 = arith.addf %195, %5 : vector<192x128xf32>
    %c5_i32_86 = arith.constant 5 : i32
    %197 = arith.subi %c5_i32_86, %c5_i32_82 : i32
    %198 = vector.extract_strided_slice %196 {offsets = [0, 0], sizes = [32, 128], strides = [1, 1]} : vector<192x128xf32> to vector<32x128xf32>
    %199 = arith.index_cast %c5_i32_82 : i32 to index
    %c0_87 = arith.constant 0 : index
    %c0_88 = arith.constant 0 : index
    %200 = vector.load %arg8[%199, %c0_87, %c0_88] : memref<6x192x128xf32, #tpu.memory_space<vmem>>, vector<1x32x128xf32>
    %201 = vector.shape_cast %200 : vector<1x32x128xf32> to vector<32x128xf32>
    %202 = vector.shape_cast %198 : vector<32x128xf32> to vector<1x32x128xf32>
    tpu.vector_store %arg8[%199, %c0_87, %c0_88], %202 {strides = array<i32>} : memref<6x192x128xf32, #tpu.memory_space<vmem>>, vector<1x32x128xf32>,
    %203 = vector.extract_strided_slice %196 {offsets = [64, 0], sizes = [32, 128], strides = [1, 1]} : vector<192x128xf32> to vector<32x128xf32>
    %204 = arith.index_cast %c5_i32_82 : i32 to index
    %c64_89 = arith.constant 64 : index
    %c0_90 = arith.constant 0 : index
    %205 = vector.load %arg8[%204, %c64_89, %c0_90] : memref<6x192x128xf32, #tpu.memory_space<vmem>>, vector<1x32x128xf32>
    %206 = vector.shape_cast %205 : vector<1x32x128xf32> to vector<32x128xf32>
    %207 = vector.shape_cast %203 : vector<32x128xf32> to vector<1x32x128xf32>
    tpu.vector_store %arg8[%204, %c64_89, %c0_90], %207 {strides = array<i32>} : memref<6x192x128xf32, #tpu.memory_space<vmem>>, vector<1x32x128xf32>,
    %208 = vector.extract_strided_slice %196 {offsets = [128, 0], sizes = [32, 128], strides = [1, 1]} : vector<192x128xf32> to vector<32x128xf32>
    %209 = arith.index_cast %c5_i32_82 : i32 to index
    %c128_91 = arith.constant 128 : index
    %c0_92 = arith.constant 0 : index
    %210 = vector.load %arg8[%209, %c128_91, %c0_92] : memref<6x192x128xf32, #tpu.memory_space<vmem>>, vector<1x32x128xf32>
    %211 = vector.shape_cast %210 : vector<1x32x128xf32> to vector<32x128xf32>
    %212 = vector.shape_cast %208 : vector<32x128xf32> to vector<1x32x128xf32>
    tpu.vector_store %arg8[%209, %c128_91, %c0_92], %212 {strides = array<i32>} : memref<6x192x128xf32, #tpu.memory_space<vmem>>, vector<1x32x128xf32>,
    %213 = vector.extract_strided_slice %196 {offsets = [32, 0], sizes = [32, 128], strides = [1, 1]} : vector<192x128xf32> to vector<32x128xf32>
    %214 = arith.index_cast %197 : i32 to index
    %c32_93 = arith.constant 32 : index
    %c0_94 = arith.constant 0 : index
    %215 = vector.load %arg8[%214, %c32_93, %c0_94] : memref<6x192x128xf32, #tpu.memory_space<vmem>>, vector<1x32x128xf32>
    %216 = vector.shape_cast %215 : vector<1x32x128xf32> to vector<32x128xf32>
    %217 = vector.shape_cast %213 : vector<32x128xf32> to vector<1x32x128xf32>
    tpu.vector_store %arg8[%214, %c32_93, %c0_94], %217 {strides = array<i32>} : memref<6x192x128xf32, #tpu.memory_space<vmem>>, vector<1x32x128xf32>,
    %218 = vector.extract_strided_slice %196 {offsets = [96, 0], sizes = [32, 128], strides = [1, 1]} : vector<192x128xf32> to vector<32x128xf32>
    %219 = arith.index_cast %197 : i32 to index
    %c96_95 = arith.constant 96 : index
    %c0_96 = arith.constant 0 : index
    %220 = vector.load %arg8[%219, %c96_95, %c0_96] : memref<6x192x128xf32, #tpu.memory_space<vmem>>, vector<1x32x128xf32>
    %221 = vector.shape_cast %220 : vector<1x32x128xf32> to vector<32x128xf32>
    %222 = vector.shape_cast %218 : vector<32x128xf32> to vector<1x32x128xf32>
    tpu.vector_store %arg8[%219, %c96_95, %c0_96], %222 {strides = array<i32>} : memref<6x192x128xf32, #tpu.memory_space<vmem>>, vector<1x32x128xf32>,
    %223 = vector.extract_strided_slice %196 {offsets = [160, 0], sizes = [32, 128], strides = [1, 1]} : vector<192x128xf32> to vector<32x128xf32>
    %224 = arith.index_cast %197 : i32 to index
    %c160_97 = arith.constant 160 : index
    %c0_98 = arith.constant 0 : index
    %225 = vector.load %arg8[%224, %c160_97, %c0_98] : memref<6x192x128xf32, #tpu.memory_space<vmem>>, vector<1x32x128xf32>
    %226 = vector.shape_cast %225 : vector<1x32x128xf32> to vector<32x128xf32>
    %227 = vector.shape_cast %223 : vector<32x128xf32> to vector<1x32x128xf32>
    tpu.vector_store %arg8[%224, %c160_97, %c0_98], %227 {strides = array<i32>} : memref<6x192x128xf32, #tpu.memory_space<vmem>>, vector<1x32x128xf32>,
    %c6_i32 = arith.constant 6 : i32
    %cst_99 = arith.constant 0.000000e+00 : f32
    %228 = vector.broadcast %cst_99 : f32 to vector<64x128xf32>
    %c0_i32_100 = arith.constant 0 : i32
    %229 = arith.index_cast %c0_i32_100 : i32 to index
    %c0_101 = arith.constant 0 : index
    %c0_102 = arith.constant 0 : index
    %230 = vector.load %arg8[%229, %c0_101, %c0_102] : memref<6x192x128xf32, #tpu.memory_space<vmem>>, vector<1x192x128xf32>
    %231 = vector.shape_cast %230 : vector<1x192x128xf32> to vector<192x128xf32>
    %cst_103 = arith.constant dense<0.000000e+00> : vector<192x128xf32>
    %232 = tpu.matmul %2, %228, %cst_103 {dimension_numbers = #tpu.dot_dimension_numbers<[1], [0], [0], [1], [0, 0, 1, 1], [], []>} : vector<192x64xf32>, vector<64x128xf32>, vector<192x128xf32> -> vector<192x128xf32>
    %233 = vector.extract_strided_slice %231 {offsets = [0, 0], sizes = [64, 128], strides = [1, 1]} : vector<192x128xf32> to vector<64x128xf32>
    %234 = vector.extract_strided_slice %232 {offsets = [0, 0], sizes = [64, 128], strides = [1, 1]} : vector<192x128xf32> to vector<64x128xf32>
    %235 = arith.addf %233, %234 : vector<64x128xf32>
    %236 = arith.negf %235 : vector<64x128xf32>
    %237 = math.exp %236 : vector<64x128xf32>
    %cst_104 = arith.constant 1.000000e+00 : f32
    %238 = vector.broadcast %cst_104 : f32 to vector<64x128xf32>
    %239 = arith.addf %238, %237 : vector<64x128xf32>
    %240 = arith.divf %238, %239 : vector<64x128xf32>
    %241 = vector.extract_strided_slice %231 {offsets = [64, 0], sizes = [64, 128], strides = [1, 1]} : vector<192x128xf32> to vector<64x128xf32>
    %242 = vector.extract_strided_slice %232 {offsets = [64, 0], sizes = [64, 128], strides = [1, 1]} : vector<192x128xf32> to vector<64x128xf32>
    %243 = arith.addf %241, %242 : vector<64x128xf32>
    %244 = arith.negf %243 : vector<64x128xf32>
    %245 = math.exp %244 : vector<64x128xf32>
    %cst_105 = arith.constant 1.000000e+00 : f32
    %246 = vector.broadcast %cst_105 : f32 to vector<64x128xf32>
    %247 = arith.addf %246, %245 : vector<64x128xf32>
    %248 = arith.divf %246, %247 : vector<64x128xf32>
    %249 = vector.extract_strided_slice %231 {offsets = [128, 0], sizes = [64, 128], strides = [1, 1]} : vector<192x128xf32> to vector<64x128xf32>
    %250 = vector.extract_strided_slice %232 {offsets = [128, 0], sizes = [64, 128], strides = [1, 1]} : vector<192x128xf32> to vector<64x128xf32>
    %251 = arith.addf %250, %8 : vector<64x128xf32>
    %252 = arith.mulf %240, %251 : vector<64x128xf32>
    %253 = arith.addf %249, %252 : vector<64x128xf32>
    %254 = math.tanh %253 : vector<64x128xf32>
    %cst_106 = arith.constant 1.000000e+00 : f32
    %255 = vector.broadcast %cst_106 : f32 to vector<64x128xf32>
    %256 = arith.subf %255, %248 : vector<64x128xf32>
    %257 = arith.mulf %256, %254 : vector<64x128xf32>
    %258 = arith.mulf %248, %228 : vector<64x128xf32>
    %259 = arith.addf %257, %258 : vector<64x128xf32>
    %c5_i32_107 = arith.constant 5 : i32
    %260 = arith.subi %c5_i32_107, %c0_i32_100 : i32
    %261 = vector.broadcast %c0_i32_100 : i32 to vector<64x1xi32>
    %262 = vector.broadcast %260 : i32 to vector<64x1xi32>
    %263 = arith.select %11, %261, %262 : vector<64x1xi1>, vector<64x1xi32>
    %264 = vector.broadcast %263 : vector<64x1xi32> to vector<64x128xi32>
    %265 = vector.broadcast %0 : vector<1x128xi32> to vector<64x128xi32>
    %266 = arith.cmpi slt, %264, %265 : vector<64x128xi32>
    %267 = arith.select %266, %259, %228 : vector<64x128xi1>, vector<64x128xf32>
    %c1_i32_108 = arith.constant 1 : i32
    %268 = arith.index_cast %c1_i32_108 : i32 to index
    %c0_109 = arith.constant 0 : index
    %c0_110 = arith.constant 0 : index
    %269 = vector.load %arg8[%268, %c0_109, %c0_110] : memref<6x192x128xf32, #tpu.memory_space<vmem>>, vector<1x192x128xf32>
    %270 = vector.shape_cast %269 : vector<1x192x128xf32> to vector<192x128xf32>
    %cst_111 = arith.constant dense<0.000000e+00> : vector<192x128xf32>
    %271 = tpu.matmul %2, %267, %cst_111 {dimension_numbers = #tpu.dot_dimension_numbers<[1], [0], [0], [1], [0, 0, 1, 1], [], []>} : vector<192x64xf32>, vector<64x128xf32>, vector<192x128xf32> -> vector<192x128xf32>
    %272 = vector.extract_strided_slice %270 {offsets = [0, 0], sizes = [64, 128], strides = [1, 1]} : vector<192x128xf32> to vector<64x128xf32>
    %273 = vector.extract_strided_slice %271 {offsets = [0, 0], sizes = [64, 128], strides = [1, 1]} : vector<192x128xf32> to vector<64x128xf32>
    %274 = arith.addf %272, %273 : vector<64x128xf32>
    %275 = arith.negf %274 : vector<64x128xf32>
    %276 = math.exp %275 : vector<64x128xf32>
    %cst_112 = arith.constant 1.000000e+00 : f32
    %277 = vector.broadcast %cst_112 : f32 to vector<64x128xf32>
    %278 = arith.addf %277, %276 : vector<64x128xf32>
    %279 = arith.divf %277, %278 : vector<64x128xf32>
    %280 = vector.extract_strided_slice %270 {offsets = [64, 0], sizes = [64, 128], strides = [1, 1]} : vector<192x128xf32> to vector<64x128xf32>
    %281 = vector.extract_strided_slice %271 {offsets = [64, 0], sizes = [64, 128], strides = [1, 1]} : vector<192x128xf32> to vector<64x128xf32>
    %282 = arith.addf %280, %281 : vector<64x128xf32>
    %283 = arith.negf %282 : vector<64x128xf32>
    %284 = math.exp %283 : vector<64x128xf32>
    %cst_113 = arith.constant 1.000000e+00 : f32
    %285 = vector.broadcast %cst_113 : f32 to vector<64x128xf32>
    %286 = arith.addf %285, %284 : vector<64x128xf32>
    %287 = arith.divf %285, %286 : vector<64x128xf32>
    %288 = vector.extract_strided_slice %270 {offsets = [128, 0], sizes = [64, 128], strides = [1, 1]} : vector<192x128xf32> to vector<64x128xf32>
    %289 = vector.extract_strided_slice %271 {offsets = [128, 0], sizes = [64, 128], strides = [1, 1]} : vector<192x128xf32> to vector<64x128xf32>
    %290 = arith.addf %289, %8 : vector<64x128xf32>
    %291 = arith.mulf %279, %290 : vector<64x128xf32>
    %292 = arith.addf %288, %291 : vector<64x128xf32>
    %293 = math.tanh %292 : vector<64x128xf32>
    %cst_114 = arith.constant 1.000000e+00 : f32
    %294 = vector.broadcast %cst_114 : f32 to vector<64x128xf32>
    %295 = arith.subf %294, %287 : vector<64x128xf32>
    %296 = arith.mulf %295, %293 : vector<64x128xf32>
    %297 = arith.mulf %287, %267 : vector<64x128xf32>
    %298 = arith.addf %296, %297 : vector<64x128xf32>
    %c5_i32_115 = arith.constant 5 : i32
    %299 = arith.subi %c5_i32_115, %c1_i32_108 : i32
    %300 = vector.broadcast %c1_i32_108 : i32 to vector<64x1xi32>
    %301 = vector.broadcast %299 : i32 to vector<64x1xi32>
    %302 = arith.select %11, %300, %301 : vector<64x1xi1>, vector<64x1xi32>
    %303 = vector.broadcast %302 : vector<64x1xi32> to vector<64x128xi32>
    %304 = vector.broadcast %0 : vector<1x128xi32> to vector<64x128xi32>
    %305 = arith.cmpi slt, %303, %304 : vector<64x128xi32>
    %306 = arith.select %305, %298, %267 : vector<64x128xi1>, vector<64x128xf32>
    %c2_i32_116 = arith.constant 2 : i32
    %307 = arith.index_cast %c2_i32_116 : i32 to index
    %c0_117 = arith.constant 0 : index
    %c0_118 = arith.constant 0 : index
    %308 = vector.load %arg8[%307, %c0_117, %c0_118] : memref<6x192x128xf32, #tpu.memory_space<vmem>>, vector<1x192x128xf32>
    %309 = vector.shape_cast %308 : vector<1x192x128xf32> to vector<192x128xf32>
    %cst_119 = arith.constant dense<0.000000e+00> : vector<192x128xf32>
    %310 = tpu.matmul %2, %306, %cst_119 {dimension_numbers = #tpu.dot_dimension_numbers<[1], [0], [0], [1], [0, 0, 1, 1], [], []>} : vector<192x64xf32>, vector<64x128xf32>, vector<192x128xf32> -> vector<192x128xf32>
    %311 = vector.extract_strided_slice %309 {offsets = [0, 0], sizes = [64, 128], strides = [1, 1]} : vector<192x128xf32> to vector<64x128xf32>
    %312 = vector.extract_strided_slice %310 {offsets = [0, 0], sizes = [64, 128], strides = [1, 1]} : vector<192x128xf32> to vector<64x128xf32>
    %313 = arith.addf %311, %312 : vector<64x128xf32>
    %314 = arith.negf %313 : vector<64x128xf32>
    %315 = math.exp %314 : vector<64x128xf32>
    %cst_120 = arith.constant 1.000000e+00 : f32
    %316 = vector.broadcast %cst_120 : f32 to vector<64x128xf32>
    %317 = arith.addf %316, %315 : vector<64x128xf32>
    %318 = arith.divf %316, %317 : vector<64x128xf32>
    %319 = vector.extract_strided_slice %309 {offsets = [64, 0], sizes = [64, 128], strides = [1, 1]} : vector<192x128xf32> to vector<64x128xf32>
    %320 = vector.extract_strided_slice %310 {offsets = [64, 0], sizes = [64, 128], strides = [1, 1]} : vector<192x128xf32> to vector<64x128xf32>
    %321 = arith.addf %319, %320 : vector<64x128xf32>
    %322 = arith.negf %321 : vector<64x128xf32>
    %323 = math.exp %322 : vector<64x128xf32>
    %cst_121 = arith.constant 1.000000e+00 : f32
    %324 = vector.broadcast %cst_121 : f32 to vector<64x128xf32>
    %325 = arith.addf %324, %323 : vector<64x128xf32>
    %326 = arith.divf %324, %325 : vector<64x128xf32>
    %327 = vector.extract_strided_slice %309 {offsets = [128, 0], sizes = [64, 128], strides = [1, 1]} : vector<192x128xf32> to vector<64x128xf32>
    %328 = vector.extract_strided_slice %310 {offsets = [128, 0], sizes = [64, 128], strides = [1, 1]} : vector<192x128xf32> to vector<64x128xf32>
    %329 = arith.addf %328, %8 : vector<64x128xf32>
    %330 = arith.mulf %318, %329 : vector<64x128xf32>
    %331 = arith.addf %327, %330 : vector<64x128xf32>
    %332 = math.tanh %331 : vector<64x128xf32>
    %cst_122 = arith.constant 1.000000e+00 : f32
    %333 = vector.broadcast %cst_122 : f32 to vector<64x128xf32>
    %334 = arith.subf %333, %326 : vector<64x128xf32>
    %335 = arith.mulf %334, %332 : vector<64x128xf32>
    %336 = arith.mulf %326, %306 : vector<64x128xf32>
    %337 = arith.addf %335, %336 : vector<64x128xf32>
    %c5_i32_123 = arith.constant 5 : i32
    %338 = arith.subi %c5_i32_123, %c2_i32_116 : i32
    %339 = vector.broadcast %c2_i32_116 : i32 to vector<64x1xi32>
    %340 = vector.broadcast %338 : i32 to vector<64x1xi32>
    %341 = arith.select %11, %339, %340 : vector<64x1xi1>, vector<64x1xi32>
    %342 = vector.broadcast %341 : vector<64x1xi32> to vector<64x128xi32>
    %343 = vector.broadcast %0 : vector<1x128xi32> to vector<64x128xi32>
    %344 = arith.cmpi slt, %342, %343 : vector<64x128xi32>
    %345 = arith.select %344, %337, %306 : vector<64x128xi1>, vector<64x128xf32>
    %c3_i32_124 = arith.constant 3 : i32
    %346 = arith.index_cast %c3_i32_124 : i32 to index
    %c0_125 = arith.constant 0 : index
    %c0_126 = arith.constant 0 : index
    %347 = vector.load %arg8[%346, %c0_125, %c0_126] : memref<6x192x128xf32, #tpu.memory_space<vmem>>, vector<1x192x128xf32>
    %348 = vector.shape_cast %347 : vector<1x192x128xf32> to vector<192x128xf32>
    %cst_127 = arith.constant dense<0.000000e+00> : vector<192x128xf32>
    %349 = tpu.matmul %2, %345, %cst_127 {dimension_numbers = #tpu.dot_dimension_numbers<[1], [0], [0], [1], [0, 0, 1, 1], [], []>} : vector<192x64xf32>, vector<64x128xf32>, vector<192x128xf32> -> vector<192x128xf32>
    %350 = vector.extract_strided_slice %348 {offsets = [0, 0], sizes = [64, 128], strides = [1, 1]} : vector<192x128xf32> to vector<64x128xf32>
    %351 = vector.extract_strided_slice %349 {offsets = [0, 0], sizes = [64, 128], strides = [1, 1]} : vector<192x128xf32> to vector<64x128xf32>
    %352 = arith.addf %350, %351 : vector<64x128xf32>
    %353 = arith.negf %352 : vector<64x128xf32>
    %354 = math.exp %353 : vector<64x128xf32>
    %cst_128 = arith.constant 1.000000e+00 : f32
    %355 = vector.broadcast %cst_128 : f32 to vector<64x128xf32>
    %356 = arith.addf %355, %354 : vector<64x128xf32>
    %357 = arith.divf %355, %356 : vector<64x128xf32>
    %358 = vector.extract_strided_slice %348 {offsets = [64, 0], sizes = [64, 128], strides = [1, 1]} : vector<192x128xf32> to vector<64x128xf32>
    %359 = vector.extract_strided_slice %349 {offsets = [64, 0], sizes = [64, 128], strides = [1, 1]} : vector<192x128xf32> to vector<64x128xf32>
    %360 = arith.addf %358, %359 : vector<64x128xf32>
    %361 = arith.negf %360 : vector<64x128xf32>
    %362 = math.exp %361 : vector<64x128xf32>
    %cst_129 = arith.constant 1.000000e+00 : f32
    %363 = vector.broadcast %cst_129 : f32 to vector<64x128xf32>
    %364 = arith.addf %363, %362 : vector<64x128xf32>
    %365 = arith.divf %363, %364 : vector<64x128xf32>
    %366 = vector.extract_strided_slice %348 {offsets = [128, 0], sizes = [64, 128], strides = [1, 1]} : vector<192x128xf32> to vector<64x128xf32>
    %367 = vector.extract_strided_slice %349 {offsets = [128, 0], sizes = [64, 128], strides = [1, 1]} : vector<192x128xf32> to vector<64x128xf32>
    %368 = arith.addf %367, %8 : vector<64x128xf32>
    %369 = arith.mulf %357, %368 : vector<64x128xf32>
    %370 = arith.addf %366, %369 : vector<64x128xf32>
    %371 = math.tanh %370 : vector<64x128xf32>
    %cst_130 = arith.constant 1.000000e+00 : f32
    %372 = vector.broadcast %cst_130 : f32 to vector<64x128xf32>
    %373 = arith.subf %372, %365 : vector<64x128xf32>
    %374 = arith.mulf %373, %371 : vector<64x128xf32>
    %375 = arith.mulf %365, %345 : vector<64x128xf32>
    %376 = arith.addf %374, %375 : vector<64x128xf32>
    %c5_i32_131 = arith.constant 5 : i32
    %377 = arith.subi %c5_i32_131, %c3_i32_124 : i32
    %378 = vector.broadcast %c3_i32_124 : i32 to vector<64x1xi32>
    %379 = vector.broadcast %377 : i32 to vector<64x1xi32>
    %380 = arith.select %11, %378, %379 : vector<64x1xi1>, vector<64x1xi32>
    %381 = vector.broadcast %380 : vector<64x1xi32> to vector<64x128xi32>
    %382 = vector.broadcast %0 : vector<1x128xi32> to vector<64x128xi32>
    %383 = arith.cmpi slt, %381, %382 : vector<64x128xi32>
    %384 = arith.select %383, %376, %345 : vector<64x128xi1>, vector<64x128xf32>
    %c4_i32_132 = arith.constant 4 : i32
    %385 = arith.index_cast %c4_i32_132 : i32 to index
    %c0_133 = arith.constant 0 : index
    %c0_134 = arith.constant 0 : index
    %386 = vector.load %arg8[%385, %c0_133, %c0_134] : memref<6x192x128xf32, #tpu.memory_space<vmem>>, vector<1x192x128xf32>
    %387 = vector.shape_cast %386 : vector<1x192x128xf32> to vector<192x128xf32>
    %cst_135 = arith.constant dense<0.000000e+00> : vector<192x128xf32>
    %388 = tpu.matmul %2, %384, %cst_135 {dimension_numbers = #tpu.dot_dimension_numbers<[1], [0], [0], [1], [0, 0, 1, 1], [], []>} : vector<192x64xf32>, vector<64x128xf32>, vector<192x128xf32> -> vector<192x128xf32>
    %389 = vector.extract_strided_slice %387 {offsets = [0, 0], sizes = [64, 128], strides = [1, 1]} : vector<192x128xf32> to vector<64x128xf32>
    %390 = vector.extract_strided_slice %388 {offsets = [0, 0], sizes = [64, 128], strides = [1, 1]} : vector<192x128xf32> to vector<64x128xf32>
    %391 = arith.addf %389, %390 : vector<64x128xf32>
    %392 = arith.negf %391 : vector<64x128xf32>
    %393 = math.exp %392 : vector<64x128xf32>
    %cst_136 = arith.constant 1.000000e+00 : f32
    %394 = vector.broadcast %cst_136 : f32 to vector<64x128xf32>
    %395 = arith.addf %394, %393 : vector<64x128xf32>
    %396 = arith.divf %394, %395 : vector<64x128xf32>
    %397 = vector.extract_strided_slice %387 {offsets = [64, 0], sizes = [64, 128], strides = [1, 1]} : vector<192x128xf32> to vector<64x128xf32>
    %398 = vector.extract_strided_slice %388 {offsets = [64, 0], sizes = [64, 128], strides = [1, 1]} : vector<192x128xf32> to vector<64x128xf32>
    %399 = arith.addf %397, %398 : vector<64x128xf32>
    %400 = arith.negf %399 : vector<64x128xf32>
    %401 = math.exp %400 : vector<64x128xf32>
    %cst_137 = arith.constant 1.000000e+00 : f32
    %402 = vector.broadcast %cst_137 : f32 to vector<64x128xf32>
    %403 = arith.addf %402, %401 : vector<64x128xf32>
    %404 = arith.divf %402, %403 : vector<64x128xf32>
    %405 = vector.extract_strided_slice %387 {offsets = [128, 0], sizes = [64, 128], strides = [1, 1]} : vector<192x128xf32> to vector<64x128xf32>
    %406 = vector.extract_strided_slice %388 {offsets = [128, 0], sizes = [64, 128], strides = [1, 1]} : vector<192x128xf32> to vector<64x128xf32>
    %407 = arith.addf %406, %8 : vector<64x128xf32>
    %408 = arith.mulf %396, %407 : vector<64x128xf32>
    %409 = arith.addf %405, %408 : vector<64x128xf32>
    %410 = math.tanh %409 : vector<64x128xf32>
    %cst_138 = arith.constant 1.000000e+00 : f32
    %411 = vector.broadcast %cst_138 : f32 to vector<64x128xf32>
    %412 = arith.subf %411, %404 : vector<64x128xf32>
    %413 = arith.mulf %412, %410 : vector<64x128xf32>
    %414 = arith.mulf %404, %384 : vector<64x128xf32>
    %415 = arith.addf %413, %414 : vector<64x128xf32>
    %c5_i32_139 = arith.constant 5 : i32
    %416 = arith.subi %c5_i32_139, %c4_i32_132 : i32
    %417 = vector.broadcast %c4_i32_132 : i32 to vector<64x1xi32>
    %418 = vector.broadcast %416 : i32 to vector<64x1xi32>
    %419 = arith.select %11, %417, %418 : vector<64x1xi1>, vector<64x1xi32>
    %420 = vector.broadcast %419 : vector<64x1xi32> to vector<64x128xi32>
    %421 = vector.broadcast %0 : vector<1x128xi32> to vector<64x128xi32>
    %422 = arith.cmpi slt, %420, %421 : vector<64x128xi32>
    %423 = arith.select %422, %415, %384 : vector<64x128xi1>, vector<64x128xf32>
    %c5_i32_140 = arith.constant 5 : i32
    %424 = arith.index_cast %c5_i32_140 : i32 to index
    %c0_141 = arith.constant 0 : index
    %c0_142 = arith.constant 0 : index
    %425 = vector.load %arg8[%424, %c0_141, %c0_142] : memref<6x192x128xf32, #tpu.memory_space<vmem>>, vector<1x192x128xf32>
    %426 = vector.shape_cast %425 : vector<1x192x128xf32> to vector<192x128xf32>
    %cst_143 = arith.constant dense<0.000000e+00> : vector<192x128xf32>
    %427 = tpu.matmul %2, %423, %cst_143 {dimension_numbers = #tpu.dot_dimension_numbers<[1], [0], [0], [1], [0, 0, 1, 1], [], []>} : vector<192x64xf32>, vector<64x128xf32>, vector<192x128xf32> -> vector<192x128xf32>
    %428 = vector.extract_strided_slice %426 {offsets = [0, 0], sizes = [64, 128], strides = [1, 1]} : vector<192x128xf32> to vector<64x128xf32>
    %429 = vector.extract_strided_slice %427 {offsets = [0, 0], sizes = [64, 128], strides = [1, 1]} : vector<192x128xf32> to vector<64x128xf32>
    %430 = arith.addf %428, %429 : vector<64x128xf32>
    %431 = arith.negf %430 : vector<64x128xf32>
    %432 = math.exp %431 : vector<64x128xf32>
    %cst_144 = arith.constant 1.000000e+00 : f32
    %433 = vector.broadcast %cst_144 : f32 to vector<64x128xf32>
    %434 = arith.addf %433, %432 : vector<64x128xf32>
    %435 = arith.divf %433, %434 : vector<64x128xf32>
    %436 = vector.extract_strided_slice %426 {offsets = [64, 0], sizes = [64, 128], strides = [1, 1]} : vector<192x128xf32> to vector<64x128xf32>
    %437 = vector.extract_strided_slice %427 {offsets = [64, 0], sizes = [64, 128], strides = [1, 1]} : vector<192x128xf32> to vector<64x128xf32>
    %438 = arith.addf %436, %437 : vector<64x128xf32>
    %439 = arith.negf %438 : vector<64x128xf32>
    %440 = math.exp %439 : vector<64x128xf32>
    %cst_145 = arith.constant 1.000000e+00 : f32
    %441 = vector.broadcast %cst_145 : f32 to vector<64x128xf32>
    %442 = arith.addf %441, %440 : vector<64x128xf32>
    %443 = arith.divf %441, %442 : vector<64x128xf32>
    %444 = vector.extract_strided_slice %426 {offsets = [128, 0], sizes = [64, 128], strides = [1, 1]} : vector<192x128xf32> to vector<64x128xf32>
    %445 = vector.extract_strided_slice %427 {offsets = [128, 0], sizes = [64, 128], strides = [1, 1]} : vector<192x128xf32> to vector<64x128xf32>
    %446 = arith.addf %445, %8 : vector<64x128xf32>
    %447 = arith.mulf %435, %446 : vector<64x128xf32>
    %448 = arith.addf %444, %447 : vector<64x128xf32>
    %449 = math.tanh %448 : vector<64x128xf32>
    %cst_146 = arith.constant 1.000000e+00 : f32
    %450 = vector.broadcast %cst_146 : f32 to vector<64x128xf32>
    %451 = arith.subf %450, %443 : vector<64x128xf32>
    %452 = arith.mulf %451, %449 : vector<64x128xf32>
    %453 = arith.mulf %443, %423 : vector<64x128xf32>
    %454 = arith.addf %452, %453 : vector<64x128xf32>
    %c5_i32_147 = arith.constant 5 : i32
    %455 = arith.subi %c5_i32_147, %c5_i32_140 : i32
    %456 = vector.broadcast %c5_i32_140 : i32 to vector<64x1xi32>
    %457 = vector.broadcast %455 : i32 to vector<64x1xi32>
    %458 = arith.select %11, %456, %457 : vector<64x1xi1>, vector<64x1xi32>
    %459 = vector.broadcast %458 : vector<64x1xi32> to vector<64x128xi32>
    %460 = vector.broadcast %0 : vector<1x128xi32> to vector<64x128xi32>
    %461 = arith.cmpi slt, %459, %460 : vector<64x128xi32>
    %462 = arith.select %461, %454, %423 : vector<64x128xi1>, vector<64x128xf32>
    %c6_i32_148 = arith.constant 6 : i32
    %c0_149 = arith.constant 0 : index
    %c0_150 = arith.constant 0 : index
    %463 = vector.load %arg7[%c0_149, %c0_150] : memref<64x128xf32, #tpu.memory_space<vmem>>, vector<64x128xf32>
    tpu.vector_store %arg7[%c0_149, %c0_150], %462 {strides = array<i32>} : memref<64x128xf32, #tpu.memory_space<vmem>>, vector<64x128xf32>,
    return
  }
  func.func @transform_0(%arg0: i32) -> (i32, i32) {
    %c0_i32 = arith.constant 0 : i32
    %c0_i32_0 = arith.constant 0 : i32
    return %c0_i32, %arg0 : i32, i32
  }
  func.func @transform_1(%arg0: i32) -> (i32, i32, i32) {
    %c0_i32 = arith.constant 0 : i32
    %c0_i32_0 = arith.constant 0 : i32
    %c0_i32_1 = arith.constant 0 : i32
    return %c0_i32, %c0_i32_0, %arg0 : i32, i32, i32
  }
  func.func @transform_2(%arg0: i32) -> (i32, i32) {
    %c0_i32 = arith.constant 0 : i32
    %c0_i32_0 = arith.constant 0 : i32
    %c0_i32_1 = arith.constant 0 : i32
    return %c0_i32, %c0_i32_0 : i32, i32
  }
  func.func @transform_3(%arg0: i32) -> (i32, i32) {
    %c0_i32 = arith.constant 0 : i32
    %c0_i32_0 = arith.constant 0 : i32
    %c0_i32_1 = arith.constant 0 : i32
    return %c0_i32, %c0_i32_0 : i32, i32
  }
  func.func @transform_4(%arg0: i32) -> (i32, i32) {
    %c0_i32 = arith.constant 0 : i32
    %c0_i32_0 = arith.constant 0 : i32
    %c0_i32_1 = arith.constant 0 : i32
    return %c0_i32, %c0_i32_0 : i32, i32
  }
  func.func @transform_5(%arg0: i32) -> (i32, i32) {
    %c0_i32 = arith.constant 0 : i32
    %c0_i32_0 = arith.constant 0 : i32
    %c0_i32_1 = arith.constant 0 : i32
    return %c0_i32, %c0_i32_0 : i32, i32
  }
  func.func @transform_6(%arg0: i32) -> (i32, i32) {
    %c0_i32 = arith.constant 0 : i32
    %c0_i32_0 = arith.constant 0 : i32
    return %c0_i32, %arg0 : i32, i32
  }
}

</mosaic_0001>

<llo_original>
// kernel: tpu_custom_call.1
$region0: #{tpu_custom_call.1}
  #allocation0 [shape = 'u32[]', space=smem, size = 0x4, offset = 0x4, fixed_abs, tag = 'smem constant byte address 0x4 - core index']
  #allocation1 [shape = 'u32[144,128]{1,0:T(1,128)}', space=vmem, size = 0x12000, scoped, tag = 'internal scratch']
  #allocation2 [shape = 'f32[6,192,128]{2,1,0:T(8,128)}', space=vmem, size = 0x90000, scoped, tag = 'scratch operand']
  %s0 = inlined_call_operand.vmem [shape: s32[1,128], index: 0, kind: input, shape index: {}]
  %s1 = inlined_call_operand.vmem [shape: f32[6,32,128], index: 1, kind: input, shape index: {}]
  %s2 = inlined_call_operand.vmem [shape: f32[192,32], index: 2, kind: input, shape index: {}]
  %s3 = inlined_call_operand.vmem [shape: f32[192,1], index: 3, kind: input, shape index: {}]
  %s4 = inlined_call_operand.vmem [shape: f32[192,64], index: 4, kind: input, shape index: {}]
  %s5 = inlined_call_operand.vmem [shape: f32[64,1], index: 5, kind: input, shape index: {}]
  %s6 = inlined_call_operand.hbm [shape: f32[64,128], index: 6, kind: output, shape index: {}]
  %s7 = sld [smem:[#allocation0]]
  $region34: #{tpu_custom_call.1} parent=0
    _
  %s9 = ssub.s32 1, %s7
  %s10 = scalar_select 0, %s9, %s7
  $region1: #{tpu_custom_call.1} parent=0
    #allocation3 [shape = 'u8[32768]{0}', space=vmem, size = 0x8000, scoped, tag = 'output window, operand 0, single buffered']
    #allocation4 [shape = 's32[1]{0}', space=sflag, size = 0x4, scoped, tag = 'scoped memory for tpu_custom_call.1']
    %11 = vsyncpa [#allocation4], 0
    // Predicated region
    $region2: #{tpu_custom_call.1} parent=1 // pred_check
      _
    $region3: #{tpu_custom_call.1} parent=1 // pred_check_branch
      %13 = sbr.rel (0) target = $region5
    $region4: #{tpu_custom_call.1} parent=1 // pred_region
      _
    $region5: #{tpu_custom_call.1} parent=1 // pred_fallthru
      _
    // Predicated region
    $region6: #{tpu_custom_call.1} parent=1 // pred_check
      _
    $region7: #{tpu_custom_call.1} parent=1 // pred_check_branch
      %15 = sbr.rel (0) target = $region9
    $region8: #{tpu_custom_call.1} parent=1 // pred_region
      _
    $region9: #{tpu_custom_call.1} parent=1 // pred_fallthru
      _
    // Predicated region
    $region10: #{tpu_custom_call.1} parent=1 // pred_check
      _
    $region11: #{tpu_custom_call.1} parent=1 // pred_check_branch
      %17 = sbr.rel (0) target = $region13
    $region12: #{tpu_custom_call.1} parent=1 // pred_region
      _
    $region13: #{tpu_custom_call.1} parent=1 // pred_fallthru
      _
    // Predicated region
    $region14: #{tpu_custom_call.1} parent=1 // pred_check
      _
    $region15: #{tpu_custom_call.1} parent=1 // pred_check_branch
      %19 = sbr.rel (0) target = $region17
    $region16: #{tpu_custom_call.1} parent=1 // pred_region
      _
    $region17: #{tpu_custom_call.1} parent=1 // pred_fallthru
      _
    // Predicated region
    $region18: #{tpu_custom_call.1} parent=1 // pred_check
      _
    $region19: #{tpu_custom_call.1} parent=1 // pred_check_branch
      %21 = sbr.rel (0) target = $region21
    $region20: #{tpu_custom_call.1} parent=1 // pred_region
      _
    $region21: #{tpu_custom_call.1} parent=1 // pred_fallthru
      _
    // Predicated region
    $region22: #{tpu_custom_call.1} parent=1 // pred_check
      _
    $region23: #{tpu_custom_call.1} parent=1 // pred_check_branch
      %23 = sbr.rel (0) target = $region25
    $region24: #{tpu_custom_call.1} parent=1 // pred_region
      _
    $region25: #{tpu_custom_call.1} parent=1 // pred_fallthru
      _
    %v24 = vld [vmem:[%s0] sm:$0x1]
    %v25 = vld [vmem:[%s2] sm:$0xff]
    %v26 = vld [vmem:[%s2 + $0x8] sm:$0xff]
    %v27 = vld [vmem:[%s2 + $0x10] sm:$0xff]
    %v28 = vld [vmem:[%s2 + $0x18] sm:$0xff]
    %v29 = vld [vmem:[%s2 + $0x20] sm:$0xff]
    %v30 = vld [vmem:[%s2 + $0x28] sm:$0xff]
    %v31 = vld [vmem:[%s2 + $0x30] sm:$0xff]
    %v32 = vld [vmem:[%s2 + $0x38] sm:$0xff]
    %v33 = vld [vmem:[%s2 + $0x40] sm:$0xff]
    %v34 = vld [vmem:[%s2 + $0x48] sm:$0xff]
    %v35 = vld [vmem:[%s2 + $0x50] sm:$0xff]
    %v36 = vld [vmem:[%s2 + $0x58] sm:$0xff]
    %v37 = vld [vmem:[%s2 + $0x60] sm:$0xff]
    %v38 = vld [vmem:[%s2 + $0x68] sm:$0xff]
    %v39 = vld [vmem:[%s2 + $0x70] sm:$0xff]
    %v40 = vld [vmem:[%s2 + $0x78] sm:$0xff]
    %v41 = vld [vmem:[%s2 + $0x80] sm:$0xff]
    %v42 = vld [vmem:[%s2 + $0x88] sm:$0xff]
    %v43 = vld [vmem:[%s2 + $0x90] sm:$0xff]
    %v44 = vld [vmem:[%s2 + $0x98] sm:$0xff]
    %v45 = vld [vmem:[%s2 + $0xa0] sm:$0xff]
    %v46 = vld [vmem:[%s2 + $0xa8] sm:$0xff]
    %v47 = vld [vmem:[%s2 + $0xb0] sm:$0xff]
    %v48 = vld [vmem:[%s2 + $0xb8] sm:$0xff]
    %v49 = vld [vmem:[%s4] sm:$0xff]
    %v50 = vld [vmem:[%s4 + $0x8] sm:$0xff]
    %v51 = vld [vmem:[%s4 + $0x10] sm:$0xff]
    %v52 = vld [vmem:[%s4 + $0x18] sm:$0xff]
    %v53 = vld [vmem:[%s4 + $0x20] sm:$0xff]
    %v54 = vld [vmem:[%s4 + $0x28] sm:$0xff]
    %v55 = vld [vmem:[%s4 + $0x30] sm:$0xff]
    %v56 = vld [vmem:[%s4 + $0x38] sm:$0xff]
    %v57 = vld [vmem:[%s4 + $0x40] sm:$0xff]
    %v58 = vld [vmem:[%s4 + $0x48] sm:$0xff]
    %v59 = vld [vmem:[%s4 + $0x50] sm:$0xff]
    %v60 = vld [vmem:[%s4 + $0x58] sm:$0xff]
    %v61 = vld [vmem:[%s4 + $0x60] sm:$0xff]
    %v62 = vld [vmem:[%s4 + $0x68] sm:$0xff]
    %v63 = vld [vmem:[%s4 + $0x70] sm:$0xff]
    %v64 = vld [vmem:[%s4 + $0x78] sm:$0xff]
    %v65 = vld [vmem:[%s4 + $0x80] sm:$0xff]
    %v66 = vld [vmem:[%s4 + $0x88] sm:$0xff]
    %v67 = vld [vmem:[%s4 + $0x90] sm:$0xff]
    %v68 = vld [vmem:[%s4 + $0x98] sm:$0xff]
    %v69 = vld [vmem:[%s4 + $0xa0] sm:$0xff]
    %v70 = vld [vmem:[%s4 + $0xa8] sm:$0xff]
    %v71 = vld [vmem:[%s4 + $0xb0] sm:$0xff]
    %v72 = vld [vmem:[%s4 + $0xb8] sm:$0xff]
    %v73 = vld [vmem:[%s3] sm:$0xff]
    %v74 = vld [vmem:[%s3 + $0x8] sm:$0xff]
    %v75 = vld [vmem:[%s3 + $0x10] sm:$0xff]
    %v76 = vld [vmem:[%s3 + $0x18] sm:$0xff]
    %v77 = vld [vmem:[%s3 + $0x20] sm:$0xff]
    %v78 = vld [vmem:[%s3 + $0x28] sm:$0xff]
    %v79 = vld [vmem:[%s3 + $0x30] sm:$0xff]
    %v80 = vld [vmem:[%s3 + $0x38] sm:$0xff]
    %v81 = vld [vmem:[%s3 + $0x40] sm:$0xff]
    %v82 = vld [vmem:[%s3 + $0x48] sm:$0xff]
    %v83 = vld [vmem:[%s3 + $0x50] sm:$0xff]
    %v84 = vld [vmem:[%s3 + $0x58] sm:$0xff]
    %v85 = vld [vmem:[%s3 + $0x60] sm:$0xff]
    %v86 = vld [vmem:[%s3 + $0x68] sm:$0xff]
    %v87 = vld [vmem:[%s3 + $0x70] sm:$0xff]
    %v88 = vld [vmem:[%s3 + $0x78] sm:$0xff]
    %v89 = vld [vmem:[%s3 + $0x80] sm:$0xff]
    %v90 = vld [vmem:[%s3 + $0x88] sm:$0xff]
    %v91 = vld [vmem:[%s3 + $0x90] sm:$0xff]
    %v92 = vld [vmem:[%s3 + $0x98] sm:$0xff]
    %v93 = vld [vmem:[%s3 + $0xa0] sm:$0xff]
    %v94 = vld [vmem:[%s3 + $0xa8] sm:$0xff]
    %v95 = vld [vmem:[%s3 + $0xb0] sm:$0xff]
    %v96 = vld [vmem:[%s3 + $0xb8] sm:$0xff]
    %98 = vset.pattern.permute.xlu0 0
    %99 = vperm.xlu0 %98, %v73
    %v100 = vpop.permute.xlu0 %99
    %103 = vset.pattern.permute.xlu0 0
    %104 = vperm.xlu0 %103, %v74
    %v105 = vpop.permute.xlu0 %104
    %108 = vset.pattern.permute.xlu0 0
    %109 = vperm.xlu0 %108, %v75
    %v110 = vpop.permute.xlu0 %109
    %113 = vset.pattern.permute.xlu0 0
    %114 = vperm.xlu0 %113, %v76
    %v115 = vpop.permute.xlu0 %114
    %118 = vset.pattern.permute.xlu0 0
    %119 = vperm.xlu0 %118, %v77
    %v120 = vpop.permute.xlu0 %119
    %123 = vset.pattern.permute.xlu0 0
    %124 = vperm.xlu0 %123, %v78
    %v125 = vpop.permute.xlu0 %124
    %128 = vset.pattern.permute.xlu0 0
    %129 = vperm.xlu0 %128, %v79
    %v130 = vpop.permute.xlu0 %129
    %133 = vset.pattern.permute.xlu0 0
    %134 = vperm.xlu0 %133, %v80
    %v135 = vpop.permute.xlu0 %134
    %138 = vset.pattern.permute.xlu0 0
    %139 = vperm.xlu0 %138, %v81
    %v140 = vpop.permute.xlu0 %139
    %143 = vset.pattern.permute.xlu0 0
    %144 = vperm.xlu0 %143, %v82
    %v145 = vpop.permute.xlu0 %144
    %148 = vset.pattern.permute.xlu0 0
    %149 = vperm.xlu0 %148, %v83
    %v150 = vpop.permute.xlu0 %149
    %153 = vset.pattern.permute.xlu0 0
    %154 = vperm.xlu0 %153, %v84
    %v155 = vpop.permute.xlu0 %154
    %158 = vset.pattern.permute.xlu0 0
    %159 = vperm.xlu0 %158, %v85
    %v160 = vpop.permute.xlu0 %159
    %163 = vset.pattern.permute.xlu0 0
    %164 = vperm.xlu0 %163, %v86
    %v165 = vpop.permute.xlu0 %164
    %168 = vset.pattern.permute.xlu0 0
    %169 = vperm.xlu0 %168, %v87
    %v170 = vpop.permute.xlu0 %169
    %173 = vset.pattern.permute.xlu0 0
    %174 = vperm.xlu0 %173, %v88
    %v175 = vpop.permute.xlu0 %174
    %178 = vset.pattern.permute.xlu0 0
    %179 = vperm.xlu0 %178, %v89
    %v180 = vpop.permute.xlu0 %179
    %183 = vset.pattern.permute.xlu0 0
    %184 = vperm.xlu0 %183, %v90
    %v185 = vpop.permute.xlu0 %184
    %188 = vset.pattern.permute.xlu0 0
    %189 = vperm.xlu0 %188, %v91
    %v190 = vpop.permute.xlu0 %189
    %193 = vset.pattern.permute.xlu0 0
    %194 = vperm.xlu0 %193, %v92
    %v195 = vpop.permute.xlu0 %194
    %198 = vset.pattern.permute.xlu0 0
    %199 = vperm.xlu0 %198, %v93
    %v200 = vpop.permute.xlu0 %199
    %203 = vset.pattern.permute.xlu0 0
    %204 = vperm.xlu0 %203, %v94
    %v205 = vpop.permute.xlu0 %204
    %208 = vset.pattern.permute.xlu0 0
    %209 = vperm.xlu0 %208, %v95
    %v210 = vpop.permute.xlu0 %209
    %213 = vset.pattern.permute.xlu0 0
    %214 = vperm.xlu0 %213, %v96
    %v215 = vpop.permute.xlu0 %214
    %v217 = vld [vmem:[%s5] sm:$0xff]
    %v218 = vld [vmem:[%s5 + $0x8] sm:$0xff]
    %v219 = vld [vmem:[%s5 + $0x10] sm:$0xff]
    %v220 = vld [vmem:[%s5 + $0x18] sm:$0xff]
    %v221 = vld [vmem:[%s5 + $0x20] sm:$0xff]
    %v222 = vld [vmem:[%s5 + $0x28] sm:$0xff]
    %v223 = vld [vmem:[%s5 + $0x30] sm:$0xff]
    %v224 = vld [vmem:[%s5 + $0x38] sm:$0xff]
    %226 = vset.pattern.permute.xlu0 0
    %227 = vperm.xlu0 %226, %v217
    %v228 = vpop.permute.xlu0 %227
    %231 = vset.pattern.permute.xlu0 0
    %232 = vperm.xlu0 %231, %v218
    %v233 = vpop.permute.xlu0 %232
    %236 = vset.pattern.permute.xlu0 0
    %237 = vperm.xlu0 %236, %v219
    %v238 = vpop.permute.xlu0 %237
    %241 = vset.pattern.permute.xlu0 0
    %242 = vperm.xlu0 %241, %v220
    %v243 = vpop.permute.xlu0 %242
    %246 = vset.pattern.permute.xlu0 0
    %247 = vperm.xlu0 %246, %v221
    %v248 = vpop.permute.xlu0 %247
    %251 = vset.pattern.permute.xlu0 0
    %252 = vperm.xlu0 %251, %v222
    %v253 = vpop.permute.xlu0 %252
    %256 = vset.pattern.permute.xlu0 0
    %257 = vperm.xlu0 %256, %v223
    %v258 = vpop.permute.xlu0 %257
    %261 = vset.pattern.permute.xlu0 0
    %262 = vperm.xlu0 %261, %v224
    %v263 = vpop.permute.xlu0 %262
    %v265 = vlaneseq
    %v266 = vshrl.u32 %v265, 7
    %v267 = vadd.s32 %v266, 8
    %v268 = vadd.s32 %v266, 16
    %v269 = vadd.s32 %v266, 24
    %v270 = vadd.s32 %v266, 32
    %v271 = vadd.s32 %v266, 40
    %v272 = vadd.s32 %v266, 48
    %v273 = vadd.s32 %v266, 56
    %vm274 = vcmp.lt.s32.totalorder %v266, 32
    %vm275 = vcmp.lt.s32.totalorder %v267, 32
    %vm276 = vcmp.lt.s32.totalorder %v268, 32
    %vm277 = vcmp.lt.s32.totalorder %v269, 32
    %vm278 = vcmp.lt.s32.totalorder %v270, 32
    %vm279 = vcmp.lt.s32.totalorder %v271, 32
    %vm280 = vcmp.lt.s32.totalorder %v272, 32
    %vm281 = vcmp.lt.s32.totalorder %v273, 32
    %v282 = vld [vmem:[%s1] sm:$0xff]
    %v283 = vld [vmem:[%s1 + $0x8] sm:$0xff]
    %v284 = vld [vmem:[%s1 + $0x10] sm:$0xff]
    %v285 = vld [vmem:[%s1 + $0x18] sm:$0xff]
    %vm286 = vcmask 261120
    %v288 = vsel %vm286, %v25, 0
    %v291 = vsel %vm286, %v26, 0
    %v294 = vsel %vm286, %v27, 0
    %v297 = vsel %vm286, %v28, 0
    %v300 = vsel %vm286, %v29, 0
    %v303 = vsel %vm286, %v30, 0
    %v306 = vsel %vm286, %v31, 0
    %v309 = vsel %vm286, %v32, 0
    %v312 = vsel %vm286, %v33, 0
    %v315 = vsel %vm286, %v34, 0
    %v318 = vsel %vm286, %v35, 0
    %v321 = vsel %vm286, %v36, 0
    %v324 = vsel %vm286, %v37, 0
    %v327 = vsel %vm286, %v38, 0
    %v330 = vsel %vm286, %v39, 0
    %v333 = vsel %vm286, %v40, 0
    %v336 = vsel %vm286, %v41, 0
    %v339 = vsel %vm286, %v42, 0
    %v342 = vsel %vm286, %v43, 0
    %v345 = vsel %vm286, %v44, 0
    %v348 = vsel %vm286, %v45, 0
    %v351 = vsel %vm286, %v46, 0
    %v354 = vsel %vm286, %v47, 0
    %v357 = vsel %vm286, %v48, 0
    %359 = vmatprep.subr.mxu0 0.0
    %360 = vmatpush1.msra.mxu0 %v282
    %361 = vmatprep.subr.mxu0 0.0
    %362 = vmatpush1.msra.mxu0 %v283
    %363 = vmatprep.subr.mxu0 0.0
    %364 = vmatpush1.msra.mxu0 %v284
    %365 = vmatprep.subr.mxu0 0.0
    %366 = vmatpush1.msra.mxu0 %v285
    %367 = vmatprep.subr.mxu0 0.0
    %368 = vmatpush1.msra.mxu0 0.0
    %369 = vmatprep.subr.mxu0 0.0
    %370 = vmatpush1.msra.mxu0 0.0
    %371 = vmatprep.subr.mxu0 0.0
    %372 = vmatpush1.msra.mxu0 0.0
    %373 = vmatprep.subr.mxu0 0.0
    %374 = vmatpush1.msra.mxu0 0.0
    %375 = vmatprep.subr.mxu0 0.0
    %376 = vmatpush1.msra.mxu0 0.0
    %377 = vmatprep.subr.mxu0 0.0
    %378 = vmatpush1.msra.mxu0 0.0
    %379 = vmatprep.subr.mxu0 0.0
    %380 = vmatpush1.msra.mxu0 0.0
    %381 = vmatprep.subr.mxu0 0.0
    %382 = vmatpush1.msra.mxu0 0.0
    %383 = vmatprep.subr.mxu0 0.0
    %384 = vmatpush1.msra.mxu0 0.0
    %385 = vmatprep.subr.mxu0 0.0
    %386 = vmatpush1.msra.mxu0 0.0
    %387 = vmatprep.subr.mxu0 0.0
    %388 = vmatpush1.msra.mxu0 0.0
    %389 = vmatprep.subr.mxu0 0.0
    %390 = vmatpush1.msra.mxu0 0.0
    %391 = vmatprep.subr.mxu0 0.0
    %392 = vmatpush1.msra.mxu0 0.0
    %393 = vmatprep.subr.mxu0 0.0
    %394 = vmatpush1.msra.mxu0 0.0
    %395 = vmatprep.subr.mxu0 0.0
    %396 = vmatpush1.msra.mxu0 0.0
    %397 = vmatprep.subr.mxu0 0.0
    %398 = vmatpush1.msra.mxu0 0.0
    %399 = vmatprep.subr.mxu0 0.0
    %400 = vmatpush1.msra.mxu0 0.0
    %401 = vmatprep.subr.mxu0 0.0
    %402 = vmatpush1.msra.mxu0 0.0
    %403 = vmatprep.subr.mxu0 0.0
    %404 = vmatpush1.msra.mxu0 0.0
    %405 = vmatprep.subr.mxu0 0.0
    %406 = vmatpush1.msra.mxu0 0.0
    %407 = vmatprep.subr.mxu0 0.0
    %408 = vmatpush1.msra.mxu0 0.0
    %409 = vmatprep.subr.mxu0 0.0
    %410 = vmatpush1.msra.mxu0 0.0
    %411 = vmatprep.subr.mxu0 0.0
    %412 = vmatpush1.msra.mxu0 0.0
    %413 = vmatprep.subr.mxu0 0.0
    %414 = vmatpush1.msra.mxu0 0.0
    %415 = vmatprep.subr.mxu0 0.0
    %416 = vmatpush1.msra.mxu0 0.0
    %417 = vmatprep.subr.mxu0 0.0
    %418 = vmatpush1.msra.mxu0 0.0
    %419 = vmatprep.subr.mxu0 0.0
    %420 = vmatpush1.msra.mxu0 0.0
    %421 = vmatprep.subr.mxu0 0.0
    %422 = vmatpush1.msra.mxu0 0.0
    %423 = vmatprep.mubr.f32.mxu0 0.0
    %424 = vmatmul.mubr.f32.gmra.mrb[0].mxu0 %v288
    %v425 = vpop.f32.mrb[0].mxu0
    %v426 = vadd.f32 %v100, %v425
    %v427 = vpop.f32.mrb[0].mxu0
    %428 = vmatprep.mubr.f32.mxu0 0.0
    %429 = vmatmul.mubr.f32.gmra.mrb[0].mxu0 %v291
    %v430 = vpop.f32.mrb[0].mxu0
    %v431 = vadd.f32 %v105, %v430
    %v432 = vpop.f32.mrb[0].mxu0
    %433 = vmatprep.mubr.f32.mxu0 0.0
    %434 = vmatmul.mubr.f32.gmra.mrb[0].mxu0 %v294
    %v435 = vpop.f32.mrb[0].mxu0
    %v436 = vadd.f32 %v110, %v435
    %v437 = vpop.f32.mrb[0].mxu0
    %438 = vmatprep.mubr.f32.mxu0 0.0
    %439 = vmatmul.mubr.f32.gmra.mrb[0].mxu0 %v297
    %v440 = vpop.f32.mrb[0].mxu0
    %v441 = vadd.f32 %v115, %v440
    %v442 = vpop.f32.mrb[0].mxu0
    %443 = vmatprep.mubr.f32.mxu0 0.0
    %444 = vmatmul.mubr.f32.gmra.mrb[0].mxu0 %v300
    %v445 = vpop.f32.mrb[0].mxu0
    %v446 = vadd.f32 %v120, %v445
    %v447 = vpop.f32.mrb[0].mxu0
    %448 = vmatprep.mubr.f32.mxu0 0.0
    %449 = vmatmul.mubr.f32.gmra.mrb[0].mxu0 %v303
    %v450 = vpop.f32.mrb[0].mxu0
    %v451 = vadd.f32 %v125, %v450
    %v452 = vpop.f32.mrb[0].mxu0
    %453 = vmatprep.mubr.f32.mxu0 0.0
    %454 = vmatmul.mubr.f32.gmra.mrb[0].mxu0 %v306
    %v455 = vpop.f32.mrb[0].mxu0
    %v456 = vadd.f32 %v130, %v455
    %v457 = vpop.f32.mrb[0].mxu0
    %458 = vmatprep.mubr.f32.mxu0 0.0
    %459 = vmatmul.mubr.f32.gmra.mrb[0].mxu0 %v309
    %v460 = vpop.f32.mrb[0].mxu0
    %v461 = vadd.f32 %v135, %v460
    %v462 = vpop.f32.mrb[0].mxu0
    %463 = vmatprep.mubr.f32.mxu0 0.0
    %464 = vmatmul.mubr.f32.gmra.mrb[0].mxu0 %v312
    %v465 = vpop.f32.mrb[0].mxu0
    %v466 = vadd.f32 %v140, %v465
    %v467 = vpop.f32.mrb[0].mxu0
    %468 = vmatprep.mubr.f32.mxu0 0.0
    %469 = vmatmul.mubr.f32.gmra.mrb[0].mxu0 %v315
    %v470 = vpop.f32.mrb[0].mxu0
    %v471 = vadd.f32 %v145, %v470
    %v472 = vpop.f32.mrb[0].mxu0
    %473 = vmatprep.mubr.f32.mxu0 0.0
    %474 = vmatmul.mubr.f32.gmra.mrb[0].mxu0 %v318
    %v475 = vpop.f32.mrb[0].mxu0
    %v476 = vadd.f32 %v150, %v475
    %v477 = vpop.f32.mrb[0].mxu0
    %478 = vmatprep.mubr.f32.mxu0 0.0
    %479 = vmatmul.mubr.f32.gmra.mrb[0].mxu0 %v321
    %v480 = vpop.f32.mrb[0].mxu0
    %v481 = vadd.f32 %v155, %v480
    %v482 = vpop.f32.mrb[0].mxu0
    %483 = vmatprep.mubr.f32.mxu0 0.0
    %484 = vmatmul.mubr.f32.gmra.mrb[0].mxu0 %v324
    %v485 = vpop.f32.mrb[0].mxu0
    %v486 = vadd.f32 %v160, %v485
    %v487 = vpop.f32.mrb[0].mxu0
    %488 = vmatprep.mubr.f32.mxu0 0.0
    %489 = vmatmul.mubr.f32.gmra.mrb[0].mxu0 %v327
    %v490 = vpop.f32.mrb[0].mxu0
    %v491 = vadd.f32 %v165, %v490
    %v492 = vpop.f32.mrb[0].mxu0
    %493 = vmatprep.mubr.f32.mxu0 0.0
    %494 = vmatmul.mubr.f32.gmra.mrb[0].mxu0 %v330
    %v495 = vpop.f32.mrb[0].mxu0
    %v496 = vadd.f32 %v170, %v495
    %v497 = vpop.f32.mrb[0].mxu0
    %498 = vmatprep.mubr.f32.mxu0 0.0
    %499 = vmatmul.mubr.f32.gmra.mrb[0].mxu0 %v333
    %v500 = vpop.f32.mrb[0].mxu0
    %v501 = vadd.f32 %v175, %v500
    %v502 = vpop.f32.mrb[0].mxu0
    %503 = vmatprep.mubr.f32.mxu0 0.0
    %504 = vmatmul.mubr.f32.gmra.mrb[0].mxu0 %v336
    %v505 = vpop.f32.mrb[0].mxu0
    %v506 = vadd.f32 %v180, %v505
    %v507 = vpop.f32.mrb[0].mxu0
    %508 = vmatprep.mubr.f32.mxu0 0.0
    %509 = vmatmul.mubr.f32.gmra.mrb[0].mxu0 %v339
    %v510 = vpop.f32.mrb[0].mxu0
    %v511 = vadd.f32 %v185, %v510
    %v512 = vpop.f32.mrb[0].mxu0
    %513 = vmatprep.mubr.f32.mxu0 0.0
    %514 = vmatmul.mubr.f32.gmra.mrb[0].mxu0 %v342
    %v515 = vpop.f32.mrb[0].mxu0
    %v516 = vadd.f32 %v190, %v515
    %v517 = vpop.f32.mrb[0].mxu0
    %518 = vmatprep.mubr.f32.mxu0 0.0
    %519 = vmatmul.mubr.f32.gmra.mrb[0].mxu0 %v345
    %v520 = vpop.f32.mrb[0].mxu0
    %v521 = vadd.f32 %v195, %v520
    %v522 = vpop.f32.mrb[0].mxu0
    %523 = vmatprep.mubr.f32.mxu0 0.0
    %524 = vmatmul.mubr.f32.gmra.mrb[0].mxu0 %v348
    %v525 = vpop.f32.mrb[0].mxu0
    %v526 = vadd.f32 %v200, %v525
    %v527 = vpop.f32.mrb[0].mxu0
    %528 = vmatprep.mubr.f32.mxu0 0.0
    %529 = vmatmul.mubr.f32.gmra.mrb[0].mxu0 %v351
    %v530 = vpop.f32.mrb[0].mxu0
    %v531 = vadd.f32 %v205, %v530
    %v532 = vpop.f32.mrb[0].mxu0
    %533 = vmatprep.mubr.f32.mxu0 0.0
    %534 = vmatmul.mubr.f32.gmra.mrb[0].mxu0 %v354
    %v535 = vpop.f32.mrb[0].mxu0
    %v536 = vadd.f32 %v210, %v535
    %v537 = vpop.f32.mrb[0].mxu0
    %538 = vmatprep.mubr.f32.mxu0 0.0
    %539 = vmatmul.mubr.f32.gmra.mrb[0].mxu0 %v357
    %v540 = vpop.f32.mrb[0].mxu0
    %v541 = vadd.f32 %v215, %v540
    %v542 = vpop.f32.mrb[0].mxu0
    %543 = vdwg.mxu0
    %544 = vst [vmem:[#allocation2] sm:$0xff] %v426
    %545 = vst [vmem:[#allocation2 + $0x8] sm:$0xff] %v431
    %546 = vst [vmem:[#allocation2 + $0x10] sm:$0xff] %v436
    %547 = vst [vmem:[#allocation2 + $0x18] sm:$0xff] %v441
    %548 = vst [vmem:[#allocation2 + $0x40] sm:$0xff] %v466
    %549 = vst [vmem:[#allocation2 + $0x48] sm:$0xff] %v471
    %550 = vst [vmem:[#allocation2 + $0x50] sm:$0xff] %v476
    %551 = vst [vmem:[#allocation2 + $0x58] sm:$0xff] %v481
    %552 = vst [vmem:[#allocation2 + $0x80] sm:$0xff] %v506
    %553 = vst [vmem:[#allocation2 + $0x88] sm:$0xff] %v511
    %554 = vst [vmem:[#allocation2 + $0x90] sm:$0xff] %v516
    %555 = vst [vmem:[#allocation2 + $0x98] sm:$0xff] %v521
    %s556 = scalar_lea.vmem [#allocation2], 960
    %557 = vst [vmem:[%s556 + $0x20] sm:$0xff] %v446
    %558 = vst [vmem:[%s556 + $0x28] sm:$0xff] %v451
    %559 = vst [vmem:[%s556 + $0x30] sm:$0xff] %v456
    %560 = vst [vmem:[%s556 + $0x38] sm:$0xff] %v461
    %561 = vst [vmem:[%s556 + $0x60] sm:$0xff] %v486
    %562 = vst [vmem:[%s556 + $0x68] sm:$0xff] %v491
    %563 = vst [vmem:[%s556 + $0x70] sm:$0xff] %v496
    %564 = vst [vmem:[%s556 + $0x78] sm:$0xff] %v501
    %565 = vst [vmem:[%s556 + $0xa0] sm:$0xff] %v526
    %566 = vst [vmem:[%s556 + $0xa8] sm:$0xff] %v531
    %567 = vst [vmem:[%s556 + $0xb0] sm:$0xff] %v536
    %568 = vst [vmem:[%s556 + $0xb8] sm:$0xff] %v541
    %s569 = scalar_lea.vmem %s1, 32
    %v570 = vld [vmem:[%s569] sm:$0xff]
    %v571 = vld [vmem:[%s569 + $0x8] sm:$0xff]
    %v572 = vld [vmem:[%s569 + $0x10] sm:$0xff]
    %v573 = vld [vmem:[%s569 + $0x18] sm:$0xff]
    %574 = vmatprep.subr.mxu0 0.0
    %575 = vmatpush1.msra.mxu0 %v570
    %576 = vmatprep.subr.mxu0 0.0
    %577 = vmatpush1.msra.mxu0 %v571
    %578 = vmatprep.subr.mxu0 0.0
    %579 = vmatpush1.msra.mxu0 %v572
    %580 = vmatprep.subr.mxu0 0.0
    %581 = vmatpush1.msra.mxu0 %v573
    %582 = vmatprep.subr.mxu0 0.0
    %583 = vmatpush1.msra.mxu0 0.0
    %584 = vmatprep.subr.mxu0 0.0
    %585 = vmatpush1.msra.mxu0 0.0
    %586 = vmatprep.subr.mxu0 0.0
    %587 = vmatpush1.msra.mxu0 0.0
    %588 = vmatprep.subr.mxu0 0.0
    %589 = vmatpush1.msra.mxu0 0.0
    %590 = vmatprep.subr.mxu0 0.0
    %591 = vmatpush1.msra.mxu0 0.0
    %592 = vmatprep.subr.mxu0 0.0
    %593 = vmatpush1.msra.mxu0 0.0
    %594 = vmatprep.subr.mxu0 0.0
    %595 = vmatpush1.msra.mxu0 0.0
    %596 = vmatprep.subr.mxu0 0.0
    %597 = vmatpush1.msra.mxu0 0.0
    %598 = vmatprep.subr.mxu0 0.0
    %599 = vmatpush1.msra.mxu0 0.0
    %600 = vmatprep.subr.mxu0 0.0
    %601 = vmatpush1.msra.mxu0 0.0
    %602 = vmatprep.subr.mxu0 0.0
    %603 = vmatpush1.msra.mxu0 0.0
    %604 = vmatprep.subr.mxu0 0.0
    %605 = vmatpush1.msra.mxu0 0.0
    %606 = vmatprep.subr.mxu0 0.0
    %607 = vmatpush1.msra.mxu0 0.0
    %608 = vmatprep.subr.mxu0 0.0
    %609 = vmatpush1.msra.mxu0 0.0
    %610 = vmatprep.subr.mxu0 0.0
    %611 = vmatpush1.msra.mxu0 0.0
    %612 = vmatprep.subr.mxu0 0.0
    %613 = vmatpush1.msra.mxu0 0.0
    %614 = vmatprep.subr.mxu0 0.0
    %615 = vmatpush1.msra.mxu0 0.0
    %616 = vmatprep.subr.mxu0 0.0
    %617 = vmatpush1.msra.mxu0 0.0
    %618 = vmatprep.subr.mxu0 0.0
    %619 = vmatpush1.msra.mxu0 0.0
    %620 = vmatprep.subr.mxu0 0.0
    %621 = vmatpush1.msra.mxu0 0.0
    %622 = vmatprep.subr.mxu0 0.0
    %623 = vmatpush1.msra.mxu0 0.0
    %624 = vmatprep.subr.mxu0 0.0
    %625 = vmatpush1.msra.mxu0 0.0
    %626 = vmatprep.subr.mxu0 0.0
    %627 = vmatpush1.msra.mxu0 0.0
    %628 = vmatprep.subr.mxu0 0.0
    %629 = vmatpush1.msra.mxu0 0.0
    %630 = vmatprep.subr.mxu0 0.0
    %631 = vmatpush1.msra.mxu0 0.0
    %632 = vmatprep.subr.mxu0 0.0
    %633 = vmatpush1.msra.mxu0 0.0
    %634 = vmatprep.subr.mxu0 0.0
    %635 = vmatpush1.msra.mxu0 0.0
    %636 = vmatprep.subr.mxu0 0.0
    %637 = vmatpush1.msra.mxu0 0.0
    %638 = vmatprep.mubr.f32.mxu0 0.0
    %639 = vmatmul.mubr.f32.gmra.mrb[0].mxu0 %v288
    %v640 = vpop.f32.mrb[0].mxu0
    %v641 = vadd.f32 %v100, %v640
    %v642 = vpop.f32.mrb[0].mxu0
    %643 = vmatprep.mubr.f32.mxu0 0.0
    %644 = vmatmul.mubr.f32.gmra.mrb[0].mxu0 %v291
    %v645 = vpop.f32.mrb[0].mxu0
    %v646 = vadd.f32 %v105, %v645
    %v647 = vpop.f32.mrb[0].mxu0
    %648 = vmatprep.mubr.f32.mxu0 0.0
    %649 = vmatmul.mubr.f32.gmra.mrb[0].mxu0 %v294
    %v650 = vpop.f32.mrb[0].mxu0
    %v651 = vadd.f32 %v110, %v650
    %v652 = vpop.f32.mrb[0].mxu0
    %653 = vmatprep.mubr.f32.mxu0 0.0
    %654 = vmatmul.mubr.f32.gmra.mrb[0].mxu0 %v297
    %v655 = vpop.f32.mrb[0].mxu0
    %v656 = vadd.f32 %v115, %v655
    %v657 = vpop.f32.mrb[0].mxu0
    %658 = vmatprep.mubr.f32.mxu0 0.0
    %659 = vmatmul.mubr.f32.gmra.mrb[0].mxu0 %v300
    %v660 = vpop.f32.mrb[0].mxu0
    %v661 = vadd.f32 %v120, %v660
    %v662 = vpop.f32.mrb[0].mxu0
    %663 = vmatprep.mubr.f32.mxu0 0.0
    %664 = vmatmul.mubr.f32.gmra.mrb[0].mxu0 %v303
    %v665 = vpop.f32.mrb[0].mxu0
    %v666 = vadd.f32 %v125, %v665
    %v667 = vpop.f32.mrb[0].mxu0
    %668 = vmatprep.mubr.f32.mxu0 0.0
    %669 = vmatmul.mubr.f32.gmra.mrb[0].mxu0 %v306
    %v670 = vpop.f32.mrb[0].mxu0
    %v671 = vadd.f32 %v130, %v670
    %v672 = vpop.f32.mrb[0].mxu0
    %673 = vmatprep.mubr.f32.mxu0 0.0
    %674 = vmatmul.mubr.f32.gmra.mrb[0].mxu0 %v309
    %v675 = vpop.f32.mrb[0].mxu0
    %v676 = vadd.f32 %v135, %v675
    %v677 = vpop.f32.mrb[0].mxu0
    %678 = vmatprep.mubr.f32.mxu0 0.0
    %679 = vmatmul.mubr.f32.gmra.mrb[0].mxu0 %v312
    %v680 = vpop.f32.mrb[0].mxu0
    %v681 = vadd.f32 %v140, %v680
    %v682 = vpop.f32.mrb[0].mxu0
    %683 = vmatprep.mubr.f32.mxu0 0.0
    %684 = vmatmul.mubr.f32.gmra.mrb[0].mxu0 %v315
    %v685 = vpop.f32.mrb[0].mxu0
    %v686 = vadd.f32 %v145, %v685
    %v687 = vpop.f32.mrb[0].mxu0
    %688 = vmatprep.mubr.f32.mxu0 0.0
    %689 = vmatmul.mubr.f32.gmra.mrb[0].mxu0 %v318
    %v690 = vpop.f32.mrb[0].mxu0
    %v691 = vadd.f32 %v150, %v690
    %v692 = vpop.f32.mrb[0].mxu0
    %693 = vmatprep.mubr.f32.mxu0 0.0
    %694 = vmatmul.mubr.f32.gmra.mrb[0].mxu0 %v321
    %v695 = vpop.f32.mrb[0].mxu0
    %v696 = vadd.f32 %v155, %v695
    %v697 = vpop.f32.mrb[0].mxu0
    %698 = vmatprep.mubr.f32.mxu0 0.0
    %699 = vmatmul.mubr.f32.gmra.mrb[0].mxu0 %v324
    %v700 = vpop.f32.mrb[0].mxu0
    %v701 = vadd.f32 %v160, %v700
    %v702 = vpop.f32.mrb[0].mxu0
    %703 = vmatprep.mubr.f32.mxu0 0.0
    %704 = vmatmul.mubr.f32.gmra.mrb[0].mxu0 %v327
    %v705 = vpop.f32.mrb[0].mxu0
    %v706 = vadd.f32 %v165, %v705
    %v707 = vpop.f32.mrb[0].mxu0
    %708 = vmatprep.mubr.f32.mxu0 0.0
    %709 = vmatmul.mubr.f32.gmra.mrb[0].mxu0 %v330
    %v710 = vpop.f32.mrb[0].mxu0
    %v711 = vadd.f32 %v170, %v710
    %v712 = vpop.f32.mrb[0].mxu0
    %713 = vmatprep.mubr.f32.mxu0 0.0
    %714 = vmatmul.mubr.f32.gmra.mrb[0].mxu0 %v333
    %v715 = vpop.f32.mrb[0].mxu0
    %v716 = vadd.f32 %v175, %v715
    %v717 = vpop.f32.mrb[0].mxu0
    %718 = vmatprep.mubr.f32.mxu0 0.0
    %719 = vmatmul.mubr.f32.gmra.mrb[0].mxu0 %v336
    %v720 = vpop.f32.mrb[0].mxu0
    %v721 = vadd.f32 %v180, %v720
    %v722 = vpop.f32.mrb[0].mxu0
    %723 = vmatprep.mubr.f32.mxu0 0.0
    %724 = vmatmul.mubr.f32.gmra.mrb[0].mxu0 %v339
    %v725 = vpop.f32.mrb[0].mxu0
    %v726 = vadd.f32 %v185, %v725
    %v727 = vpop.f32.mrb[0].mxu0
    %728 = vmatprep.mubr.f32.mxu0 0.0
    %729 = vmatmul.mubr.f32.gmra.mrb[0].mxu0 %v342
    %v730 = vpop.f32.mrb[0].mxu0
    %v731 = vadd.f32 %v190, %v730
    %v732 = vpop.f32.mrb[0].mxu0
    %733 = vmatprep.mubr.f32.mxu0 0.0
    %734 = vmatmul.mubr.f32.gmra.mrb[0].mxu0 %v345
    %v735 = vpop.f32.mrb[0].mxu0
    %v736 = vadd.f32 %v195, %v735
    %v737 = vpop.f32.mrb[0].mxu0
    %738 = vmatprep.mubr.f32.mxu0 0.0
    %739 = vmatmul.mubr.f32.gmra.mrb[0].mxu0 %v348
    %v740 = vpop.f32.mrb[0].mxu0
    %v741 = vadd.f32 %v200, %v740
    %v742 = vpop.f32.mrb[0].mxu0
    %743 = vmatprep.mubr.f32.mxu0 0.0
    %744 = vmatmul.mubr.f32.gmra.mrb[0].mxu0 %v351
    %v745 = vpop.f32.mrb[0].mxu0
    %v746 = vadd.f32 %v205, %v745
    %v747 = vpop.f32.mrb[0].mxu0
    %748 = vmatprep.mubr.f32.mxu0 0.0
    %749 = vmatmul.mubr.f32.gmra.mrb[0].mxu0 %v354
    %v750 = vpop.f32.mrb[0].mxu0
    %v751 = vadd.f32 %v210, %v750
    %v752 = vpop.f32.mrb[0].mxu0
    %753 = vmatprep.mubr.f32.mxu0 0.0
    %754 = vmatmul.mubr.f32.gmra.mrb[0].mxu0 %v357
    %v755 = vpop.f32.mrb[0].mxu0
    %v756 = vadd.f32 %v215, %v755
    %v757 = vpop.f32.mrb[0].mxu0
    %758 = vdwg.mxu0
    %s759 = scalar_lea.vmem [#allocation2], 192
    %760 = vst [vmem:[%s759] sm:$0xff] %v641
    %761 = vst [vmem:[%s759 + $0x8] sm:$0xff] %v646
    %762 = vst [vmem:[%s759 + $0x10] sm:$0xff] %v651
    %763 = vst [vmem:[%s759 + $0x18] sm:$0xff] %v656
    %764 = vst [vmem:[%s759 + $0x40] sm:$0xff] %v681
    %765 = vst [vmem:[%s759 + $0x48] sm:$0xff] %v686
    %766 = vst [vmem:[%s759 + $0x50] sm:$0xff] %v691
    %767 = vst [vmem:[%s759 + $0x58] sm:$0xff] %v696
    %768 = vst [vmem:[%s759 + $0x80] sm:$0xff] %v721
    %769 = vst [vmem:[%s759 + $0x88] sm:$0xff] %v726
    %770 = vst [vmem:[%s759 + $0x90] sm:$0xff] %v731
    %771 = vst [vmem:[%s759 + $0x98] sm:$0xff] %v736
    %s772 = scalar_lea.vmem [#allocation2], 768
    %773 = vst [vmem:[%s772 + $0x20] sm:$0xff] %v661
    %774 = vst [vmem:[%s772 + $0x28] sm:$0xff] %v666
    %775 = vst [vmem:[%s772 + $0x30] sm:$0xff] %v671
    %776 = vst [vmem:[%s772 + $0x38] sm:$0xff] %v676
    %777 = vst [vmem:[%s772 + $0x60] sm:$0xff] %v701
    %778 = vst [vmem:[%s772 + $0x68] sm:$0xff] %v706
    %779 = vst [vmem:[%s772 + $0x70] sm:$0xff] %v711
    %780 = vst [vmem:[%s772 + $0x78] sm:$0xff] %v716
    %781 = vst [vmem:[%s772 + $0xa0] sm:$0xff] %v741
    %782 = vst [vmem:[%s772 + $0xa8] sm:$0xff] %v746
    %783 = vst [vmem:[%s772 + $0xb0] sm:$0xff] %v751
    %784 = vst [vmem:[%s772 + $0xb8] sm:$0xff] %v756
    %s785 = scalar_lea.vmem %s1, 64
    %v786 = vld [vmem:[%s785] sm:$0xff]
    %v787 = vld [vmem:[%s785 + $0x8] sm:$0xff]
    %v788 = vld [vmem:[%s785 + $0x10] sm:$0xff]
    %v789 = vld [vmem:[%s785 + $0x18] sm:$0xff]
    %790 = vmatprep.subr.mxu0 0.0
    %791 = vmatpush1.msra.mxu0 %v786
    %792 = vmatprep.subr.mxu0 0.0
    %793 = vmatpush1.msra.mxu0 %v787
    %794 = vmatprep.subr.mxu0 0.0
    %795 = vmatpush1.msra.mxu0 %v788
    %796 = vmatprep.subr.mxu0 0.0
    %797 = vmatpush1.msra.mxu0 %v789
    %798 = vmatprep.subr.mxu0 0.0
    %799 = vmatpush1.msra.mxu0 0.0
    %800 = vmatprep.subr.mxu0 0.0
    %801 = vmatpush1.msra.mxu0 0.0
    %802 = vmatprep.subr.mxu0 0.0
    %803 = vmatpush1.msra.mxu0 0.0
    %804 = vmatprep.subr.mxu0 0.0
    %805 = vmatpush1.msra.mxu0 0.0
    %806 = vmatprep.subr.mxu0 0.0
    %807 = vmatpush1.msra.mxu0 0.0
    %808 = vmatprep.subr.mxu0 0.0
    %809 = vmatpush1.msra.mxu0 0.0
    %810 = vmatprep.subr.mxu0 0.0
    %811 = vmatpush1.msra.mxu0 0.0
    %812 = vmatprep.subr.mxu0 0.0
    %813 = vmatpush1.msra.mxu0 0.0
    %814 = vmatprep.subr.mxu0 0.0
    %815 = vmatpush1.msra.mxu0 0.0
    %816 = vmatprep.subr.mxu0 0.0
    %817 = vmatpush1.msra.mxu0 0.0
    %818 = vmatprep.subr.mxu0 0.0
    %819 = vmatpush1.msra.mxu0 0.0
    %820 = vmatprep.subr.mxu0 0.0
    %821 = vmatpush1.msra.mxu0 0.0
    %822 = vmatprep.subr.mxu0 0.0
    %823 = vmatpush1.msra.mxu0 0.0
    %824 = vmatprep.subr.mxu0 0.0
    %825 = vmatpush1.msra.mxu0 0.0
    %826 = vmatprep.subr.mxu0 0.0
    %827 = vmatpush1.msra.mxu0 0.0
    %828 = vmatprep.subr.mxu0 0.0
    %829 = vmatpush1.msra.mxu0 0.0
    %830 = vmatprep.subr.mxu0 0.0
    %831 = vmatpush1.msra.mxu0 0.0
    %832 = vmatprep.subr.mxu0 0.0
    %833 = vmatpush1.msra.mxu0 0.0
    %834 = vmatprep.subr.mxu0 0.0
    %835 = vmatpush1.msra.mxu0 0.0
    %836 = vmatprep.subr.mxu0 0.0
    %837 = vmatpush1.msra.mxu0 0.0
    %838 = vmatprep.subr.mxu0 0.0
    %839 = vmatpush1.msra.mxu0 0.0
    %840 = vmatprep.subr.mxu0 0.0
    %841 = vmatpush1.msra.mxu0 0.0
    %842 = vmatprep.subr.mxu0 0.0
    %843 = vmatpush1.msra.mxu0 0.0
    %844 = vmatprep.subr.mxu0 0.0
    %845 = vmatpush1.msra.mxu0 0.0
    %846 = vmatprep.subr.mxu0 0.0
    %847 = vmatpush1.msra.mxu0 0.0
    %848 = vmatprep.subr.mxu0 0.0
    %849 = vmatpush1.msra.mxu0 0.0
    %850 = vmatprep.subr.mxu0 0.0
    %851 = vmatpush1.msra.mxu0 0.0
    %852 = vmatprep.subr.mxu0 0.0
    %853 = vmatpush1.msra.mxu0 0.0
    %854 = vmatprep.mubr.f32.mxu0 0.0
    %855 = vmatmul.mubr.f32.gmra.mrb[0].mxu0 %v288
    %v856 = vpop.f32.mrb[0].mxu0
    %v857 = vadd.f32 %v100, %v856
    %v858 = vpop.f32.mrb[0].mxu0
    %859 = vmatprep.mubr.f32.mxu0 0.0
    %860 = vmatmul.mubr.f32.gmra.mrb[0].mxu0 %v291
    %v861 = vpop.f32.mrb[0].mxu0
    %v862 = vadd.f32 %v105, %v861
    %v863 = vpop.f32.mrb[0].mxu0
    %864 = vmatprep.mubr.f32.mxu0 0.0
    %865 = vmatmul.mubr.f32.gmra.mrb[0].mxu0 %v294
    %v866 = vpop.f32.mrb[0].mxu0
    %v867 = vadd.f32 %v110, %v866
    %v868 = vpop.f32.mrb[0].mxu0
    %869 = vmatprep.mubr.f32.mxu0 0.0
    %870 = vmatmul.mubr.f32.gmra.mrb[0].mxu0 %v297
    %v871 = vpop.f32.mrb[0].mxu0
    %v872 = vadd.f32 %v115, %v871
    %v873 = vpop.f32.mrb[0].mxu0
    %874 = vmatprep.mubr.f32.mxu0 0.0
    %875 = vmatmul.mubr.f32.gmra.mrb[0].mxu0 %v300
    %v876 = vpop.f32.mrb[0].mxu0
    %v877 = vadd.f32 %v120, %v876
    %v878 = vpop.f32.mrb[0].mxu0
    %879 = vmatprep.mubr.f32.mxu0 0.0
    %880 = vmatmul.mubr.f32.gmra.mrb[0].mxu0 %v303
    %v881 = vpop.f32.mrb[0].mxu0
    %v882 = vadd.f32 %v125, %v881
    %v883 = vpop.f32.mrb[0].mxu0
    %884 = vmatprep.mubr.f32.mxu0 0.0
    %885 = vmatmul.mubr.f32.gmra.mrb[0].mxu0 %v306
    %v886 = vpop.f32.mrb[0].mxu0
    %v887 = vadd.f32 %v130, %v886
    %v888 = vpop.f32.mrb[0].mxu0
    %889 = vmatprep.mubr.f32.mxu0 0.0
    %890 = vmatmul.mubr.f32.gmra.mrb[0].mxu0 %v309
    %v891 = vpop.f32.mrb[0].mxu0
    %v892 = vadd.f32 %v135, %v891
    %v893 = vpop.f32.mrb[0].mxu0
    %894 = vmatprep.mubr.f32.mxu0 0.0
    %895 = vmatmul.mubr.f32.gmra.mrb[0].mxu0 %v312
    %v896 = vpop.f32.mrb[0].mxu0
    %v897 = vadd.f32 %v140, %v896
    %v898 = vpop.f32.mrb[0].mxu0
    %899 = vmatprep.mubr.f32.mxu0 0.0
    %900 = vmatmul.mubr.f32.gmra.mrb[0].mxu0 %v315
    %v901 = vpop.f32.mrb[0].mxu0
    %v902 = vadd.f32 %v145, %v901
    %v903 = vpop.f32.mrb[0].mxu0
    %904 = vmatprep.mubr.f32.mxu0 0.0
    %905 = vmatmul.mubr.f32.gmra.mrb[0].mxu0 %v318
    %v906 = vpop.f32.mrb[0].mxu0
    %v907 = vadd.f32 %v150, %v906
    %v908 = vpop.f32.mrb[0].mxu0
    %909 = vmatprep.mubr.f32.mxu0 0.0
    %910 = vmatmul.mubr.f32.gmra.mrb[0].mxu0 %v321
    %v911 = vpop.f32.mrb[0].mxu0
    %v912 = vadd.f32 %v155, %v911
    %v913 = vpop.f32.mrb[0].mxu0
    %914 = vmatprep.mubr.f32.mxu0 0.0
    %915 = vmatmul.mubr.f32.gmra.mrb[0].mxu0 %v324
    %v916 = vpop.f32.mrb[0].mxu0
    %v917 = vadd.f32 %v160, %v916
    %v918 = vpop.f32.mrb[0].mxu0
    %919 = vmatprep.mubr.f32.mxu0 0.0
    %920 = vmatmul.mubr.f32.gmra.mrb[0].mxu0 %v327
    %v921 = vpop.f32.mrb[0].mxu0
    %v922 = vadd.f32 %v165, %v921
    %v923 = vpop.f32.mrb[0].mxu0
    %924 = vmatprep.mubr.f32.mxu0 0.0
    %925 = vmatmul.mubr.f32.gmra.mrb[0].mxu0 %v330
    %v926 = vpop.f32.mrb[0].mxu0
    %v927 = vadd.f32 %v170, %v926
    %v928 = vpop.f32.mrb[0].mxu0
    %929 = vmatprep.mubr.f32.mxu0 0.0
    %930 = vmatmul.mubr.f32.gmra.mrb[0].mxu0 %v333
    %v931 = vpop.f32.mrb[0].mxu0
    %v932 = vadd.f32 %v175, %v931
    %v933 = vpop.f32.mrb[0].mxu0
    %934 = vmatprep.mubr.f32.mxu0 0.0
    %935 = vmatmul.mubr.f32.gmra.mrb[0].mxu0 %v336
    %v936 = vpop.f32.mrb[0].mxu0
    %v937 = vadd.f32 %v180, %v936
    %v938 = vpop.f32.mrb[0].mxu0
    %939 = vmatprep.mubr.f32.mxu0 0.0
    %940 = vmatmul.mubr.f32.gmra.mrb[0].mxu0 %v339
    %v941 = vpop.f32.mrb[0].mxu0
    %v942 = vadd.f32 %v185, %v941
    %v943 = vpop.f32.mrb[0].mxu0
    %944 = vmatprep.mubr.f32.mxu0 0.0
    %945 = vmatmul.mubr.f32.gmra.mrb[0].mxu0 %v342
    %v946 = vpop.f32.mrb[0].mxu0
    %v947 = vadd.f32 %v190, %v946
    %v948 = vpop.f32.mrb[0].mxu0
    %949 = vmatprep.mubr.f32.mxu0 0.0
    %950 = vmatmul.mubr.f32.gmra.mrb[0].mxu0 %v345
    %v951 = vpop.f32.mrb[0].mxu0
    %v952 = vadd.f32 %v195, %v951
    %v953 = vpop.f32.mrb[0].mxu0
    %954 = vmatprep.mubr.f32.mxu0 0.0
    %955 = vmatmul.mubr.f32.gmra.mrb[0].mxu0 %v348
    %v956 = vpop.f32.mrb[0].mxu0
    %v957 = vadd.f32 %v200, %v956
    %v958 = vpop.f32.mrb[0].mxu0
    %959 = vmatprep.mubr.f32.mxu0 0.0
    %960 = vmatmul.mubr.f32.gmra.mrb[0].mxu0 %v351
    %v961 = vpop.f32.mrb[0].mxu0
    %v962 = vadd.f32 %v205, %v961
    %v963 = vpop.f32.mrb[0].mxu0
    %964 = vmatprep.mubr.f32.mxu0 0.0
    %965 = vmatmul.mubr.f32.gmra.mrb[0].mxu0 %v354
    %v966 = vpop.f32.mrb[0].mxu0
    %v967 = vadd.f32 %v210, %v966
    %v968 = vpop.f32.mrb[0].mxu0
    %969 = vmatprep.mubr.f32.mxu0 0.0
    %970 = vmatmul.mubr.f32.gmra.mrb[0].mxu0 %v357
    %v971 = vpop.f32.mrb[0].mxu0
    %v972 = vadd.f32 %v215, %v971
    %v973 = vpop.f32.mrb[0].mxu0
    %974 = vdwg.mxu0
    %s975 = scalar_lea.vmem [#allocation2], 384
    %976 = vst [vmem:[%s975] sm:$0xff] %v857
    %977 = vst [vmem:[%s975 + $0x8] sm:$0xff] %v862
    %978 = vst [vmem:[%s975 + $0x10] sm:$0xff] %v867
    %979 = vst [vmem:[%s975 + $0x18] sm:$0xff] %v872
    %980 = vst [vmem:[%s975 + $0x40] sm:$0xff] %v897
    %981 = vst [vmem:[%s975 + $0x48] sm:$0xff] %v902
    %982 = vst [vmem:[%s975 + $0x50] sm:$0xff] %v907
    %983 = vst [vmem:[%s975 + $0x58] sm:$0xff] %v912
    %984 = vst [vmem:[%s975 + $0x80] sm:$0xff] %v937
    %985 = vst [vmem:[%s975 + $0x88] sm:$0xff] %v942
    %986 = vst [vmem:[%s975 + $0x90] sm:$0xff] %v947
    %987 = vst [vmem:[%s975 + $0x98] sm:$0xff] %v952
    %s988 = scalar_lea.vmem [#allocation2], 576
    %989 = vst [vmem:[%s988 + $0x20] sm:$0xff] %v877
    %990 = vst [vmem:[%s988 + $0x28] sm:$0xff] %v882
    %991 = vst [vmem:[%s988 + $0x30] sm:$0xff] %v887
    %992 = vst [vmem:[%s988 + $0x38] sm:$0xff] %v892
    %993 = vst [vmem:[%s988 + $0x60] sm:$0xff] %v917
    %994 = vst [vmem:[%s988 + $0x68] sm:$0xff] %v922
    %995 = vst [vmem:[%s988 + $0x70] sm:$0xff] %v927
    %996 = vst [vmem:[%s988 + $0x78] sm:$0xff] %v932
    %997 = vst [vmem:[%s988 + $0xa0] sm:$0xff] %v957
    %998 = vst [vmem:[%s988 + $0xa8] sm:$0xff] %v962
    %999 = vst [vmem:[%s988 + $0xb0] sm:$0xff] %v967
    %1000 = vst [vmem:[%s988 + $0xb8] sm:$0xff] %v972
    %s1001 = scalar_lea.vmem %s1, 96
    %v1002 = vld [vmem:[%s1001] sm:$0xff]
    %v1003 = vld [vmem:[%s1001 + $0x8] sm:$0xff]
    %v1004 = vld [vmem:[%s1001 + $0x10] sm:$0xff]
    %v1005 = vld [vmem:[%s1001 + $0x18] sm:$0xff]
    %1006 = vmatprep.subr.mxu0 0.0
    %1007 = vmatpush1.msra.mxu0 %v1002
    %1008 = vmatprep.subr.mxu0 0.0
    %1009 = vmatpush1.msra.mxu0 %v1003
    %1010 = vmatprep.subr.mxu0 0.0
    %1011 = vmatpush1.msra.mxu0 %v1004
    %1012 = vmatprep.subr.mxu0 0.0
    %1013 = vmatpush1.msra.mxu0 %v1005
    %1014 = vmatprep.subr.mxu0 0.0
    %1015 = vmatpush1.msra.mxu0 0.0
    %1016 = vmatprep.subr.mxu0 0.0
    %1017 = vmatpush1.msra.mxu0 0.0
    %1018 = vmatprep.subr.mxu0 0.0
    %1019 = vmatpush1.msra.mxu0 0.0
    %1020 = vmatprep.subr.mxu0 0.0
    %1021 = vmatpush1.msra.mxu0 0.0
    %1022 = vmatprep.subr.mxu0 0.0
    %1023 = vmatpush1.msra.mxu0 0.0
    %1024 = vmatprep.subr.mxu0 0.0
    %1025 = vmatpush1.msra.mxu0 0.0
    %1026 = vmatprep.subr.mxu0 0.0
    %1027 = vmatpush1.msra.mxu0 0.0
    %1028 = vmatprep.subr.mxu0 0.0
    %1029 = vmatpush1.msra.mxu0 0.0
    %1030 = vmatprep.subr.mxu0 0.0
    %1031 = vmatpush1.msra.mxu0 0.0
    %1032 = vmatprep.subr.mxu0 0.0
    %1033 = vmatpush1.msra.mxu0 0.0
    %1034 = vmatprep.subr.mxu0 0.0
    %1035 = vmatpush1.msra.mxu0 0.0
    %1036 = vmatprep.subr.mxu0 0.0
    %1037 = vmatpush1.msra.mxu0 0.0
    %1038 = vmatprep.subr.mxu0 0.0
    %1039 = vmatpush1.msra.mxu0 0.0
    %1040 = vmatprep.subr.mxu0 0.0
    %1041 = vmatpush1.msra.mxu0 0.0
    %1042 = vmatprep.subr.mxu0 0.0
    %1043 = vmatpush1.msra.mxu0 0.0
    %1044 = vmatprep.subr.mxu0 0.0
    %1045 = vmatpush1.msra.mxu0 0.0
    %1046 = vmatprep.subr.mxu0 0.0
    %1047 = vmatpush1.msra.mxu0 0.0
    %1048 = vmatprep.subr.mxu0 0.0
    %1049 = vmatpush1.msra.mxu0 0.0
    %1050 = vmatprep.subr.mxu0 0.0
    %1051 = vmatpush1.msra.mxu0 0.0
    %1052 = vmatprep.subr.mxu0 0.0
    %1053 = vmatpush1.msra.mxu0 0.0
    %1054 = vmatprep.subr.mxu0 0.0
    %1055 = vmatpush1.msra.mxu0 0.0
    %1056 = vmatprep.subr.mxu0 0.0
    %1057 = vmatpush1.msra.mxu0 0.0
    %1058 = vmatprep.subr.mxu0 0.0
    %1059 = vmatpush1.msra.mxu0 0.0
    %1060 = vmatprep.subr.mxu0 0.0
    %1061 = vmatpush1.msra.mxu0 0.0
    %1062 = vmatprep.subr.mxu0 0.0
    %1063 = vmatpush1.msra.mxu0 0.0
    %1064 = vmatprep.subr.mxu0 0.0
    %1065 = vmatpush1.msra.mxu0 0.0
    %1066 = vmatprep.subr.mxu0 0.0
    %1067 = vmatpush1.msra.mxu0 0.0
    %1068 = vmatprep.subr.mxu0 0.0
    %1069 = vmatpush1.msra.mxu0 0.0
    %1070 = vmatprep.mubr.f32.mxu0 0.0
    %1071 = vmatmul.mubr.f32.gmra.mrb[0].mxu0 %v288
    %v1072 = vpop.f32.mrb[0].mxu0
    %v1073 = vadd.f32 %v100, %v1072
    %v1074 = vpop.f32.mrb[0].mxu0
    %1075 = vmatprep.mubr.f32.mxu0 0.0
    %1076 = vmatmul.mubr.f32.gmra.mrb[0].mxu0 %v291
    %v1077 = vpop.f32.mrb[0].mxu0
    %v1078 = vadd.f32 %v105, %v1077
    %v1079 = vpop.f32.mrb[0].mxu0
    %1080 = vmatprep.mubr.f32.mxu0 0.0
    %1081 = vmatmul.mubr.f32.gmra.mrb[0].mxu0 %v294
    %v1082 = vpop.f32.mrb[0].mxu0
    %v1083 = vadd.f32 %v110, %v1082
    %v1084 = vpop.f32.mrb[0].mxu0
    %1085 = vmatprep.mubr.f32.mxu0 0.0
    %1086 = vmatmul.mubr.f32.gmra.mrb[0].mxu0 %v297
    %v1087 = vpop.f32.mrb[0].mxu0
    %v1088 = vadd.f32 %v115, %v1087
    %v1089 = vpop.f32.mrb[0].mxu0
    %1090 = vmatprep.mubr.f32.mxu0 0.0
    %1091 = vmatmul.mubr.f32.gmra.mrb[0].mxu0 %v300
    %v1092 = vpop.f32.mrb[0].mxu0
    %v1093 = vadd.f32 %v120, %v1092
    %v1094 = vpop.f32.mrb[0].mxu0
    %1095 = vmatprep.mubr.f32.mxu0 0.0
    %1096 = vmatmul.mubr.f32.gmra.mrb[0].mxu0 %v303
    %v1097 = vpop.f32.mrb[0].mxu0
    %v1098 = vadd.f32 %v125, %v1097
    %v1099 = vpop.f32.mrb[0].mxu0
    %1100 = vmatprep.mubr.f32.mxu0 0.0
    %1101 = vmatmul.mubr.f32.gmra.mrb[0].mxu0 %v306
    %v1102 = vpop.f32.mrb[0].mxu0
    %v1103 = vadd.f32 %v130, %v1102
    %v1104 = vpop.f32.mrb[0].mxu0
    %1105 = vmatprep.mubr.f32.mxu0 0.0
    %1106 = vmatmul.mubr.f32.gmra.mrb[0].mxu0 %v309
    %v1107 = vpop.f32.mrb[0].mxu0
    %v1108 = vadd.f32 %v135, %v1107
    %v1109 = vpop.f32.mrb[0].mxu0
    %1110 = vmatprep.mubr.f32.mxu0 0.0
    %1111 = vmatmul.mubr.f32.gmra.mrb[0].mxu0 %v312
    %v1112 = vpop.f32.mrb[0].mxu0
    %v1113 = vadd.f32 %v140, %v1112
    %v1114 = vpop.f32.mrb[0].mxu0
    %1115 = vmatprep.mubr.f32.mxu0 0.0
    %1116 = vmatmul.mubr.f32.gmra.mrb[0].mxu0 %v315
    %v1117 = vpop.f32.mrb[0].mxu0
    %v1118 = vadd.f32 %v145, %v1117
    %v1119 = vpop.f32.mrb[0].mxu0
    %1120 = vmatprep.mubr.f32.mxu0 0.0
    %1121 = vmatmul.mubr.f32.gmra.mrb[0].mxu0 %v318
    %v1122 = vpop.f32.mrb[0].mxu0
    %v1123 = vadd.f32 %v150, %v1122
    %v1124 = vpop.f32.mrb[0].mxu0
    %1125 = vmatprep.mubr.f32.mxu0 0.0
    %1126 = vmatmul.mubr.f32.gmra.mrb[0].mxu0 %v321
    %v1127 = vpop.f32.mrb[0].mxu0
    %v1128 = vadd.f32 %v155, %v1127
    %v1129 = vpop.f32.mrb[0].mxu0
    %1130 = vmatprep.mubr.f32.mxu0 0.0
    %1131 = vmatmul.mubr.f32.gmra.mrb[0].mxu0 %v324
    %v1132 = vpop.f32.mrb[0].mxu0
    %v1133 = vadd.f32 %v160, %v1132
    %v1134 = vpop.f32.mrb[0].mxu0
    %1135 = vmatprep.mubr.f32.mxu0 0.0
    %1136 = vmatmul.mubr.f32.gmra.mrb[0].mxu0 %v327
    %v1137 = vpop.f32.mrb[0].mxu0
    %v1138 = vadd.f32 %v165, %v1137
    %v1139 = vpop.f32.mrb[0].mxu0
    %1140 = vmatprep.mubr.f32.mxu0 0.0
    %1141 = vmatmul.mubr.f32.gmra.mrb[0].mxu0 %v330
    %v1142 = vpop.f32.mrb[0].mxu0
    %v1143 = vadd.f32 %v170, %v1142
    %v1144 = vpop.f32.mrb[0].mxu0
    %1145 = vmatprep.mubr.f32.mxu0 0.0
    %1146 = vmatmul.mubr.f32.gmra.mrb[0].mxu0 %v333
    %v1147 = vpop.f32.mrb[0].mxu0
    %v1148 = vadd.f32 %v175, %v1147
    %v1149 = vpop.f32.mrb[0].mxu0
    %1150 = vmatprep.mubr.f32.mxu0 0.0
    %1151 = vmatmul.mubr.f32.gmra.mrb[0].mxu0 %v336
    %v1152 = vpop.f32.mrb[0].mxu0
    %v1153 = vadd.f32 %v180, %v1152
    %v1154 = vpop.f32.mrb[0].mxu0
    %1155 = vmatprep.mubr.f32.mxu0 0.0
    %1156 = vmatmul.mubr.f32.gmra.mrb[0].mxu0 %v339
    %v1157 = vpop.f32.mrb[0].mxu0
    %v1158 = vadd.f32 %v185, %v1157
    %v1159 = vpop.f32.mrb[0].mxu0
    %1160 = vmatprep.mubr.f32.mxu0 0.0
    %1161 = vmatmul.mubr.f32.gmra.mrb[0].mxu0 %v342
    %v1162 = vpop.f32.mrb[0].mxu0
    %v1163 = vadd.f32 %v190, %v1162
    %v1164 = vpop.f32.mrb[0].mxu0
    %1165 = vmatprep.mubr.f32.mxu0 0.0
    %1166 = vmatmul.mubr.f32.gmra.mrb[0].mxu0 %v345
    %v1167 = vpop.f32.mrb[0].mxu0
    %v1168 = vadd.f32 %v195, %v1167
    %v1169 = vpop.f32.mrb[0].mxu0
    %1170 = vmatprep.mubr.f32.mxu0 0.0
    %1171 = vmatmul.mubr.f32.gmra.mrb[0].mxu0 %v348
    %v1172 = vpop.f32.mrb[0].mxu0
    %v1173 = vadd.f32 %v200, %v1172
    %v1174 = vpop.f32.mrb[0].mxu0
    %1175 = vmatprep.mubr.f32.mxu0 0.0
    %1176 = vmatmul.mubr.f32.gmra.mrb[0].mxu0 %v351
    %v1177 = vpop.f32.mrb[0].mxu0
    %v1178 = vadd.f32 %v205, %v1177
    %v1179 = vpop.f32.mrb[0].mxu0
    %1180 = vmatprep.mubr.f32.mxu0 0.0
    %1181 = vmatmul.mubr.f32.gmra.mrb[0].mxu0 %v354
    %v1182 = vpop.f32.mrb[0].mxu0
    %v1183 = vadd.f32 %v210, %v1182
    %v1184 = vpop.f32.mrb[0].mxu0
    %1185 = vmatprep.mubr.f32.mxu0 0.0
    %1186 = vmatmul.mubr.f32.gmra.mrb[0].mxu0 %v357
    %v1187 = vpop.f32.mrb[0].mxu0
    %v1188 = vadd.f32 %v215, %v1187
    %v1189 = vpop.f32.mrb[0].mxu0
    %1190 = vdwg.mxu0
    %1191 = vst [vmem:[%s988] sm:$0xff] %v1073
    %1192 = vst [vmem:[%s988 + $0x8] sm:$0xff] %v1078
    %1193 = vst [vmem:[%s988 + $0x10] sm:$0xff] %v1083
    %1194 = vst [vmem:[%s988 + $0x18] sm:$0xff] %v1088
    %1195 = vst [vmem:[%s988 + $0x40] sm:$0xff] %v1113
    %1196 = vst [vmem:[%s988 + $0x48] sm:$0xff] %v1118
    %1197 = vst [vmem:[%s988 + $0x50] sm:$0xff] %v1123
    %1198 = vst [vmem:[%s988 + $0x58] sm:$0xff] %v1128
    %1199 = vst [vmem:[%s988 + $0x80] sm:$0xff] %v1153
    %1200 = vst [vmem:[%s988 + $0x88] sm:$0xff] %v1158
    %1201 = vst [vmem:[%s988 + $0x90] sm:$0xff] %v1163
    %1202 = vst [vmem:[%s988 + $0x98] sm:$0xff] %v1168
    %1203 = vst [vmem:[%s975 + $0x20] sm:$0xff] %v1093
    %1204 = vst [vmem:[%s975 + $0x28] sm:$0xff] %v1098
    %1205 = vst [vmem:[%s975 + $0x30] sm:$0xff] %v1103
    %1206 = vst [vmem:[%s975 + $0x38] sm:$0xff] %v1108
    %1207 = vst [vmem:[%s975 + $0x60] sm:$0xff] %v1133
    %1208 = vst [vmem:[%s975 + $0x68] sm:$0xff] %v1138
    %1209 = vst [vmem:[%s975 + $0x70] sm:$0xff] %v1143
    %1210 = vst [vmem:[%s975 + $0x78] sm:$0xff] %v1148
    %1211 = vst [vmem:[%s975 + $0xa0] sm:$0xff] %v1173
    %1212 = vst [vmem:[%s975 + $0xa8] sm:$0xff] %v1178
    %1213 = vst [vmem:[%s975 + $0xb0] sm:$0xff] %v1183
    %1214 = vst [vmem:[%s975 + $0xb8] sm:$0xff] %v1188
    %s1215 = scalar_lea.vmem %s1, 128
    %v1216 = vld [vmem:[%s1215] sm:$0xff]
    %v1217 = vld [vmem:[%s1215 + $0x8] sm:$0xff]
    %v1218 = vld [vmem:[%s1215 + $0x10] sm:$0xff]
    %v1219 = vld [vmem:[%s1215 + $0x18] sm:$0xff]
    %1220 = vmatprep.subr.mxu0 0.0
    %1221 = vmatpush1.msra.mxu0 %v1216
    %1222 = vmatprep.subr.mxu0 0.0
    %1223 = vmatpush1.msra.mxu0 %v1217
    %1224 = vmatprep.subr.mxu0 0.0
    %1225 = vmatpush1.msra.mxu0 %v1218
    %1226 = vmatprep.subr.mxu0 0.0
    %1227 = vmatpush1.msra.mxu0 %v1219
    %1228 = vmatprep.subr.mxu0 0.0
    %1229 = vmatpush1.msra.mxu0 0.0
    %1230 = vmatprep.subr.mxu0 0.0
    %1231 = vmatpush1.msra.mxu0 0.0
    %1232 = vmatprep.subr.mxu0 0.0
    %1233 = vmatpush1.msra.mxu0 0.0
    %1234 = vmatprep.subr.mxu0 0.0
    %1235 = vmatpush1.msra.mxu0 0.0
    %1236 = vmatprep.subr.mxu0 0.0
    %1237 = vmatpush1.msra.mxu0 0.0
    %1238 = vmatprep.subr.mxu0 0.0
    %1239 = vmatpush1.msra.mxu0 0.0
    %1240 = vmatprep.subr.mxu0 0.0
    %1241 = vmatpush1.msra.mxu0 0.0
    %1242 = vmatprep.subr.mxu0 0.0
    %1243 = vmatpush1.msra.mxu0 0.0
    %1244 = vmatprep.subr.mxu0 0.0
    %1245 = vmatpush1.msra.mxu0 0.0
    %1246 = vmatprep.subr.mxu0 0.0
    %1247 = vmatpush1.msra.mxu0 0.0
    %1248 = vmatprep.subr.mxu0 0.0
    %1249 = vmatpush1.msra.mxu0 0.0
    %1250 = vmatprep.subr.mxu0 0.0
    %1251 = vmatpush1.msra.mxu0 0.0
    %1252 = vmatprep.subr.mxu0 0.0
    %1253 = vmatpush1.msra.mxu0 0.0
    %1254 = vmatprep.subr.mxu0 0.0
    %1255 = vmatpush1.msra.mxu0 0.0
    %1256 = vmatprep.subr.mxu0 0.0
    %1257 = vmatpush1.msra.mxu0 0.0
    %1258 = vmatprep.subr.mxu0 0.0
    %1259 = vmatpush1.msra.mxu0 0.0
    %1260 = vmatprep.subr.mxu0 0.0
    %1261 = vmatpush1.msra.mxu0 0.0
    %1262 = vmatprep.subr.mxu0 0.0
    %1263 = vmatpush1.msra.mxu0 0.0
    %1264 = vmatprep.subr.mxu0 0.0
    %1265 = vmatpush1.msra.mxu0 0.0
    %1266 = vmatprep.subr.mxu0 0.0
    %1267 = vmatpush1.msra.mxu0 0.0
    %1268 = vmatprep.subr.mxu0 0.0
    %1269 = vmatpush1.msra.mxu0 0.0
    %1270 = vmatprep.subr.mxu0 0.0
    %1271 = vmatpush1.msra.mxu0 0.0
    %1272 = vmatprep.subr.mxu0 0.0
    %1273 = vmatpush1.msra.mxu0 0.0
    %1274 = vmatprep.subr.mxu0 0.0
    %1275 = vmatpush1.msra.mxu0 0.0
    %1276 = vmatprep.subr.mxu0 0.0
    %1277 = vmatpush1.msra.mxu0 0.0
    %1278 = vmatprep.subr.mxu0 0.0
    %1279 = vmatpush1.msra.mxu0 0.0
    %1280 = vmatprep.subr.mxu0 0.0
    %1281 = vmatpush1.msra.mxu0 0.0
    %1282 = vmatprep.subr.mxu0 0.0
    %1283 = vmatpush1.msra.mxu0 0.0
    %1284 = vmatprep.mubr.f32.mxu0 0.0
    %1285 = vmatmul.mubr.f32.gmra.mrb[0].mxu0 %v288
    %v1286 = vpop.f32.mrb[0].mxu0
    %v1287 = vadd.f32 %v100, %v1286
    %v1288 = vpop.f32.mrb[0].mxu0
    %1289 = vmatprep.mubr.f32.mxu0 0.0
    %1290 = vmatmul.mubr.f32.gmra.mrb[0].mxu0 %v291
    %v1291 = vpop.f32.mrb[0].mxu0
    %v1292 = vadd.f32 %v105, %v1291
    %v1293 = vpop.f32.mrb[0].mxu0
    %1294 = vmatprep.mubr.f32.mxu0 0.0
    %1295 = vmatmul.mubr.f32.gmra.mrb[0].mxu0 %v294
    %v1296 = vpop.f32.mrb[0].mxu0
    %v1297 = vadd.f32 %v110, %v1296
    %v1298 = vpop.f32.mrb[0].mxu0
    %1299 = vmatprep.mubr.f32.mxu0 0.0
    %1300 = vmatmul.mubr.f32.gmra.mrb[0].mxu0 %v297
    %v1301 = vpop.f32.mrb[0].mxu0
    %v1302 = vadd.f32 %v115, %v1301
    %v1303 = vpop.f32.mrb[0].mxu0
    %1304 = vmatprep.mubr.f32.mxu0 0.0
    %1305 = vmatmul.mubr.f32.gmra.mrb[0].mxu0 %v300
    %v1306 = vpop.f32.mrb[0].mxu0
    %v1307 = vadd.f32 %v120, %v1306
    %v1308 = vpop.f32.mrb[0].mxu0
    %1309 = vmatprep.mubr.f32.mxu0 0.0
    %1310 = vmatmul.mubr.f32.gmra.mrb[0].mxu0 %v303
    %v1311 = vpop.f32.mrb[0].mxu0
    %v1312 = vadd.f32 %v125, %v1311
    %v1313 = vpop.f32.mrb[0].mxu0
    %1314 = vmatprep.mubr.f32.mxu0 0.0
    %1315 = vmatmul.mubr.f32.gmra.mrb[0].mxu0 %v306
    %v1316 = vpop.f32.mrb[0].mxu0
    %v1317 = vadd.f32 %v130, %v1316
    %v1318 = vpop.f32.mrb[0].mxu0
    %1319 = vmatprep.mubr.f32.mxu0 0.0
    %1320 = vmatmul.mubr.f32.gmra.mrb[0].mxu0 %v309
    %v1321 = vpop.f32.mrb[0].mxu0
    %v1322 = vadd.f32 %v135, %v1321
    %v1323 = vpop.f32.mrb[0].mxu0
    %1324 = vmatprep.mubr.f32.mxu0 0.0
    %1325 = vmatmul.mubr.f32.gmra.mrb[0].mxu0 %v312
    %v1326 = vpop.f32.mrb[0].mxu0
    %v1327 = vadd.f32 %v140, %v1326
    %v1328 = vpop.f32.mrb[0].mxu0
    %1329 = vmatprep.mubr.f32.mxu0 0.0
    %1330 = vmatmul.mubr.f32.gmra.mrb[0].mxu0 %v315
    %v1331 = vpop.f32.mrb[0].mxu0
    %v1332 = vadd.f32 %v145, %v1331
    %v1333 = vpop.f32.mrb[0].mxu0
    %1334 = vmatprep.mubr.f32.mxu0 0.0
    %1335 = vmatmul.mubr.f32.gmra.mrb[0].mxu0 %v318
    %v1336 = vpop.f32.mrb[0].mxu0
    %v1337 = vadd.f32 %v150, %v1336
    %v1338 = vpop.f32.mrb[0].mxu0
    %1339 = vmatprep.mubr.f32.mxu0 0.0
    %1340 = vmatmul.mubr.f32.gmra.mrb[0].mxu0 %v321
    %v1341 = vpop.f32.mrb[0].mxu0
    %v1342 = vadd.f32 %v155, %v1341
    %v1343 = vpop.f32.mrb[0].mxu0
    %1344 = vmatprep.mubr.f32.mxu0 0.0
    %1345 = vmatmul.mubr.f32.gmra.mrb[0].mxu0 %v324
    %v1346 = vpop.f32.mrb[0].mxu0
    %v1347 = vadd.f32 %v160, %v1346
    %v1348 = vpop.f32.mrb[0].mxu0
    %1349 = vmatprep.mubr.f32.mxu0 0.0
    %1350 = vmatmul.mubr.f32.gmra.mrb[0].mxu0 %v327
    %v1351 = vpop.f32.mrb[0].mxu0
    %v1352 = vadd.f32 %v165, %v1351
    %v1353 = vpop.f32.mrb[0].mxu0
    %1354 = vmatprep.mubr.f32.mxu0 0.0
    %1355 = vmatmul.mubr.f32.gmra.mrb[0].mxu0 %v330
    %v1356 = vpop.f32.mrb[0].mxu0
    %v1357 = vadd.f32 %v170, %v1356
    %v1358 = vpop.f32.mrb[0].mxu0
    %1359 = vmatprep.mubr.f32.mxu0 0.0
    %1360 = vmatmul.mubr.f32.gmra.mrb[0].mxu0 %v333
    %v1361 = vpop.f32.mrb[0].mxu0
    %v1362 = vadd.f32 %v175, %v1361
    %v1363 = vpop.f32.mrb[0].mxu0
    %1364 = vmatprep.mubr.f32.mxu0 0.0
    %1365 = vmatmul.mubr.f32.gmra.mrb[0].mxu0 %v336
    %v1366 = vpop.f32.mrb[0].mxu0
    %v1367 = vadd.f32 %v180, %v1366
    %v1368 = vpop.f32.mrb[0].mxu0
    %1369 = vmatprep.mubr.f32.mxu0 0.0
    %1370 = vmatmul.mubr.f32.gmra.mrb[0].mxu0 %v339
    %v1371 = vpop.f32.mrb[0].mxu0
    %v1372 = vadd.f32 %v185, %v1371
    %v1373 = vpop.f32.mrb[0].mxu0
    %1374 = vmatprep.mubr.f32.mxu0 0.0
    %1375 = vmatmul.mubr.f32.gmra.mrb[0].mxu0 %v342
    %v1376 = vpop.f32.mrb[0].mxu0
    %v1377 = vadd.f32 %v190, %v1376
    %v1378 = vpop.f32.mrb[0].mxu0
    %1379 = vmatprep.mubr.f32.mxu0 0.0
    %1380 = vmatmul.mubr.f32.gmra.mrb[0].mxu0 %v345
    %v1381 = vpop.f32.mrb[0].mxu0
    %v1382 = vadd.f32 %v195, %v1381
    %v1383 = vpop.f32.mrb[0].mxu0
    %1384 = vmatprep.mubr.f32.mxu0 0.0
    %1385 = vmatmul.mubr.f32.gmra.mrb[0].mxu0 %v348
    %v1386 = vpop.f32.mrb[0].mxu0
    %v1387 = vadd.f32 %v200, %v1386
    %v1388 = vpop.f32.mrb[0].mxu0
    %1389 = vmatprep.mubr.f32.mxu0 0.0
    %1390 = vmatmul.mubr.f32.gmra.mrb[0].mxu0 %v351
    %v1391 = vpop.f32.mrb[0].mxu0
    %v1392 = vadd.f32 %v205, %v1391
    %v1393 = vpop.f32.mrb[0].mxu0
    %1394 = vmatprep.mubr.f32.mxu0 0.0
    %1395 = vmatmul.mubr.f32.gmra.mrb[0].mxu0 %v354
    %v1396 = vpop.f32.mrb[0].mxu0
    %v1397 = vadd.f32 %v210, %v1396
    %v1398 = vpop.f32.mrb[0].mxu0
    %1399 = vmatprep.mubr.f32.mxu0 0.0
    %1400 = vmatmul.mubr.f32.gmra.mrb[0].mxu0 %v357
    %v1401 = vpop.f32.mrb[0].mxu0
    %v1402 = vadd.f32 %v215, %v1401
    %v1403 = vpop.f32.mrb[0].mxu0
    %1404 = vdwg.mxu0
    %1405 = vst [vmem:[%s772] sm:$0xff] %v1287
    %1406 = vst [vmem:[%s772 + $0x8] sm:$0xff] %v1292
    %1407 = vst [vmem:[%s772 + $0x10] sm:$0xff] %v1297
    %1408 = vst [vmem:[%s772 + $0x18] sm:$0xff] %v1302
    %1409 = vst [vmem:[%s772 + $0x40] sm:$0xff] %v1327
    %1410 = vst [vmem:[%s772 + $0x48] sm:$0xff] %v1332
    %1411 = vst [vmem:[%s772 + $0x50] sm:$0xff] %v1337
    %1412 = vst [vmem:[%s772 + $0x58] sm:$0xff] %v1342
    %1413 = vst [vmem:[%s772 + $0x80] sm:$0xff] %v1367
    %1414 = vst [vmem:[%s772 + $0x88] sm:$0xff] %v1372
    %1415 = vst [vmem:[%s772 + $0x90] sm:$0xff] %v1377
    %1416 = vst [vmem:[%s772 + $0x98] sm:$0xff] %v1382
    %1417 = vst [vmem:[%s759 + $0x20] sm:$0xff] %v1307
    %1418 = vst [vmem:[%s759 + $0x28] sm:$0xff] %v1312
    %1419 = vst [vmem:[%s759 + $0x30] sm:$0xff] %v1317
    %1420 = vst [vmem:[%s759 + $0x38] sm:$0xff] %v1322
    %1421 = vst [vmem:[%s759 + $0x60] sm:$0xff] %v1347
    %1422 = vst [vmem:[%s759 + $0x68] sm:$0xff] %v1352
    %1423 = vst [vmem:[%s759 + $0x70] sm:$0xff] %v1357
    %1424 = vst [vmem:[%s759 + $0x78] sm:$0xff] %v1362
    %1425 = vst [vmem:[%s759 + $0xa0] sm:$0xff] %v1387
    %1426 = vst [vmem:[%s759 + $0xa8] sm:$0xff] %v1392
    %1427 = vst [vmem:[%s759 + $0xb0] sm:$0xff] %v1397
    %1428 = vst [vmem:[%s759 + $0xb8] sm:$0xff] %v1402
    %s1429 = scalar_lea.vmem %s1, 160
    %v1430 = vld [vmem:[%s1429] sm:$0xff]
    %v1431 = vld [vmem:[%s1429 + $0x8] sm:$0xff]
    %v1432 = vld [vmem:[%s1429 + $0x10] sm:$0xff]
    %v1433 = vld [vmem:[%s1429 + $0x18] sm:$0xff]
    %1434 = vmatprep.subr.mxu0 0.0
    %1435 = vmatpush1.msra.mxu0 %v1430
    %1436 = vmatprep.subr.mxu0 0.0
    %1437 = vmatpush1.msra.mxu0 %v1431
    %1438 = vmatprep.subr.mxu0 0.0
    %1439 = vmatpush1.msra.mxu0 %v1432
    %1440 = vmatprep.subr.mxu0 0.0
    %1441 = vmatpush1.msra.mxu0 %v1433
    %1442 = vmatprep.subr.mxu0 0.0
    %1443 = vmatpush1.msra.mxu0 0.0
    %1444 = vmatprep.subr.mxu0 0.0
    %1445 = vmatpush1.msra.mxu0 0.0
    %1446 = vmatprep.subr.mxu0 0.0
    %1447 = vmatpush1.msra.mxu0 0.0
    %1448 = vmatprep.subr.mxu0 0.0
    %1449 = vmatpush1.msra.mxu0 0.0
    %1450 = vmatprep.subr.mxu0 0.0
    %1451 = vmatpush1.msra.mxu0 0.0
    %1452 = vmatprep.subr.mxu0 0.0
    %1453 = vmatpush1.msra.mxu0 0.0
    %1454 = vmatprep.subr.mxu0 0.0
    %1455 = vmatpush1.msra.mxu0 0.0
    %1456 = vmatprep.subr.mxu0 0.0
    %1457 = vmatpush1.msra.mxu0 0.0
    %1458 = vmatprep.subr.mxu0 0.0
    %1459 = vmatpush1.msra.mxu0 0.0
    %1460 = vmatprep.subr.mxu0 0.0
    %1461 = vmatpush1.msra.mxu0 0.0
    %1462 = vmatprep.subr.mxu0 0.0
    %1463 = vmatpush1.msra.mxu0 0.0
    %1464 = vmatprep.subr.mxu0 0.0
    %1465 = vmatpush1.msra.mxu0 0.0
    %1466 = vmatprep.subr.mxu0 0.0
    %1467 = vmatpush1.msra.mxu0 0.0
    %1468 = vmatprep.subr.mxu0 0.0
    %1469 = vmatpush1.msra.mxu0 0.0
    %1470 = vmatprep.subr.mxu0 0.0
    %1471 = vmatpush1.msra.mxu0 0.0
    %1472 = vmatprep.subr.mxu0 0.0
    %1473 = vmatpush1.msra.mxu0 0.0
    %1474 = vmatprep.subr.mxu0 0.0
    %1475 = vmatpush1.msra.mxu0 0.0
    %1476 = vmatprep.subr.mxu0 0.0
    %1477 = vmatpush1.msra.mxu0 0.0
    %1478 = vmatprep.subr.mxu0 0.0
    %1479 = vmatpush1.msra.mxu0 0.0
    %1480 = vmatprep.subr.mxu0 0.0
    %1481 = vmatpush1.msra.mxu0 0.0
    %1482 = vmatprep.subr.mxu0 0.0
    %1483 = vmatpush1.msra.mxu0 0.0
    %1484 = vmatprep.subr.mxu0 0.0
    %1485 = vmatpush1.msra.mxu0 0.0
    %1486 = vmatprep.subr.mxu0 0.0
    %1487 = vmatpush1.msra.mxu0 0.0
    %1488 = vmatprep.subr.mxu0 0.0
    %1489 = vmatpush1.msra.mxu0 0.0
    %1490 = vmatprep.subr.mxu0 0.0
    %1491 = vmatpush1.msra.mxu0 0.0
    %1492 = vmatprep.subr.mxu0 0.0
    %1493 = vmatpush1.msra.mxu0 0.0
    %1494 = vmatprep.subr.mxu0 0.0
    %1495 = vmatpush1.msra.mxu0 0.0
    %1496 = vmatprep.subr.mxu0 0.0
    %1497 = vmatpush1.msra.mxu0 0.0
    %1498 = vmatprep.mubr.f32.mxu0 0.0
    %1499 = vmatmul.mubr.f32.gmra.mrb[0].mxu0 %v288
    %v1500 = vpop.f32.mrb[0].mxu0
    %v1501 = vadd.f32 %v100, %v1500
    %v1502 = vpop.f32.mrb[0].mxu0
    %1503 = vmatprep.mubr.f32.mxu0 0.0
    %1504 = vmatmul.mubr.f32.gmra.mrb[0].mxu0 %v291
    %v1505 = vpop.f32.mrb[0].mxu0
    %v1506 = vadd.f32 %v105, %v1505
    %v1507 = vpop.f32.mrb[0].mxu0
    %1508 = vmatprep.mubr.f32.mxu0 0.0
    %1509 = vmatmul.mubr.f32.gmra.mrb[0].mxu0 %v294
    %v1510 = vpop.f32.mrb[0].mxu0
    %v1511 = vadd.f32 %v110, %v1510
    %v1512 = vpop.f32.mrb[0].mxu0
    %1513 = vmatprep.mubr.f32.mxu0 0.0
    %1514 = vmatmul.mubr.f32.gmra.mrb[0].mxu0 %v297
    %v1515 = vpop.f32.mrb[0].mxu0
    %v1516 = vadd.f32 %v115, %v1515
    %v1517 = vpop.f32.mrb[0].mxu0
    %1518 = vmatprep.mubr.f32.mxu0 0.0
    %1519 = vmatmul.mubr.f32.gmra.mrb[0].mxu0 %v300
    %v1520 = vpop.f32.mrb[0].mxu0
    %v1521 = vadd.f32 %v120, %v1520
    %v1522 = vpop.f32.mrb[0].mxu0
    %1523 = vmatprep.mubr.f32.mxu0 0.0
    %1524 = vmatmul.mubr.f32.gmra.mrb[0].mxu0 %v303
    %v1525 = vpop.f32.mrb[0].mxu0
    %v1526 = vadd.f32 %v125, %v1525
    %v1527 = vpop.f32.mrb[0].mxu0
    %1528 = vmatprep.mubr.f32.mxu0 0.0
    %1529 = vmatmul.mubr.f32.gmra.mrb[0].mxu0 %v306
    %v1530 = vpop.f32.mrb[0].mxu0
    %v1531 = vadd.f32 %v130, %v1530
    %v1532 = vpop.f32.mrb[0].mxu0
    %1533 = vmatprep.mubr.f32.mxu0 0.0
    %1534 = vmatmul.mubr.f32.gmra.mrb[0].mxu0 %v309
    %v1535 = vpop.f32.mrb[0].mxu0
    %v1536 = vadd.f32 %v135, %v1535
    %v1537 = vpop.f32.mrb[0].mxu0
    %1538 = vmatprep.mubr.f32.mxu0 0.0
    %1539 = vmatmul.mubr.f32.gmra.mrb[0].mxu0 %v312
    %v1540 = vpop.f32.mrb[0].mxu0
    %v1541 = vadd.f32 %v140, %v1540
    %v1542 = vpop.f32.mrb[0].mxu0
    %1543 = vmatprep.mubr.f32.mxu0 0.0
    %1544 = vmatmul.mubr.f32.gmra.mrb[0].mxu0 %v315
    %v1545 = vpop.f32.mrb[0].mxu0
    %v1546 = vadd.f32 %v145, %v1545
    %v1547 = vpop.f32.mrb[0].mxu0
    %1548 = vmatprep.mubr.f32.mxu0 0.0
    %1549 = vmatmul.mubr.f32.gmra.mrb[0].mxu0 %v318
    %v1550 = vpop.f32.mrb[0].mxu0
    %v1551 = vadd.f32 %v150, %v1550
    %v1552 = vpop.f32.mrb[0].mxu0
    %1553 = vmatprep.mubr.f32.mxu0 0.0
    %1554 = vmatmul.mubr.f32.gmra.mrb[0].mxu0 %v321
    %v1555 = vpop.f32.mrb[0].mxu0
    %v1556 = vadd.f32 %v155, %v1555
    %v1557 = vpop.f32.mrb[0].mxu0
    %1558 = vmatprep.mubr.f32.mxu0 0.0
    %1559 = vmatmul.mubr.f32.gmra.mrb[0].mxu0 %v324
    %v1560 = vpop.f32.mrb[0].mxu0
    %v1561 = vadd.f32 %v160, %v1560
    %v1562 = vpop.f32.mrb[0].mxu0
    %1563 = vmatprep.mubr.f32.mxu0 0.0
    %1564 = vmatmul.mubr.f32.gmra.mrb[0].mxu0 %v327
    %v1565 = vpop.f32.mrb[0].mxu0
    %v1566 = vadd.f32 %v165, %v1565
    %v1567 = vpop.f32.mrb[0].mxu0
    %1568 = vmatprep.mubr.f32.mxu0 0.0
    %1569 = vmatmul.mubr.f32.gmra.mrb[0].mxu0 %v330
    %v1570 = vpop.f32.mrb[0].mxu0
    %v1571 = vadd.f32 %v170, %v1570
    %v1572 = vpop.f32.mrb[0].mxu0
    %1573 = vmatprep.mubr.f32.mxu0 0.0
    %1574 = vmatmul.mubr.f32.gmra.mrb[0].mxu0 %v333
    %v1575 = vpop.f32.mrb[0].mxu0
    %v1576 = vadd.f32 %v175, %v1575
    %v1577 = vpop.f32.mrb[0].mxu0
    %1578 = vmatprep.mubr.f32.mxu0 0.0
    %1579 = vmatmul.mubr.f32.gmra.mrb[0].mxu0 %v336
    %v1580 = vpop.f32.mrb[0].mxu0
    %v1581 = vadd.f32 %v180, %v1580
    %v1582 = vpop.f32.mrb[0].mxu0
    %1583 = vmatprep.mubr.f32.mxu0 0.0
    %1584 = vmatmul.mubr.f32.gmra.mrb[0].mxu0 %v339
    %v1585 = vpop.f32.mrb[0].mxu0
    %v1586 = vadd.f32 %v185, %v1585
    %v1587 = vpop.f32.mrb[0].mxu0
    %1588 = vmatprep.mubr.f32.mxu0 0.0
    %1589 = vmatmul.mubr.f32.gmra.mrb[0].mxu0 %v342
    %v1590 = vpop.f32.mrb[0].mxu0
    %v1591 = vadd.f32 %v190, %v1590
    %v1592 = vpop.f32.mrb[0].mxu0
    %1593 = vmatprep.mubr.f32.mxu0 0.0
    %1594 = vmatmul.mubr.f32.gmra.mrb[0].mxu0 %v345
    %v1595 = vpop.f32.mrb[0].mxu0
    %v1596 = vadd.f32 %v195, %v1595
    %v1597 = vpop.f32.mrb[0].mxu0
    %1598 = vmatprep.mubr.f32.mxu0 0.0
    %1599 = vmatmul.mubr.f32.gmra.mrb[0].mxu0 %v348
    %v1600 = vpop.f32.mrb[0].mxu0
    %v1601 = vadd.f32 %v200, %v1600
    %v1602 = vpop.f32.mrb[0].mxu0
    %1603 = vmatprep.mubr.f32.mxu0 0.0
    %1604 = vmatmul.mubr.f32.gmra.mrb[0].mxu0 %v351
    %v1605 = vpop.f32.mrb[0].mxu0
    %v1606 = vadd.f32 %v205, %v1605
    %v1607 = vpop.f32.mrb[0].mxu0
    %1608 = vmatprep.mubr.f32.mxu0 0.0
    %1609 = vmatmul.mubr.f32.gmra.mrb[0].mxu0 %v354
    %v1610 = vpop.f32.mrb[0].mxu0
    %v1611 = vadd.f32 %v210, %v1610
    %v1612 = vpop.f32.mrb[0].mxu0
    %1613 = vmatprep.mubr.f32.mxu0 0.0
    %1614 = vmatmul.mubr.f32.gmra.mrb[0].mxu0 %v357
    %v1615 = vpop.f32.mrb[0].mxu0
    %v1616 = vadd.f32 %v215, %v1615
    %v1617 = vpop.f32.mrb[0].mxu0
    %1618 = vdwg.mxu0
    %1619 = vst [vmem:[%s556] sm:$0xff] %v1501
    %1620 = vst [vmem:[%s556 + $0x8] sm:$0xff] %v1506
    %1621 = vst [vmem:[%s556 + $0x10] sm:$0xff] %v1511
    %1622 = vst [vmem:[%s556 + $0x18] sm:$0xff] %v1516
    %1623 = vst [vmem:[%s556 + $0x40] sm:$0xff] %v1541
    %1624 = vst [vmem:[%s556 + $0x48] sm:$0xff] %v1546
    %1625 = vst [vmem:[%s556 + $0x50] sm:$0xff] %v1551
    %1626 = vst [vmem:[%s556 + $0x58] sm:$0xff] %v1556
    %1627 = vst [vmem:[%s556 + $0x80] sm:$0xff] %v1581
    %1628 = vst [vmem:[%s556 + $0x88] sm:$0xff] %v1586
    %1629 = vst [vmem:[%s556 + $0x90] sm:$0xff] %v1591
    %1630 = vst [vmem:[%s556 + $0x98] sm:$0xff] %v1596
    %1631 = vst [vmem:[#allocation2 + $0x20] sm:$0xff] %v1521
    %1632 = vst [vmem:[#allocation2 + $0x28] sm:$0xff] %v1526
    %1633 = vst [vmem:[#allocation2 + $0x30] sm:$0xff] %v1531
    %1634 = vst [vmem:[#allocation2 + $0x38] sm:$0xff] %v1536
    %1635 = vst [vmem:[#allocation2 + $0x60] sm:$0xff] %v1561
    %1636 = vst [vmem:[#allocation2 + $0x68] sm:$0xff] %v1566
    %1637 = vst [vmem:[#allocation2 + $0x70] sm:$0xff] %v1571
    %1638 = vst [vmem:[#allocation2 + $0x78] sm:$0xff] %v1576
    %1639 = vst [vmem:[#allocation2 + $0xa0] sm:$0xff] %v1601
    %1640 = vst [vmem:[#allocation2 + $0xa8] sm:$0xff] %v1606
    %1641 = vst [vmem:[#allocation2 + $0xb0] sm:$0xff] %v1611
    %1642 = vst [vmem:[#allocation2 + $0xb8] sm:$0xff] %v1616
    %v1643 = vld [vmem:[#allocation2] sm:$0xff]
    %v1644 = vld [vmem:[#allocation2 + $0x8] sm:$0xff]
    %v1645 = vld [vmem:[#allocation2 + $0x10] sm:$0xff]
    %v1646 = vld [vmem:[#allocation2 + $0x18] sm:$0xff]
    %v1647 = vld [vmem:[#allocation2 + $0x20] sm:$0xff]
    %v1648 = vld [vmem:[#allocation2 + $0x28] sm:$0xff]
    %v1649 = vld [vmem:[#allocation2 + $0x30] sm:$0xff]
    %v1650 = vld [vmem:[#allocation2 + $0x38] sm:$0xff]
    %v1651 = vld [vmem:[#allocation2 + $0x40] sm:$0xff]
    %v1652 = vld [vmem:[#allocation2 + $0x48] sm:$0xff]
    %v1653 = vld [vmem:[#allocation2 + $0x50] sm:$0xff]
    %v1654 = vld [vmem:[#allocation2 + $0x58] sm:$0xff]
    %v1655 = vld [vmem:[#allocation2 + $0x60] sm:$0xff]
    %v1656 = vld [vmem:[#allocation2 + $0x68] sm:$0xff]
    %v1657 = vld [vmem:[#allocation2 + $0x70] sm:$0xff]
    %v1658 = vld [vmem:[#allocation2 + $0x78] sm:$0xff]
    %v1659 = vld [vmem:[#allocation2 + $0x80] sm:$0xff]
    %v1660 = vld [vmem:[#allocation2 + $0x88] sm:$0xff]
    %v1661 = vld [vmem:[#allocation2 + $0x90] sm:$0xff]
    %v1662 = vld [vmem:[#allocation2 + $0x98] sm:$0xff]
    %v1663 = vld [vmem:[#allocation2 + $0xa0] sm:$0xff]
    %v1664 = vld [vmem:[#allocation2 + $0xa8] sm:$0xff]
    %v1665 = vld [vmem:[#allocation2 + $0xb0] sm:$0xff]
    %v1666 = vld [vmem:[#allocation2 + $0xb8] sm:$0xff]
    %vm1667 = vcmask 523264
    %v1669 = vsel %vm1667, %v49, 0
    %v1672 = vsel %vm1667, %v50, 0
    %v1675 = vsel %vm1667, %v51, 0
    %v1678 = vsel %vm1667, %v52, 0
    %v1681 = vsel %vm1667, %v53, 0
    %v1684 = vsel %vm1667, %v54, 0
    %v1687 = vsel %vm1667, %v55, 0
    %v1690 = vsel %vm1667, %v56, 0
    %v1693 = vsel %vm1667, %v57, 0
    %v1696 = vsel %vm1667, %v58, 0
    %v1699 = vsel %vm1667, %v59, 0
    %v1702 = vsel %vm1667, %v60, 0
    %v1705 = vsel %vm1667, %v61, 0
    %v1708 = vsel %vm1667, %v62, 0
    %v1711 = vsel %vm1667, %v63, 0
    %v1714 = vsel %vm1667, %v64, 0
    %v1717 = vsel %vm1667, %v65, 0
    %v1720 = vsel %vm1667, %v66, 0
    %v1723 = vsel %vm1667, %v67, 0
    %v1726 = vsel %vm1667, %v68, 0
    %v1729 = vsel %vm1667, %v69, 0
    %v1732 = vsel %vm1667, %v70, 0
    %v1735 = vsel %vm1667, %v71, 0
    %v1738 = vsel %vm1667, %v72, 0
    %1740 = vmatprep.subr.mxu0 0.0
    %1741 = vmatpush1.msra.mxu0 0.0
    %1742 = vmatprep.subr.mxu0 0.0
    %1743 = vmatpush1.msra.mxu0 0.0
    %1744 = vmatprep.subr.mxu0 0.0
    %1745 = vmatpush1.msra.mxu0 0.0
    %1746 = vmatprep.subr.mxu0 0.0
    %1747 = vmatpush1.msra.mxu0 0.0
    %1748 = vmatprep.subr.mxu0 0.0
    %1749 = vmatpush1.msra.mxu0 0.0
    %1750 = vmatprep.subr.mxu0 0.0
    %1751 = vmatpush1.msra.mxu0 0.0
    %1752 = vmatprep.subr.mxu0 0.0
    %1753 = vmatpush1.msra.mxu0 0.0
    %1754 = vmatprep.subr.mxu0 0.0
    %1755 = vmatpush1.msra.mxu0 0.0
    %1756 = vmatprep.subr.mxu0 0.0
    %1757 = vmatpush1.msra.mxu0 0.0
    %1758 = vmatprep.subr.mxu0 0.0
    %1759 = vmatpush1.msra.mxu0 0.0
    %1760 = vmatprep.subr.mxu0 0.0
    %1761 = vmatpush1.msra.mxu0 0.0
    %1762 = vmatprep.subr.mxu0 0.0
    %1763 = vmatpush1.msra.mxu0 0.0
    %1764 = vmatprep.subr.mxu0 0.0
    %1765 = vmatpush1.msra.mxu0 0.0
    %1766 = vmatprep.subr.mxu0 0.0
    %1767 = vmatpush1.msra.mxu0 0.0
    %1768 = vmatprep.subr.mxu0 0.0
    %1769 = vmatpush1.msra.mxu0 0.0
    %1770 = vmatprep.subr.mxu0 0.0
    %1771 = vmatpush1.msra.mxu0 0.0
    %1772 = vmatprep.subr.mxu0 0.0
    %1773 = vmatpush1.msra.mxu0 0.0
    %1774 = vmatprep.subr.mxu0 0.0
    %1775 = vmatpush1.msra.mxu0 0.0
    %1776 = vmatprep.subr.mxu0 0.0
    %1777 = vmatpush1.msra.mxu0 0.0
    %1778 = vmatprep.subr.mxu0 0.0
    %1779 = vmatpush1.msra.mxu0 0.0
    %1780 = vmatprep.subr.mxu0 0.0
    %1781 = vmatpush1.msra.mxu0 0.0
    %1782 = vmatprep.subr.mxu0 0.0
    %1783 = vmatpush1.msra.mxu0 0.0
    %1784 = vmatprep.subr.mxu0 0.0
    %1785 = vmatpush1.msra.mxu0 0.0
    %1786 = vmatprep.subr.mxu0 0.0
    %1787 = vmatpush1.msra.mxu0 0.0
    %1788 = vmatprep.subr.mxu0 0.0
    %1789 = vmatpush1.msra.mxu0 0.0
    %1790 = vmatprep.subr.mxu0 0.0
    %1791 = vmatpush1.msra.mxu0 0.0
    %1792 = vmatprep.subr.mxu0 0.0
    %1793 = vmatpush1.msra.mxu0 0.0
    %1794 = vmatprep.subr.mxu0 0.0
    %1795 = vmatpush1.msra.mxu0 0.0
    %1796 = vmatprep.subr.mxu0 0.0
    %1797 = vmatpush1.msra.mxu0 0.0
    %1798 = vmatprep.subr.mxu0 0.0
    %1799 = vmatpush1.msra.mxu0 0.0
    %1800 = vmatprep.subr.mxu0 0.0
    %1801 = vmatpush1.msra.mxu0 0.0
    %1802 = vmatprep.subr.mxu0 0.0
    %1803 = vmatpush1.msra.mxu0 0.0
    %1804 = vmatprep.mubr.f32.mxu0 0.0
    %1805 = vmatmul.mubr.f32.gmra.mrb[0].mxu0 %v1669
    %v1806 = vpop.f32.mrb[0].mxu0
    %v1807 = vadd.f32 0.0, %v1806
    %v1808 = vpop.f32.mrb[0].mxu0
    %1809 = vmatprep.mubr.f32.mxu0 0.0
    %1810 = vmatmul.mubr.f32.gmra.mrb[0].mxu0 %v1672
    %v1811 = vpop.f32.mrb[0].mxu0
    %v1812 = vadd.f32 0.0, %v1811
    %v1813 = vpop.f32.mrb[0].mxu0
    %1814 = vmatprep.mubr.f32.mxu0 0.0
    %1815 = vmatmul.mubr.f32.gmra.mrb[0].mxu0 %v1675
    %v1816 = vpop.f32.mrb[0].mxu0
    %v1817 = vadd.f32 0.0, %v1816
    %v1818 = vpop.f32.mrb[0].mxu0
    %1819 = vmatprep.mubr.f32.mxu0 0.0
    %1820 = vmatmul.mubr.f32.gmra.mrb[0].mxu0 %v1678
    %v1821 = vpop.f32.mrb[0].mxu0
    %v1822 = vadd.f32 0.0, %v1821
    %v1823 = vpop.f32.mrb[0].mxu0
    %1824 = vmatprep.mubr.f32.mxu0 0.0
    %1825 = vmatmul.mubr.f32.gmra.mrb[0].mxu0 %v1681
    %v1826 = vpop.f32.mrb[0].mxu0
    %v1827 = vadd.f32 0.0, %v1826
    %v1828 = vpop.f32.mrb[0].mxu0
    %1829 = vmatprep.mubr.f32.mxu0 0.0
    %1830 = vmatmul.mubr.f32.gmra.mrb[0].mxu0 %v1684
    %v1831 = vpop.f32.mrb[0].mxu0
    %v1832 = vadd.f32 0.0, %v1831
    %v1833 = vpop.f32.mrb[0].mxu0
    %1834 = vmatprep.mubr.f32.mxu0 0.0
    %1835 = vmatmul.mubr.f32.gmra.mrb[0].mxu0 %v1687
    %v1836 = vpop.f32.mrb[0].mxu0
    %v1837 = vadd.f32 0.0, %v1836
    %v1838 = vpop.f32.mrb[0].mxu0
    %1839 = vmatprep.mubr.f32.mxu0 0.0
    %1840 = vmatmul.mubr.f32.gmra.mrb[0].mxu0 %v1690
    %v1841 = vpop.f32.mrb[0].mxu0
    %v1842 = vadd.f32 0.0, %v1841
    %v1843 = vpop.f32.mrb[0].mxu0
    %1844 = vmatprep.mubr.f32.mxu0 0.0
    %1845 = vmatmul.mubr.f32.gmra.mrb[0].mxu0 %v1693
    %v1846 = vpop.f32.mrb[0].mxu0
    %v1847 = vadd.f32 0.0, %v1846
    %v1848 = vpop.f32.mrb[0].mxu0
    %1849 = vmatprep.mubr.f32.mxu0 0.0
    %1850 = vmatmul.mubr.f32.gmra.mrb[0].mxu0 %v1696
    %v1851 = vpop.f32.mrb[0].mxu0
    %v1852 = vadd.f32 0.0, %v1851
    %v1853 = vpop.f32.mrb[0].mxu0
    %1854 = vmatprep.mubr.f32.mxu0 0.0
    %1855 = vmatmul.mubr.f32.gmra.mrb[0].mxu0 %v1699
    %v1856 = vpop.f32.mrb[0].mxu0
    %v1857 = vadd.f32 0.0, %v1856
    %v1858 = vpop.f32.mrb[0].mxu0
    %1859 = vmatprep.mubr.f32.mxu0 0.0
    %1860 = vmatmul.mubr.f32.gmra.mrb[0].mxu0 %v1702
    %v1861 = vpop.f32.mrb[0].mxu0
    %v1862 = vadd.f32 0.0, %v1861
    %v1863 = vpop.f32.mrb[0].mxu0
    %1864 = vmatprep.mubr.f32.mxu0 0.0
    %1865 = vmatmul.mubr.f32.gmra.mrb[0].mxu0 %v1705
    %v1866 = vpop.f32.mrb[0].mxu0
    %v1867 = vadd.f32 0.0, %v1866
    %v1868 = vpop.f32.mrb[0].mxu0
    %1869 = vmatprep.mubr.f32.mxu0 0.0
    %1870 = vmatmul.mubr.f32.gmra.mrb[0].mxu0 %v1708
    %v1871 = vpop.f32.mrb[0].mxu0
    %v1872 = vadd.f32 0.0, %v1871
    %v1873 = vpop.f32.mrb[0].mxu0
    %1874 = vmatprep.mubr.f32.mxu0 0.0
    %1875 = vmatmul.mubr.f32.gmra.mrb[0].mxu0 %v1711
    %v1876 = vpop.f32.mrb[0].mxu0
    %v1877 = vadd.f32 0.0, %v1876
    %v1878 = vpop.f32.mrb[0].mxu0
    %1879 = vmatprep.mubr.f32.mxu0 0.0
    %1880 = vmatmul.mubr.f32.gmra.mrb[0].mxu0 %v1714
    %v1881 = vpop.f32.mrb[0].mxu0
    %v1882 = vadd.f32 0.0, %v1881
    %v1883 = vpop.f32.mrb[0].mxu0
    %1884 = vmatprep.mubr.f32.mxu0 0.0
    %1885 = vmatmul.mubr.f32.gmra.mrb[0].mxu0 %v1717
    %v1886 = vpop.f32.mrb[0].mxu0
    %v1887 = vadd.f32 0.0, %v1886
    %v1888 = vpop.f32.mrb[0].mxu0
    %1889 = vmatprep.mubr.f32.mxu0 0.0
    %1890 = vmatmul.mubr.f32.gmra.mrb[0].mxu0 %v1720
    %v1891 = vpop.f32.mrb[0].mxu0
    %v1892 = vadd.f32 0.0, %v1891
    %v1893 = vpop.f32.mrb[0].mxu0
    %1894 = vmatprep.mubr.f32.mxu0 0.0
    %1895 = vmatmul.mubr.f32.gmra.mrb[0].mxu0 %v1723
    %v1896 = vpop.f32.mrb[0].mxu0
    %v1897 = vadd.f32 0.0, %v1896
    %v1898 = vpop.f32.mrb[0].mxu0
    %1899 = vmatprep.mubr.f32.mxu0 0.0
    %1900 = vmatmul.mubr.f32.gmra.mrb[0].mxu0 %v1726
    %v1901 = vpop.f32.mrb[0].mxu0
    %v1902 = vadd.f32 0.0, %v1901
    %v1903 = vpop.f32.mrb[0].mxu0
    %1904 = vmatprep.mubr.f32.mxu0 0.0
    %1905 = vmatmul.mubr.f32.gmra.mrb[0].mxu0 %v1729
    %v1906 = vpop.f32.mrb[0].mxu0
    %v1907 = vadd.f32 0.0, %v1906
    %v1908 = vpop.f32.mrb[0].mxu0
    %1909 = vmatprep.mubr.f32.mxu0 0.0
    %1910 = vmatmul.mubr.f32.gmra.mrb[0].mxu0 %v1732
    %v1911 = vpop.f32.mrb[0].mxu0
    %v1912 = vadd.f32 0.0, %v1911
    %v1913 = vpop.f32.mrb[0].mxu0
    %1914 = vmatprep.mubr.f32.mxu0 0.0
    %1915 = vmatmul.mubr.f32.gmra.mrb[0].mxu0 %v1735
    %v1916 = vpop.f32.mrb[0].mxu0
    %v1917 = vadd.f32 0.0, %v1916
    %v1918 = vpop.f32.mrb[0].mxu0
    %1919 = vmatprep.mubr.f32.mxu0 0.0
    %1920 = vmatmul.mubr.f32.gmra.mrb[0].mxu0 %v1738
    %v1921 = vpop.f32.mrb[0].mxu0
    %v1922 = vadd.f32 0.0, %v1921
    %v1923 = vpop.f32.mrb[0].mxu0
    %1924 = vdwg.mxu0
    %v1925 = vadd.f32 %v1643, %v1807
    %v1926 = vadd.f32 %v1644, %v1812
    %v1927 = vadd.f32 %v1645, %v1817
    %v1928 = vadd.f32 %v1646, %v1822
    %v1929 = vadd.f32 %v1647, %v1827
    %v1930 = vadd.f32 %v1648, %v1832
    %v1931 = vadd.f32 %v1649, %v1837
    %v1932 = vadd.f32 %v1650, %v1842
    %v1933 = vxor.u32 %v1925, 2147483648
    %v1934 = vxor.u32 %v1926, 2147483648
    %v1935 = vxor.u32 %v1927, 2147483648
    %v1936 = vxor.u32 %v1928, 2147483648
    %v1937 = vxor.u32 %v1929, 2147483648
    %v1938 = vxor.u32 %v1930, 2147483648
    %v1939 = vxor.u32 %v1931, 2147483648
    %v1940 = vxor.u32 %v1932, 2147483648
    %v1941 = vmul.f32 %v1933, 1.442695
    %v1942 = vpow.pop %v1941
    %v1943 = vmul.f32 %v1934, 1.442695
    %v1944 = vpow.pop %v1943
    %v1945 = vmul.f32 %v1935, 1.442695
    %v1946 = vpow.pop %v1945
    %v1947 = vmul.f32 %v1936, 1.442695
    %v1948 = vpow.pop %v1947
    %v1949 = vmul.f32 %v1937, 1.442695
    %v1950 = vpow.pop %v1949
    %v1951 = vmul.f32 %v1938, 1.442695
    %v1952 = vpow.pop %v1951
    %v1953 = vmul.f32 %v1939, 1.442695
    %v1954 = vpow.pop %v1953
    %v1955 = vmul.f32 %v1940, 1.442695
    %v1956 = vpow.pop %v1955
    %v1957 = vadd.f32 %v1942, 1.0
    %v1958 = vadd.f32 %v1944, 1.0
    %v1959 = vadd.f32 %v1946, 1.0
    %v1960 = vadd.f32 %v1948, 1.0
    %v1961 = vadd.f32 %v1950, 1.0
    %v1962 = vadd.f32 %v1952, 1.0
    %v1963 = vadd.f32 %v1954, 1.0
    %v1964 = vadd.f32 %v1956, 1.0
    %v1965 = vrcp.pop %v1957
    %v1966 = vmul.f32 1.0, %v1965
    %v1967 = vrcp.pop %v1958
    %v1968 = vmul.f32 1.0, %v1967
    %v1969 = vrcp.pop %v1959
    %v1970 = vmul.f32 1.0, %v1969
    %v1971 = vrcp.pop %v1960
    %v1972 = vmul.f32 1.0, %v1971
    %v1973 = vrcp.pop %v1961
    %v1974 = vmul.f32 1.0, %v1973
    %v1975 = vrcp.pop %v1962
    %v1976 = vmul.f32 1.0, %v1975
    %v1977 = vrcp.pop %v1963
    %v1978 = vmul.f32 1.0, %v1977
    %v1979 = vrcp.pop %v1964
    %v1980 = vmul.f32 1.0, %v1979
    %v1981 = vadd.f32 %v1651, %v1847
    %v1982 = vadd.f32 %v1652, %v1852
    %v1983 = vadd.f32 %v1653, %v1857
    %v1984 = vadd.f32 %v1654, %v1862
    %v1985 = vadd.f32 %v1655, %v1867
    %v1986 = vadd.f32 %v1656, %v1872
    %v1987 = vadd.f32 %v1657, %v1877
    %v1988 = vadd.f32 %v1658, %v1882
    %v1989 = vxor.u32 %v1981, 2147483648
    %v1990 = vxor.u32 %v1982, 2147483648
    %v1991 = vxor.u32 %v1983, 2147483648
    %v1992 = vxor.u32 %v1984, 2147483648
    %v1993 = vxor.u32 %v1985, 2147483648
    %v1994 = vxor.u32 %v1986, 2147483648
    %v1995 = vxor.u32 %v1987, 2147483648
    %v1996 = vxor.u32 %v1988, 2147483648
    %v1997 = vmul.f32 %v1989, 1.442695
    %v1998 = vpow.pop %v1997
    %v1999 = vmul.f32 %v1990, 1.442695
    %v2000 = vpow.pop %v1999
    %v2001 = vmul.f32 %v1991, 1.442695
    %v2002 = vpow.pop %v2001
    %v2003 = vmul.f32 %v1992, 1.442695
    %v2004 = vpow.pop %v2003
    %v2005 = vmul.f32 %v1993, 1.442695
    %v2006 = vpow.pop %v2005
    %v2007 = vmul.f32 %v1994, 1.442695
    %v2008 = vpow.pop %v2007
    %v2009 = vmul.f32 %v1995, 1.442695
    %v2010 = vpow.pop %v2009
    %v2011 = vmul.f32 %v1996, 1.442695
    %v2012 = vpow.pop %v2011
    %v2013 = vadd.f32 %v1998, 1.0
    %v2014 = vadd.f32 %v2000, 1.0
    %v2015 = vadd.f32 %v2002, 1.0
    %v2016 = vadd.f32 %v2004, 1.0
    %v2017 = vadd.f32 %v2006, 1.0
    %v2018 = vadd.f32 %v2008, 1.0
    %v2019 = vadd.f32 %v2010, 1.0
    %v2020 = vadd.f32 %v2012, 1.0
    %v2021 = vrcp.pop %v2013
    %v2022 = vmul.f32 1.0, %v2021
    %v2023 = vrcp.pop %v2014
    %v2024 = vmul.f32 1.0, %v2023
    %v2025 = vrcp.pop %v2015
    %v2026 = vmul.f32 1.0, %v2025
    %v2027 = vrcp.pop %v2016
    %v2028 = vmul.f32 1.0, %v2027
    %v2029 = vrcp.pop %v2017
    %v2030 = vmul.f32 1.0, %v2029
    %v2031 = vrcp.pop %v2018
    %v2032 = vmul.f32 1.0, %v2031
    %v2033 = vrcp.pop %v2019
    %v2034 = vmul.f32 1.0, %v2033
    %v2035 = vrcp.pop %v2020
    %v2036 = vmul.f32 1.0, %v2035
    %v2037 = vadd.f32 %v1887, %v228
    %v2038 = vadd.f32 %v1892, %v233
    %v2039 = vadd.f32 %v1897, %v238
    %v2040 = vadd.f32 %v1902, %v243
    %v2041 = vadd.f32 %v1907, %v248
    %v2042 = vadd.f32 %v1912, %v253
    %v2043 = vadd.f32 %v1917, %v258
    %v2044 = vadd.f32 %v1922, %v263
    %v2045 = vmul.f32 %v1966, %v2037
    %v2046 = vmul.f32 %v1968, %v2038
    %v2047 = vmul.f32 %v1970, %v2039
    %v2048 = vmul.f32 %v1972, %v2040
    %v2049 = vmul.f32 %v1974, %v2041
    %v2050 = vmul.f32 %v1976, %v2042
    %v2051 = vmul.f32 %v1978, %v2043
    %v2052 = vmul.f32 %v1980, %v2044
    %v2053 = vadd.f32 %v1659, %v2045
    %v2054 = vadd.f32 %v1660, %v2046
    %v2055 = vadd.f32 %v1661, %v2047
    %v2056 = vadd.f32 %v1662, %v2048
    %v2057 = vadd.f32 %v1663, %v2049
    %v2058 = vadd.f32 %v1664, %v2050
    %v2059 = vadd.f32 %v1665, %v2051
    %v2060 = vadd.f32 %v1666, %v2052
    %v2061 = vtanh.pop %v2053
    %v2062 = vtanh.pop %v2054
    %v2063 = vtanh.pop %v2055
    %v2064 = vtanh.pop %v2056
    %v2065 = vtanh.pop %v2057
    %v2066 = vtanh.pop %v2058
    %v2067 = vtanh.pop %v2059
    %v2068 = vtanh.pop %v2060
    %v2069 = vsub.f32 1.0, %v2022
    %v2070 = vsub.f32 1.0, %v2024
    %v2071 = vsub.f32 1.0, %v2026
    %v2072 = vsub.f32 1.0, %v2028
    %v2073 = vsub.f32 1.0, %v2030
    %v2074 = vsub.f32 1.0, %v2032
    %v2075 = vsub.f32 1.0, %v2034
    %v2076 = vsub.f32 1.0, %v2036
    %v2077 = vmul.f32 %v2069, %v2061
    %v2078 = vmul.f32 %v2070, %v2062
    %v2079 = vmul.f32 %v2071, %v2063
    %v2080 = vmul.f32 %v2072, %v2064
    %v2081 = vmul.f32 %v2073, %v2065
    %v2082 = vmul.f32 %v2074, %v2066
    %v2083 = vmul.f32 %v2075, %v2067
    %v2084 = vmul.f32 %v2076, %v2068
    %v2085 = vmul.f32 %v2022, 0.0
    %v2086 = vmul.f32 %v2024, 0.0
    %v2087 = vmul.f32 %v2026, 0.0
    %v2088 = vmul.f32 %v2028, 0.0
    %v2089 = vmul.f32 %v2030, 0.0
    %v2090 = vmul.f32 %v2032, 0.0
    %v2091 = vmul.f32 %v2034, 0.0
    %v2092 = vmul.f32 %v2036, 0.0
    %v2093 = vadd.f32 %v2077, %v2085
    %v2094 = vadd.f32 %v2078, %v2086
    %v2095 = vadd.f32 %v2079, %v2087
    %v2096 = vadd.f32 %v2080, %v2088
    %v2097 = vadd.f32 %v2081, %v2089
    %v2098 = vadd.f32 %v2082, %v2090
    %v2099 = vadd.f32 %v2083, %v2091
    %v2100 = vadd.f32 %v2084, %v2092
    %v2101 = vsel %vm274, 0, 5
    %v2102 = vsel %vm275, 0, 5
    %v2103 = vsel %vm276, 0, 5
    %v2104 = vsel %vm277, 0, 5
    %v2105 = vsel %vm278, 0, 5
    %v2106 = vsel %vm279, 0, 5
    %v2107 = vsel %vm280, 0, 5
    %v2108 = vsel %vm281, 0, 5
    %v2109 = vlaneseq
    %v2110 = vshrl.u32 %v2109, 7
    %v2111 = vsub.s32 0, %v2110
    %v2112 = vrot.slane %v24, %v2111
    %vm2113 = vcmp.lt.s32.totalorder %v2101, %v2112
    %vm2114 = vcmp.lt.s32.totalorder %v2102, %v2112
    %vm2115 = vcmp.lt.s32.totalorder %v2103, %v2112
    %vm2116 = vcmp.lt.s32.totalorder %v2104, %v2112
    %vm2117 = vcmp.lt.s32.totalorder %v2105, %v2112
    %vm2118 = vcmp.lt.s32.totalorder %v2106, %v2112
    %vm2119 = vcmp.lt.s32.totalorder %v2107, %v2112
    %vm2120 = vcmp.lt.s32.totalorder %v2108, %v2112
    %v2121 = vsel %vm2113, %v2093, 0.0
    %v2122 = vsel %vm2114, %v2094, 0.0
    %v2123 = vsel %vm2115, %v2095, 0.0
    %v2124 = vsel %vm2116, %v2096, 0.0
    %v2125 = vsel %vm2117, %v2097, 0.0
    %v2126 = vsel %vm2118, %v2098, 0.0
    %v2127 = vsel %vm2119, %v2099, 0.0
    %v2128 = vsel %vm2120, %v2100, 0.0
    %v2129 = vld [vmem:[%s759] sm:$0xff]
    %v2130 = vld [vmem:[%s759 + $0x8] sm:$0xff]
    %v2131 = vld [vmem:[%s759 + $0x10] sm:$0xff]
    %v2132 = vld [vmem:[%s759 + $0x18] sm:$0xff]
    %v2133 = vld [vmem:[%s759 + $0x20] sm:$0xff]
    %v2134 = vld [vmem:[%s759 + $0x28] sm:$0xff]
    %v2135 = vld [vmem:[%s759 + $0x30] sm:$0xff]
    %v2136 = vld [vmem:[%s759 + $0x38] sm:$0xff]
    %v2137 = vld [vmem:[%s759 + $0x40] sm:$0xff]
    %v2138 = vld [vmem:[%s759 + $0x48] sm:$0xff]
    %v2139 = vld [vmem:[%s759 + $0x50] sm:$0xff]
    %v2140 = vld [vmem:[%s759 + $0x58] sm:$0xff]
    %v2141 = vld [vmem:[%s759 + $0x60] sm:$0xff]
    %v2142 = vld [vmem:[%s759 + $0x68] sm:$0xff]
    %v2143 = vld [vmem:[%s759 + $0x70] sm:$0xff]
    %v2144 = vld [vmem:[%s759 + $0x78] sm:$0xff]
    %v2145 = vld [vmem:[%s759 + $0x80] sm:$0xff]
    %v2146 = vld [vmem:[%s759 + $0x88] sm:$0xff]
    %v2147 = vld [vmem:[%s759 + $0x90] sm:$0xff]
    %v2148 = vld [vmem:[%s759 + $0x98] sm:$0xff]
    %v2149 = vld [vmem:[%s759 + $0xa0] sm:$0xff]
    %v2150 = vld [vmem:[%s759 + $0xa8] sm:$0xff]
    %v2151 = vld [vmem:[%s759 + $0xb0] sm:$0xff]
    %v2152 = vld [vmem:[%s759 + $0xb8] sm:$0xff]
    %2153 = vmatprep.subr.mxu0 0.0
    %2154 = vmatpush1.msra.mxu0 %v2121
    %2155 = vmatprep.subr.mxu0 0.0
    %2156 = vmatpush1.msra.mxu0 %v2122
    %2157 = vmatprep.subr.mxu0 0.0
    %2158 = vmatpush1.msra.mxu0 %v2123
    %2159 = vmatprep.subr.mxu0 0.0
    %2160 = vmatpush1.msra.mxu0 %v2124
    %2161 = vmatprep.subr.mxu0 0.0
    %2162 = vmatpush1.msra.mxu0 %v2125
    %2163 = vmatprep.subr.mxu0 0.0
    %2164 = vmatpush1.msra.mxu0 %v2126
    %2165 = vmatprep.subr.mxu0 0.0
    %2166 = vmatpush1.msra.mxu0 %v2127
    %2167 = vmatprep.subr.mxu0 0.0
    %2168 = vmatpush1.msra.mxu0 %v2128
    %2169 = vmatprep.subr.mxu0 0.0
    %2170 = vmatpush1.msra.mxu0 0.0
    %2171 = vmatprep.subr.mxu0 0.0
    %2172 = vmatpush1.msra.mxu0 0.0
    %2173 = vmatprep.subr.mxu0 0.0
    %2174 = vmatpush1.msra.mxu0 0.0
    %2175 = vmatprep.subr.mxu0 0.0
    %2176 = vmatpush1.msra.mxu0 0.0
    %2177 = vmatprep.subr.mxu0 0.0
    %2178 = vmatpush1.msra.mxu0 0.0
    %2179 = vmatprep.subr.mxu0 0.0
    %2180 = vmatpush1.msra.mxu0 0.0
    %2181 = vmatprep.subr.mxu0 0.0
    %2182 = vmatpush1.msra.mxu0 0.0
    %2183 = vmatprep.subr.mxu0 0.0
    %2184 = vmatpush1.msra.mxu0 0.0
    %2185 = vmatprep.subr.mxu0 0.0
    %2186 = vmatpush1.msra.mxu0 0.0
    %2187 = vmatprep.subr.mxu0 0.0
    %2188 = vmatpush1.msra.mxu0 0.0
    %2189 = vmatprep.subr.mxu0 0.0
    %2190 = vmatpush1.msra.mxu0 0.0
    %2191 = vmatprep.subr.mxu0 0.0
    %2192 = vmatpush1.msra.mxu0 0.0
    %2193 = vmatprep.subr.mxu0 0.0
    %2194 = vmatpush1.msra.mxu0 0.0
    %2195 = vmatprep.subr.mxu0 0.0
    %2196 = vmatpush1.msra.mxu0 0.0
    %2197 = vmatprep.subr.mxu0 0.0
    %2198 = vmatpush1.msra.mxu0 0.0
    %2199 = vmatprep.subr.mxu0 0.0
    %2200 = vmatpush1.msra.mxu0 0.0
    %2201 = vmatprep.subr.mxu0 0.0
    %2202 = vmatpush1.msra.mxu0 0.0
    %2203 = vmatprep.subr.mxu0 0.0
    %2204 = vmatpush1.msra.mxu0 0.0
    %2205 = vmatprep.subr.mxu0 0.0
    %2206 = vmatpush1.msra.mxu0 0.0
    %2207 = vmatprep.subr.mxu0 0.0
    %2208 = vmatpush1.msra.mxu0 0.0
    %2209 = vmatprep.subr.mxu0 0.0
    %2210 = vmatpush1.msra.mxu0 0.0
    %2211 = vmatprep.subr.mxu0 0.0
    %2212 = vmatpush1.msra.mxu0 0.0
    %2213 = vmatprep.subr.mxu0 0.0
    %2214 = vmatpush1.msra.mxu0 0.0
    %2215 = vmatprep.subr.mxu0 0.0
    %2216 = vmatpush1.msra.mxu0 0.0
    %2217 = vmatprep.mubr.f32.mxu0 0.0
    %2218 = vmatmul.mubr.f32.gmra.mrb[0].mxu0 %v1669
    %v2219 = vpop.f32.mrb[0].mxu0
    %v2220 = vadd.f32 0.0, %v2219
    %v2221 = vpop.f32.mrb[0].mxu0
    %2222 = vmatprep.mubr.f32.mxu0 0.0
    %2223 = vmatmul.mubr.f32.gmra.mrb[0].mxu0 %v1672
    %v2224 = vpop.f32.mrb[0].mxu0
    %v2225 = vadd.f32 0.0, %v2224
    %v2226 = vpop.f32.mrb[0].mxu0
    %2227 = vmatprep.mubr.f32.mxu0 0.0
    %2228 = vmatmul.mubr.f32.gmra.mrb[0].mxu0 %v1675
    %v2229 = vpop.f32.mrb[0].mxu0
    %v2230 = vadd.f32 0.0, %v2229
    %v2231 = vpop.f32.mrb[0].mxu0
    %2232 = vmatprep.mubr.f32.mxu0 0.0
    %2233 = vmatmul.mubr.f32.gmra.mrb[0].mxu0 %v1678
    %v2234 = vpop.f32.mrb[0].mxu0
    %v2235 = vadd.f32 0.0, %v2234
    %v2236 = vpop.f32.mrb[0].mxu0
    %2237 = vmatprep.mubr.f32.mxu0 0.0
    %2238 = vmatmul.mubr.f32.gmra.mrb[0].mxu0 %v1681
    %v2239 = vpop.f32.mrb[0].mxu0
    %v2240 = vadd.f32 0.0, %v2239
    %v2241 = vpop.f32.mrb[0].mxu0
    %2242 = vmatprep.mubr.f32.mxu0 0.0
    %2243 = vmatmul.mubr.f32.gmra.mrb[0].mxu0 %v1684
    %v2244 = vpop.f32.mrb[0].mxu0
    %v2245 = vadd.f32 0.0, %v2244
    %v2246 = vpop.f32.mrb[0].mxu0
    %2247 = vmatprep.mubr.f32.mxu0 0.0
    %2248 = vmatmul.mubr.f32.gmra.mrb[0].mxu0 %v1687
    %v2249 = vpop.f32.mrb[0].mxu0
    %v2250 = vadd.f32 0.0, %v2249
    %v2251 = vpop.f32.mrb[0].mxu0
    %2252 = vmatprep.mubr.f32.mxu0 0.0
    %2253 = vmatmul.mubr.f32.gmra.mrb[0].mxu0 %v1690
    %v2254 = vpop.f32.mrb[0].mxu0
    %v2255 = vadd.f32 0.0, %v2254
    %v2256 = vpop.f32.mrb[0].mxu0
    %2257 = vmatprep.mubr.f32.mxu0 0.0
    %2258 = vmatmul.mubr.f32.gmra.mrb[0].mxu0 %v1693
    %v2259 = vpop.f32.mrb[0].mxu0
    %v2260 = vadd.f32 0.0, %v2259
    %v2261 = vpop.f32.mrb[0].mxu0
    %2262 = vmatprep.mubr.f32.mxu0 0.0
    %2263 = vmatmul.mubr.f32.gmra.mrb[0].mxu0 %v1696
    %v2264 = vpop.f32.mrb[0].mxu0
    %v2265 = vadd.f32 0.0, %v2264
    %v2266 = vpop.f32.mrb[0].mxu0
    %2267 = vmatprep.mubr.f32.mxu0 0.0
    %2268 = vmatmul.mubr.f32.gmra.mrb[0].mxu0 %v1699
    %v2269 = vpop.f32.mrb[0].mxu0
    %v2270 = vadd.f32 0.0, %v2269
    %v2271 = vpop.f32.mrb[0].mxu0
    %2272 = vmatprep.mubr.f32.mxu0 0.0
    %2273 = vmatmul.mubr.f32.gmra.mrb[0].mxu0 %v1702
    %v2274 = vpop.f32.mrb[0].mxu0
    %v2275 = vadd.f32 0.0, %v2274
    %v2276 = vpop.f32.mrb[0].mxu0
    %2277 = vmatprep.mubr.f32.mxu0 0.0
    %2278 = vmatmul.mubr.f32.gmra.mrb[0].mxu0 %v1705
    %v2279 = vpop.f32.mrb[0].mxu0
    %v2280 = vadd.f32 0.0, %v2279
    %v2281 = vpop.f32.mrb[0].mxu0
    %2282 = vmatprep.mubr.f32.mxu0 0.0
    %2283 = vmatmul.mubr.f32.gmra.mrb[0].mxu0 %v1708
    %v2284 = vpop.f32.mrb[0].mxu0
    %v2285 = vadd.f32 0.0, %v2284
    %v2286 = vpop.f32.mrb[0].mxu0
    %2287 = vmatprep.mubr.f32.mxu0 0.0
    %2288 = vmatmul.mubr.f32.gmra.mrb[0].mxu0 %v1711
    %v2289 = vpop.f32.mrb[0].mxu0
    %v2290 = vadd.f32 0.0, %v2289
    %v2291 = vpop.f32.mrb[0].mxu0
    %2292 = vmatprep.mubr.f32.mxu0 0.0
    %2293 = vmatmul.mubr.f32.gmra.mrb[0].mxu0 %v1714
    %v2294 = vpop.f32.mrb[0].mxu0
    %v2295 = vadd.f32 0.0, %v2294
    %v2296 = vpop.f32.mrb[0].mxu0
    %2297 = vmatprep.mubr.f32.mxu0 0.0
    %2298 = vmatmul.mubr.f32.gmra.mrb[0].mxu0 %v1717
    %v2299 = vpop.f32.mrb[0].mxu0
    %v2300 = vadd.f32 0.0, %v2299
    %v2301 = vpop.f32.mrb[0].mxu0
    %2302 = vmatprep.mubr.f32.mxu0 0.0
    %2303 = vmatmul.mubr.f32.gmra.mrb[0].mxu0 %v1720
    %v2304 = vpop.f32.mrb[0].mxu0
    %v2305 = vadd.f32 0.0, %v2304
    %v2306 = vpop.f32.mrb[0].mxu0
    %2307 = vmatprep.mubr.f32.mxu0 0.0
    %2308 = vmatmul.mubr.f32.gmra.mrb[0].mxu0 %v1723
    %v2309 = vpop.f32.mrb[0].mxu0
    %v2310 = vadd.f32 0.0, %v2309
    %v2311 = vpop.f32.mrb[0].mxu0
    %2312 = vmatprep.mubr.f32.mxu0 0.0
    %2313 = vmatmul.mubr.f32.gmra.mrb[0].mxu0 %v1726
    %v2314 = vpop.f32.mrb[0].mxu0
    %v2315 = vadd.f32 0.0, %v2314
    %v2316 = vpop.f32.mrb[0].mxu0
    %2317 = vmatprep.mubr.f32.mxu0 0.0
    %2318 = vmatmul.mubr.f32.gmra.mrb[0].mxu0 %v1729
    %v2319 = vpop.f32.mrb[0].mxu0
    %v2320 = vadd.f32 0.0, %v2319
    %v2321 = vpop.f32.mrb[0].mxu0
    %2322 = vmatprep.mubr.f32.mxu0 0.0
    %2323 = vmatmul.mubr.f32.gmra.mrb[0].mxu0 %v1732
    %v2324 = vpop.f32.mrb[0].mxu0
    %v2325 = vadd.f32 0.0, %v2324
    %v2326 = vpop.f32.mrb[0].mxu0
    %2327 = vmatprep.mubr.f32.mxu0 0.0
    %2328 = vmatmul.mubr.f32.gmra.mrb[0].mxu0 %v1735
    %v2329 = vpop.f32.mrb[0].mxu0
    %v2330 = vadd.f32 0.0, %v2329
    %v2331 = vpop.f32.mrb[0].mxu0
    %2332 = vmatprep.mubr.f32.mxu0 0.0
    %2333 = vmatmul.mubr.f32.gmra.mrb[0].mxu0 %v1738
    %v2334 = vpop.f32.mrb[0].mxu0
    %v2335 = vadd.f32 0.0, %v2334
    %v2336 = vpop.f32.mrb[0].mxu0
    %2337 = vdwg.mxu0
    %v2338 = vadd.f32 %v2129, %v2220
    %v2339 = vadd.f32 %v2130, %v2225
    %v2340 = vadd.f32 %v2131, %v2230
    %v2341 = vadd.f32 %v2132, %v2235
    %v2342 = vadd.f32 %v2133, %v2240
    %v2343 = vadd.f32 %v2134, %v2245
    %v2344 = vadd.f32 %v2135, %v2250
    %v2345 = vadd.f32 %v2136, %v2255
    %v2346 = vxor.u32 %v2338, 2147483648
    %v2347 = vxor.u32 %v2339, 2147483648
    %v2348 = vxor.u32 %v2340, 2147483648
    %v2349 = vxor.u32 %v2341, 2147483648
    %v2350 = vxor.u32 %v2342, 2147483648
    %v2351 = vxor.u32 %v2343, 2147483648
    %v2352 = vxor.u32 %v2344, 2147483648
    %v2353 = vxor.u32 %v2345, 2147483648
    %v2354 = vmul.f32 %v2346, 1.442695
    %v2355 = vpow.pop %v2354
    %v2356 = vmul.f32 %v2347, 1.442695
    %v2357 = vpow.pop %v2356
    %v2358 = vmul.f32 %v2348, 1.442695
    %v2359 = vpow.pop %v2358
    %v2360 = vmul.f32 %v2349, 1.442695
    %v2361 = vpow.pop %v2360
    %v2362 = vmul.f32 %v2350, 1.442695
    %v2363 = vpow.pop %v2362
    %v2364 = vmul.f32 %v2351, 1.442695
    %v2365 = vpow.pop %v2364
    %v2366 = vmul.f32 %v2352, 1.442695
    %v2367 = vpow.pop %v2366
    %v2368 = vmul.f32 %v2353, 1.442695
    %v2369 = vpow.pop %v2368
    %v2370 = vadd.f32 %v2355, 1.0
    %v2371 = vadd.f32 %v2357, 1.0
    %v2372 = vadd.f32 %v2359, 1.0
    %v2373 = vadd.f32 %v2361, 1.0
    %v2374 = vadd.f32 %v2363, 1.0
    %v2375 = vadd.f32 %v2365, 1.0
    %v2376 = vadd.f32 %v2367, 1.0
    %v2377 = vadd.f32 %v2369, 1.0
    %v2378 = vrcp.pop %v2370
    %v2379 = vmul.f32 1.0, %v2378
    %v2380 = vrcp.pop %v2371
    %v2381 = vmul.f32 1.0, %v2380
    %v2382 = vrcp.pop %v2372
    %v2383 = vmul.f32 1.0, %v2382
    %v2384 = vrcp.pop %v2373
    %v2385 = vmul.f32 1.0, %v2384
    %v2386 = vrcp.pop %v2374
    %v2387 = vmul.f32 1.0, %v2386
    %v2388 = vrcp.pop %v2375
    %v2389 = vmul.f32 1.0, %v2388
    %v2390 = vrcp.pop %v2376
    %v2391 = vmul.f32 1.0, %v2390
    %v2392 = vrcp.pop %v2377
    %v2393 = vmul.f32 1.0, %v2392
    %v2394 = vadd.f32 %v2137, %v2260
    %v2395 = vadd.f32 %v2138, %v2265
    %v2396 = vadd.f32 %v2139, %v2270
    %v2397 = vadd.f32 %v2140, %v2275
    %v2398 = vadd.f32 %v2141, %v2280
    %v2399 = vadd.f32 %v2142, %v2285
    %v2400 = vadd.f32 %v2143, %v2290
    %v2401 = vadd.f32 %v2144, %v2295
    %v2402 = vxor.u32 %v2394, 2147483648
    %v2403 = vxor.u32 %v2395, 2147483648
    %v2404 = vxor.u32 %v2396, 2147483648
    %v2405 = vxor.u32 %v2397, 2147483648
    %v2406 = vxor.u32 %v2398, 2147483648
    %v2407 = vxor.u32 %v2399, 2147483648
    %v2408 = vxor.u32 %v2400, 2147483648
    %v2409 = vxor.u32 %v2401, 2147483648
    %v2410 = vmul.f32 %v2402, 1.442695
    %v2411 = vpow.pop %v2410
    %v2412 = vmul.f32 %v2403, 1.442695
    %v2413 = vpow.pop %v2412
    %v2414 = vmul.f32 %v2404, 1.442695
    %v2415 = vpow.pop %v2414
    %v2416 = vmul.f32 %v2405, 1.442695
    %v2417 = vpow.pop %v2416
    %v2418 = vmul.f32 %v2406, 1.442695
    %v2419 = vpow.pop %v2418
    %v2420 = vmul.f32 %v2407, 1.442695
    %v2421 = vpow.pop %v2420
    %v2422 = vmul.f32 %v2408, 1.442695
    %v2423 = vpow.pop %v2422
    %v2424 = vmul.f32 %v2409, 1.442695
    %v2425 = vpow.pop %v2424
    %v2426 = vadd.f32 %v2411, 1.0
    %v2427 = vadd.f32 %v2413, 1.0
    %v2428 = vadd.f32 %v2415, 1.0
    %v2429 = vadd.f32 %v2417, 1.0
    %v2430 = vadd.f32 %v2419, 1.0
    %v2431 = vadd.f32 %v2421, 1.0
    %v2432 = vadd.f32 %v2423, 1.0
    %v2433 = vadd.f32 %v2425, 1.0
    %v2434 = vrcp.pop %v2426
    %v2435 = vmul.f32 1.0, %v2434
    %v2436 = vrcp.pop %v2427
    %v2437 = vmul.f32 1.0, %v2436
    %v2438 = vrcp.pop %v2428
    %v2439 = vmul.f32 1.0, %v2438
    %v2440 = vrcp.pop %v2429
    %v2441 = vmul.f32 1.0, %v2440
    %v2442 = vrcp.pop %v2430
    %v2443 = vmul.f32 1.0, %v2442
    %v2444 = vrcp.pop %v2431
    %v2445 = vmul.f32 1.0, %v2444
    %v2446 = vrcp.pop %v2432
    %v2447 = vmul.f32 1.0, %v2446
    %v2448 = vrcp.pop %v2433
    %v2449 = vmul.f32 1.0, %v2448
    %v2450 = vadd.f32 %v2300, %v228
    %v2451 = vadd.f32 %v2305, %v233
    %v2452 = vadd.f32 %v2310, %v238
    %v2453 = vadd.f32 %v2315, %v243
    %v2454 = vadd.f32 %v2320, %v248
    %v2455 = vadd.f32 %v2325, %v253
    %v2456 = vadd.f32 %v2330, %v258
    %v2457 = vadd.f32 %v2335, %v263
    %v2458 = vmul.f32 %v2379, %v2450
    %v2459 = vmul.f32 %v2381, %v2451
    %v2460 = vmul.f32 %v2383, %v2452
    %v2461 = vmul.f32 %v2385, %v2453
    %v2462 = vmul.f32 %v2387, %v2454
    %v2463 = vmul.f32 %v2389, %v2455
    %v2464 = vmul.f32 %v2391, %v2456
    %v2465 = vmul.f32 %v2393, %v2457
    %v2466 = vadd.f32 %v2145, %v2458
    %v2467 = vadd.f32 %v2146, %v2459
    %v2468 = vadd.f32 %v2147, %v2460
    %v2469 = vadd.f32 %v2148, %v2461
    %v2470 = vadd.f32 %v2149, %v2462
    %v2471 = vadd.f32 %v2150, %v2463
    %v2472 = vadd.f32 %v2151, %v2464
    %v2473 = vadd.f32 %v2152, %v2465
    %v2474 = vtanh.pop %v2466
    %v2475 = vtanh.pop %v2467
    %v2476 = vtanh.pop %v2468
    %v2477 = vtanh.pop %v2469
    %v2478 = vtanh.pop %v2470
    %v2479 = vtanh.pop %v2471
    %v2480 = vtanh.pop %v2472
    %v2481 = vtanh.pop %v2473
    %v2482 = vsub.f32 1.0, %v2435
    %v2483 = vsub.f32 1.0, %v2437
    %v2484 = vsub.f32 1.0, %v2439
    %v2485 = vsub.f32 1.0, %v2441
    %v2486 = vsub.f32 1.0, %v2443
    %v2487 = vsub.f32 1.0, %v2445
    %v2488 = vsub.f32 1.0, %v2447
    %v2489 = vsub.f32 1.0, %v2449
    %v2490 = vmul.f32 %v2482, %v2474
    %v2491 = vmul.f32 %v2483, %v2475
    %v2492 = vmul.f32 %v2484, %v2476
    %v2493 = vmul.f32 %v2485, %v2477
    %v2494 = vmul.f32 %v2486, %v2478
    %v2495 = vmul.f32 %v2487, %v2479
    %v2496 = vmul.f32 %v2488, %v2480
    %v2497 = vmul.f32 %v2489, %v2481
    %v2498 = vmul.f32 %v2435, %v2121
    %v2499 = vmul.f32 %v2437, %v2122
    %v2500 = vmul.f32 %v2439, %v2123
    %v2501 = vmul.f32 %v2441, %v2124
    %v2502 = vmul.f32 %v2443, %v2125
    %v2503 = vmul.f32 %v2445, %v2126
    %v2504 = vmul.f32 %v2447, %v2127
    %v2505 = vmul.f32 %v2449, %v2128
    %v2506 = vadd.f32 %v2490, %v2498
    %v2507 = vadd.f32 %v2491, %v2499
    %v2508 = vadd.f32 %v2492, %v2500
    %v2509 = vadd.f32 %v2493, %v2501
    %v2510 = vadd.f32 %v2494, %v2502
    %v2511 = vadd.f32 %v2495, %v2503
    %v2512 = vadd.f32 %v2496, %v2504
    %v2513 = vadd.f32 %v2497, %v2505
    %v2514 = vsel %vm274, 1, 4
    %v2515 = vsel %vm275, 1, 4
    %v2516 = vsel %vm276, 1, 4
    %v2517 = vsel %vm277, 1, 4
    %v2518 = vsel %vm278, 1, 4
    %v2519 = vsel %vm279, 1, 4
    %v2520 = vsel %vm280, 1, 4
    %v2521 = vsel %vm281, 1, 4
    %vm2522 = vcmp.lt.s32.totalorder %v2514, %v2112
    %vm2523 = vcmp.lt.s32.totalorder %v2515, %v2112
    %vm2524 = vcmp.lt.s32.totalorder %v2516, %v2112
    %vm2525 = vcmp.lt.s32.totalorder %v2517, %v2112
    %vm2526 = vcmp.lt.s32.totalorder %v2518, %v2112
    %vm2527 = vcmp.lt.s32.totalorder %v2519, %v2112
    %vm2528 = vcmp.lt.s32.totalorder %v2520, %v2112
    %vm2529 = vcmp.lt.s32.totalorder %v2521, %v2112
    %v2530 = vsel %vm2522, %v2506, %v2121
    %v2531 = vsel %vm2523, %v2507, %v2122
    %v2532 = vsel %vm2524, %v2508, %v2123
    %v2533 = vsel %vm2525, %v2509, %v2124
    %v2534 = vsel %vm2526, %v2510, %v2125
    %v2535 = vsel %vm2527, %v2511, %v2126
    %v2536 = vsel %vm2528, %v2512, %v2127
    %v2537 = vsel %vm2529, %v2513, %v2128
    %v2538 = vld [vmem:[%s975] sm:$0xff]
    %v2539 = vld [vmem:[%s975 + $0x8] sm:$0xff]
    %v2540 = vld [vmem:[%s975 + $0x10] sm:$0xff]
    %v2541 = vld [vmem:[%s975 + $0x18] sm:$0xff]
    %v2542 = vld [vmem:[%s975 + $0x20] sm:$0xff]
    %v2543 = vld [vmem:[%s975 + $0x28] sm:$0xff]
    %v2544 = vld [vmem:[%s975 + $0x30] sm:$0xff]
    %v2545 = vld [vmem:[%s975 + $0x38] sm:$0xff]
    %v2546 = vld [vmem:[%s975 + $0x40] sm:$0xff]
    %v2547 = vld [vmem:[%s975 + $0x48] sm:$0xff]
    %v2548 = vld [vmem:[%s975 + $0x50] sm:$0xff]
    %v2549 = vld [vmem:[%s975 + $0x58] sm:$0xff]
    %v2550 = vld [vmem:[%s975 + $0x60] sm:$0xff]
    %v2551 = vld [vmem:[%s975 + $0x68] sm:$0xff]
    %v2552 = vld [vmem:[%s975 + $0x70] sm:$0xff]
    %v2553 = vld [vmem:[%s975 + $0x78] sm:$0xff]
    %v2554 = vld [vmem:[%s975 + $0x80] sm:$0xff]
    %v2555 = vld [vmem:[%s975 + $0x88] sm:$0xff]
    %v2556 = vld [vmem:[%s975 + $0x90] sm:$0xff]
    %v2557 = vld [vmem:[%s975 + $0x98] sm:$0xff]
    %v2558 = vld [vmem:[%s975 + $0xa0] sm:$0xff]
    %v2559 = vld [vmem:[%s975 + $0xa8] sm:$0xff]
    %v2560 = vld [vmem:[%s975 + $0xb0] sm:$0xff]
    %v2561 = vld [vmem:[%s975 + $0xb8] sm:$0xff]
    %2562 = vmatprep.subr.mxu0 0.0
    %2563 = vmatpush1.msra.mxu0 %v2530
    %2564 = vmatprep.subr.mxu0 0.0
    %2565 = vmatpush1.msra.mxu0 %v2531
    %2566 = vmatprep.subr.mxu0 0.0
    %2567 = vmatpush1.msra.mxu0 %v2532
    %2568 = vmatprep.subr.mxu0 0.0
    %2569 = vmatpush1.msra.mxu0 %v2533
    %2570 = vmatprep.subr.mxu0 0.0
    %2571 = vmatpush1.msra.mxu0 %v2534
    %2572 = vmatprep.subr.mxu0 0.0
    %2573 = vmatpush1.msra.mxu0 %v2535
    %2574 = vmatprep.subr.mxu0 0.0
    %2575 = vmatpush1.msra.mxu0 %v2536
    %2576 = vmatprep.subr.mxu0 0.0
    %2577 = vmatpush1.msra.mxu0 %v2537
    %2578 = vmatprep.subr.mxu0 0.0
    %2579 = vmatpush1.msra.mxu0 0.0
    %2580 = vmatprep.subr.mxu0 0.0
    %2581 = vmatpush1.msra.mxu0 0.0
    %2582 = vmatprep.subr.mxu0 0.0
    %2583 = vmatpush1.msra.mxu0 0.0
    %2584 = vmatprep.subr.mxu0 0.0
    %2585 = vmatpush1.msra.mxu0 0.0
    %2586 = vmatprep.subr.mxu0 0.0
    %2587 = vmatpush1.msra.mxu0 0.0
    %2588 = vmatprep.subr.mxu0 0.0
    %2589 = vmatpush1.msra.mxu0 0.0
    %2590 = vmatprep.subr.mxu0 0.0
    %2591 = vmatpush1.msra.mxu0 0.0
    %2592 = vmatprep.subr.mxu0 0.0
    %2593 = vmatpush1.msra.mxu0 0.0
    %2594 = vmatprep.subr.mxu0 0.0
    %2595 = vmatpush1.msra.mxu0 0.0
    %2596 = vmatprep.subr.mxu0 0.0
    %2597 = vmatpush1.msra.mxu0 0.0
    %2598 = vmatprep.subr.mxu0 0.0
    %2599 = vmatpush1.msra.mxu0 0.0
    %2600 = vmatprep.subr.mxu0 0.0
    %2601 = vmatpush1.msra.mxu0 0.0
    %2602 = vmatprep.subr.mxu0 0.0
    %2603 = vmatpush1.msra.mxu0 0.0
    %2604 = vmatprep.subr.mxu0 0.0
    %2605 = vmatpush1.msra.mxu0 0.0
    %2606 = vmatprep.subr.mxu0 0.0
    %2607 = vmatpush1.msra.mxu0 0.0
    %2608 = vmatprep.subr.mxu0 0.0
    %2609 = vmatpush1.msra.mxu0 0.0
    %2610 = vmatprep.subr.mxu0 0.0
    %2611 = vmatpush1.msra.mxu0 0.0
    %2612 = vmatprep.subr.mxu0 0.0
    %2613 = vmatpush1.msra.mxu0 0.0
    %2614 = vmatprep.subr.mxu0 0.0
    %2615 = vmatpush1.msra.mxu0 0.0
    %2616 = vmatprep.subr.mxu0 0.0
    %2617 = vmatpush1.msra.mxu0 0.0
    %2618 = vmatprep.subr.mxu0 0.0
    %2619 = vmatpush1.msra.mxu0 0.0
    %2620 = vmatprep.subr.mxu0 0.0
    %2621 = vmatpush1.msra.mxu0 0.0
    %2622 = vmatprep.subr.mxu0 0.0
    %2623 = vmatpush1.msra.mxu0 0.0
    %2624 = vmatprep.subr.mxu0 0.0
    %2625 = vmatpush1.msra.mxu0 0.0
    %2626 = vmatprep.mubr.f32.mxu0 0.0
    %2627 = vmatmul.mubr.f32.gmra.mrb[0].mxu0 %v1669
    %v2628 = vpop.f32.mrb[0].mxu0
    %v2629 = vadd.f32 0.0, %v2628
    %v2630 = vpop.f32.mrb[0].mxu0
    %2631 = vmatprep.mubr.f32.mxu0 0.0
    %2632 = vmatmul.mubr.f32.gmra.mrb[0].mxu0 %v1672
    %v2633 = vpop.f32.mrb[0].mxu0
    %v2634 = vadd.f32 0.0, %v2633
    %v2635 = vpop.f32.mrb[0].mxu0
    %2636 = vmatprep.mubr.f32.mxu0 0.0
    %2637 = vmatmul.mubr.f32.gmra.mrb[0].mxu0 %v1675
    %v2638 = vpop.f32.mrb[0].mxu0
    %v2639 = vadd.f32 0.0, %v2638
    %v2640 = vpop.f32.mrb[0].mxu0
    %2641 = vmatprep.mubr.f32.mxu0 0.0
    %2642 = vmatmul.mubr.f32.gmra.mrb[0].mxu0 %v1678
    %v2643 = vpop.f32.mrb[0].mxu0
    %v2644 = vadd.f32 0.0, %v2643
    %v2645 = vpop.f32.mrb[0].mxu0
    %2646 = vmatprep.mubr.f32.mxu0 0.0
    %2647 = vmatmul.mubr.f32.gmra.mrb[0].mxu0 %v1681
    %v2648 = vpop.f32.mrb[0].mxu0
    %v2649 = vadd.f32 0.0, %v2648
    %v2650 = vpop.f32.mrb[0].mxu0
    %2651 = vmatprep.mubr.f32.mxu0 0.0
    %2652 = vmatmul.mubr.f32.gmra.mrb[0].mxu0 %v1684
    %v2653 = vpop.f32.mrb[0].mxu0
    %v2654 = vadd.f32 0.0, %v2653
    %v2655 = vpop.f32.mrb[0].mxu0
    %2656 = vmatprep.mubr.f32.mxu0 0.0
    %2657 = vmatmul.mubr.f32.gmra.mrb[0].mxu0 %v1687
    %v2658 = vpop.f32.mrb[0].mxu0
    %v2659 = vadd.f32 0.0, %v2658
    %v2660 = vpop.f32.mrb[0].mxu0
    %2661 = vmatprep.mubr.f32.mxu0 0.0
    %2662 = vmatmul.mubr.f32.gmra.mrb[0].mxu0 %v1690
    %v2663 = vpop.f32.mrb[0].mxu0
    %v2664 = vadd.f32 0.0, %v2663
    %v2665 = vpop.f32.mrb[0].mxu0
    %2666 = vmatprep.mubr.f32.mxu0 0.0
    %2667 = vmatmul.mubr.f32.gmra.mrb[0].mxu0 %v1693
    %v2668 = vpop.f32.mrb[0].mxu0
    %v2669 = vadd.f32 0.0, %v2668
    %v2670 = vpop.f32.mrb[0].mxu0
    %2671 = vmatprep.mubr.f32.mxu0 0.0
    %2672 = vmatmul.mubr.f32.gmra.mrb[0].mxu0 %v1696
    %v2673 = vpop.f32.mrb[0].mxu0
    %v2674 = vadd.f32 0.0, %v2673
    %v2675 = vpop.f32.mrb[0].mxu0
    %2676 = vmatprep.mubr.f32.mxu0 0.0
    %2677 = vmatmul.mubr.f32.gmra.mrb[0].mxu0 %v1699
    %v2678 = vpop.f32.mrb[0].mxu0
    %v2679 = vadd.f32 0.0, %v2678
    %v2680 = vpop.f32.mrb[0].mxu0
    %2681 = vmatprep.mubr.f32.mxu0 0.0
    %2682 = vmatmul.mubr.f32.gmra.mrb[0].mxu0 %v1702
    %v2683 = vpop.f32.mrb[0].mxu0
    %v2684 = vadd.f32 0.0, %v2683
    %v2685 = vpop.f32.mrb[0].mxu0
    %2686 = vmatprep.mubr.f32.mxu0 0.0
    %2687 = vmatmul.mubr.f32.gmra.mrb[0].mxu0 %v1705
    %v2688 = vpop.f32.mrb[0].mxu0
    %v2689 = vadd.f32 0.0, %v2688
    %v2690 = vpop.f32.mrb[0].mxu0
    %2691 = vmatprep.mubr.f32.mxu0 0.0
    %2692 = vmatmul.mubr.f32.gmra.mrb[0].mxu0 %v1708
    %v2693 = vpop.f32.mrb[0].mxu0
    %v2694 = vadd.f32 0.0, %v2693
    %v2695 = vpop.f32.mrb[0].mxu0
    %2696 = vmatprep.mubr.f32.mxu0 0.0
    %2697 = vmatmul.mubr.f32.gmra.mrb[0].mxu0 %v1711
    %v2698 = vpop.f32.mrb[0].mxu0
    %v2699 = vadd.f32 0.0, %v2698
    %v2700 = vpop.f32.mrb[0].mxu0
    %2701 = vmatprep.mubr.f32.mxu0 0.0
    %2702 = vmatmul.mubr.f32.gmra.mrb[0].mxu0 %v1714
    %v2703 = vpop.f32.mrb[0].mxu0
    %v2704 = vadd.f32 0.0, %v2703
    %v2705 = vpop.f32.mrb[0].mxu0
    %2706 = vmatprep.mubr.f32.mxu0 0.0
    %2707 = vmatmul.mubr.f32.gmra.mrb[0].mxu0 %v1717
    %v2708 = vpop.f32.mrb[0].mxu0
    %v2709 = vadd.f32 0.0, %v2708
    %v2710 = vpop.f32.mrb[0].mxu0
    %2711 = vmatprep.mubr.f32.mxu0 0.0
    %2712 = vmatmul.mubr.f32.gmra.mrb[0].mxu0 %v1720
    %v2713 = vpop.f32.mrb[0].mxu0
    %v2714 = vadd.f32 0.0, %v2713
    %v2715 = vpop.f32.mrb[0].mxu0
    %2716 = vmatprep.mubr.f32.mxu0 0.0
    %2717 = vmatmul.mubr.f32.gmra.mrb[0].mxu0 %v1723
    %v2718 = vpop.f32.mrb[0].mxu0
    %v2719 = vadd.f32 0.0, %v2718
    %v2720 = vpop.f32.mrb[0].mxu0
    %2721 = vmatprep.mubr.f32.mxu0 0.0
    %2722 = vmatmul.mubr.f32.gmra.mrb[0].mxu0 %v1726
    %v2723 = vpop.f32.mrb[0].mxu0
    %v2724 = vadd.f32 0.0, %v2723
    %v2725 = vpop.f32.mrb[0].mxu0
    %2726 = vmatprep.mubr.f32.mxu0 0.0
    %2727 = vmatmul.mubr.f32.gmra.mrb[0].mxu0 %v1729
    %v2728 = vpop.f32.mrb[0].mxu0
    %v2729 = vadd.f32 0.0, %v2728
    %v2730 = vpop.f32.mrb[0].mxu0
    %2731 = vmatprep.mubr.f32.mxu0 0.0
    %2732 = vmatmul.mubr.f32.gmra.mrb[0].mxu0 %v1732
    %v2733 = vpop.f32.mrb[0].mxu0
    %v2734 = vadd.f32 0.0, %v2733
    %v2735 = vpop.f32.mrb[0].mxu0
    %2736 = vmatprep.mubr.f32.mxu0 0.0
    %2737 = vmatmul.mubr.f32.gmra.mrb[0].mxu0 %v1735
    %v2738 = vpop.f32.mrb[0].mxu0
    %v2739 = vadd.f32 0.0, %v2738
    %v2740 = vpop.f32.mrb[0].mxu0
    %2741 = vmatprep.mubr.f32.mxu0 0.0
    %2742 = vmatmul.mubr.f32.gmra.mrb[0].mxu0 %v1738
    %v2743 = vpop.f32.mrb[0].mxu0
    %v2744 = vadd.f32 0.0, %v2743
    %v2745 = vpop.f32.mrb[0].mxu0
    %2746 = vdwg.mxu0
    %v2747 = vadd.f32 %v2538, %v2629
    %v2748 = vadd.f32 %v2539, %v2634
    %v2749 = vadd.f32 %v2540, %v2639
    %v2750 = vadd.f32 %v2541, %v2644
    %v2751 = vadd.f32 %v2542, %v2649
    %v2752 = vadd.f32 %v2543, %v2654
    %v2753 = vadd.f32 %v2544, %v2659
    %v2754 = vadd.f32 %v2545, %v2664
    %v2755 = vxor.u32 %v2747, 2147483648
    %v2756 = vxor.u32 %v2748, 2147483648
    %v2757 = vxor.u32 %v2749, 2147483648
    %v2758 = vxor.u32 %v2750, 2147483648
    %v2759 = vxor.u32 %v2751, 2147483648
    %v2760 = vxor.u32 %v2752, 2147483648
    %v2761 = vxor.u32 %v2753, 2147483648
    %v2762 = vxor.u32 %v2754, 2147483648
    %v2763 = vmul.f32 %v2755, 1.442695
    %v2764 = vpow.pop %v2763
    %v2765 = vmul.f32 %v2756, 1.442695
    %v2766 = vpow.pop %v2765
    %v2767 = vmul.f32 %v2757, 1.442695
    %v2768 = vpow.pop %v2767
    %v2769 = vmul.f32 %v2758, 1.442695
    %v2770 = vpow.pop %v2769
    %v2771 = vmul.f32 %v2759, 1.442695
    %v2772 = vpow.pop %v2771
    %v2773 = vmul.f32 %v2760, 1.442695
    %v2774 = vpow.pop %v2773
    %v2775 = vmul.f32 %v2761, 1.442695
    %v2776 = vpow.pop %v2775
    %v2777 = vmul.f32 %v2762, 1.442695
    %v2778 = vpow.pop %v2777
    %v2779 = vadd.f32 %v2764, 1.0
    %v2780 = vadd.f32 %v2766, 1.0
    %v2781 = vadd.f32 %v2768, 1.0
    %v2782 = vadd.f32 %v2770, 1.0
    %v2783 = vadd.f32 %v2772, 1.0
    %v2784 = vadd.f32 %v2774, 1.0
    %v2785 = vadd.f32 %v2776, 1.0
    %v2786 = vadd.f32 %v2778, 1.0
    %v2787 = vrcp.pop %v2779
    %v2788 = vmul.f32 1.0, %v2787
    %v2789 = vrcp.pop %v2780
    %v2790 = vmul.f32 1.0, %v2789
    %v2791 = vrcp.pop %v2781
    %v2792 = vmul.f32 1.0, %v2791
    %v2793 = vrcp.pop %v2782
    %v2794 = vmul.f32 1.0, %v2793
    %v2795 = vrcp.pop %v2783
    %v2796 = vmul.f32 1.0, %v2795
    %v2797 = vrcp.pop %v2784
    %v2798 = vmul.f32 1.0, %v2797
    %v2799 = vrcp.pop %v2785
    %v2800 = vmul.f32 1.0, %v2799
    %v2801 = vrcp.pop %v2786
    %v2802 = vmul.f32 1.0, %v2801
    %v2803 = vadd.f32 %v2546, %v2669
    %v2804 = vadd.f32 %v2547, %v2674
    %v2805 = vadd.f32 %v2548, %v2679
    %v2806 = vadd.f32 %v2549, %v2684
    %v2807 = vadd.f32 %v2550, %v2689
    %v2808 = vadd.f32 %v2551, %v2694
    %v2809 = vadd.f32 %v2552, %v2699
    %v2810 = vadd.f32 %v2553, %v2704
    %v2811 = vxor.u32 %v2803, 2147483648
    %v2812 = vxor.u32 %v2804, 2147483648
    %v2813 = vxor.u32 %v2805, 2147483648
    %v2814 = vxor.u32 %v2806, 2147483648
    %v2815 = vxor.u32 %v2807, 2147483648
    %v2816 = vxor.u32 %v2808, 2147483648
    %v2817 = vxor.u32 %v2809, 2147483648
    %v2818 = vxor.u32 %v2810, 2147483648
    %v2819 = vmul.f32 %v2811, 1.442695
    %v2820 = vpow.pop %v2819
    %v2821 = vmul.f32 %v2812, 1.442695
    %v2822 = vpow.pop %v2821
    %v2823 = vmul.f32 %v2813, 1.442695
    %v2824 = vpow.pop %v2823
    %v2825 = vmul.f32 %v2814, 1.442695
    %v2826 = vpow.pop %v2825
    %v2827 = vmul.f32 %v2815, 1.442695
    %v2828 = vpow.pop %v2827
    %v2829 = vmul.f32 %v2816, 1.442695
    %v2830 = vpow.pop %v2829
    %v2831 = vmul.f32 %v2817, 1.442695
    %v2832 = vpow.pop %v2831
    %v2833 = vmul.f32 %v2818, 1.442695
    %v2834 = vpow.pop %v2833
    %v2835 = vadd.f32 %v2820, 1.0
    %v2836 = vadd.f32 %v2822, 1.0
    %v2837 = vadd.f32 %v2824, 1.0
    %v2838 = vadd.f32 %v2826, 1.0
    %v2839 = vadd.f32 %v2828, 1.0
    %v2840 = vadd.f32 %v2830, 1.0
    %v2841 = vadd.f32 %v2832, 1.0
    %v2842 = vadd.f32 %v2834, 1.0
    %v2843 = vrcp.pop %v2835
    %v2844 = vmul.f32 1.0, %v2843
    %v2845 = vrcp.pop %v2836
    %v2846 = vmul.f32 1.0, %v2845
    %v2847 = vrcp.pop %v2837
    %v2848 = vmul.f32 1.0, %v2847
    %v2849 = vrcp.pop %v2838
    %v2850 = vmul.f32 1.0, %v2849
    %v2851 = vrcp.pop %v2839
    %v2852 = vmul.f32 1.0, %v2851
    %v2853 = vrcp.pop %v2840
    %v2854 = vmul.f32 1.0, %v2853
    %v2855 = vrcp.pop %v2841
    %v2856 = vmul.f32 1.0, %v2855
    %v2857 = vrcp.pop %v2842
    %v2858 = vmul.f32 1.0, %v2857
    %v2859 = vadd.f32 %v2709, %v228
    %v2860 = vadd.f32 %v2714, %v233
    %v2861 = vadd.f32 %v2719, %v238
    %v2862 = vadd.f32 %v2724, %v243
    %v2863 = vadd.f32 %v2729, %v248
    %v2864 = vadd.f32 %v2734, %v253
    %v2865 = vadd.f32 %v2739, %v258
    %v2866 = vadd.f32 %v2744, %v263
    %v2867 = vmul.f32 %v2788, %v2859
    %v2868 = vmul.f32 %v2790, %v2860
    %v2869 = vmul.f32 %v2792, %v2861
    %v2870 = vmul.f32 %v2794, %v2862
    %v2871 = vmul.f32 %v2796, %v2863
    %v2872 = vmul.f32 %v2798, %v2864
    %v2873 = vmul.f32 %v2800, %v2865
    %v2874 = vmul.f32 %v2802, %v2866
    %v2875 = vadd.f32 %v2554, %v2867
    %v2876 = vadd.f32 %v2555, %v2868
    %v2877 = vadd.f32 %v2556, %v2869
    %v2878 = vadd.f32 %v2557, %v2870
    %v2879 = vadd.f32 %v2558, %v2871
    %v2880 = vadd.f32 %v2559, %v2872
    %v2881 = vadd.f32 %v2560, %v2873
    %v2882 = vadd.f32 %v2561, %v2874
    %v2883 = vtanh.pop %v2875
    %v2884 = vtanh.pop %v2876
    %v2885 = vtanh.pop %v2877
    %v2886 = vtanh.pop %v2878
    %v2887 = vtanh.pop %v2879
    %v2888 = vtanh.pop %v2880
    %v2889 = vtanh.pop %v2881
    %v2890 = vtanh.pop %v2882
    %v2891 = vsub.f32 1.0, %v2844
    %v2892 = vsub.f32 1.0, %v2846
    %v2893 = vsub.f32 1.0, %v2848
    %v2894 = vsub.f32 1.0, %v2850
    %v2895 = vsub.f32 1.0, %v2852
    %v2896 = vsub.f32 1.0, %v2854
    %v2897 = vsub.f32 1.0, %v2856
    %v2898 = vsub.f32 1.0, %v2858
    %v2899 = vmul.f32 %v2891, %v2883
    %v2900 = vmul.f32 %v2892, %v2884
    %v2901 = vmul.f32 %v2893, %v2885
    %v2902 = vmul.f32 %v2894, %v2886
    %v2903 = vmul.f32 %v2895, %v2887
    %v2904 = vmul.f32 %v2896, %v2888
    %v2905 = vmul.f32 %v2897, %v2889
    %v2906 = vmul.f32 %v2898, %v2890
    %v2907 = vmul.f32 %v2844, %v2530
    %v2908 = vmul.f32 %v2846, %v2531
    %v2909 = vmul.f32 %v2848, %v2532
    %v2910 = vmul.f32 %v2850, %v2533
    %v2911 = vmul.f32 %v2852, %v2534
    %v2912 = vmul.f32 %v2854, %v2535
    %v2913 = vmul.f32 %v2856, %v2536
    %v2914 = vmul.f32 %v2858, %v2537
    %v2915 = vadd.f32 %v2899, %v2907
    %v2916 = vadd.f32 %v2900, %v2908
    %v2917 = vadd.f32 %v2901, %v2909
    %v2918 = vadd.f32 %v2902, %v2910
    %v2919 = vadd.f32 %v2903, %v2911
    %v2920 = vadd.f32 %v2904, %v2912
    %v2921 = vadd.f32 %v2905, %v2913
    %v2922 = vadd.f32 %v2906, %v2914
    %v2923 = vsel %vm274, 2, 3
    %v2924 = vsel %vm275, 2, 3
    %v2925 = vsel %vm276, 2, 3
    %v2926 = vsel %vm277, 2, 3
    %v2927 = vsel %vm278, 2, 3
    %v2928 = vsel %vm279, 2, 3
    %v2929 = vsel %vm280, 2, 3
    %v2930 = vsel %vm281, 2, 3
    %vm2931 = vcmp.lt.s32.totalorder %v2923, %v2112
    %vm2932 = vcmp.lt.s32.totalorder %v2924, %v2112
    %vm2933 = vcmp.lt.s32.totalorder %v2925, %v2112
    %vm2934 = vcmp.lt.s32.totalorder %v2926, %v2112
    %vm2935 = vcmp.lt.s32.totalorder %v2927, %v2112
    %vm2936 = vcmp.lt.s32.totalorder %v2928, %v2112
    %vm2937 = vcmp.lt.s32.totalorder %v2929, %v2112
    %vm2938 = vcmp.lt.s32.totalorder %v2930, %v2112
    %v2939 = vsel %vm2931, %v2915, %v2530
    %v2940 = vsel %vm2932, %v2916, %v2531
    %v2941 = vsel %vm2933, %v2917, %v2532
    %v2942 = vsel %vm2934, %v2918, %v2533
    %v2943 = vsel %vm2935, %v2919, %v2534
    %v2944 = vsel %vm2936, %v2920, %v2535
    %v2945 = vsel %vm2937, %v2921, %v2536
    %v2946 = vsel %vm2938, %v2922, %v2537
    %v2947 = vld [vmem:[%s988] sm:$0xff]
    %v2948 = vld [vmem:[%s988 + $0x8] sm:$0xff]
    %v2949 = vld [vmem:[%s988 + $0x10] sm:$0xff]
    %v2950 = vld [vmem:[%s988 + $0x18] sm:$0xff]
    %v2951 = vld [vmem:[%s988 + $0x20] sm:$0xff]
    %v2952 = vld [vmem:[%s988 + $0x28] sm:$0xff]
    %v2953 = vld [vmem:[%s988 + $0x30] sm:$0xff]
    %v2954 = vld [vmem:[%s988 + $0x38] sm:$0xff]
    %v2955 = vld [vmem:[%s988 + $0x40] sm:$0xff]
    %v2956 = vld [vmem:[%s988 + $0x48] sm:$0xff]
    %v2957 = vld [vmem:[%s988 + $0x50] sm:$0xff]
    %v2958 = vld [vmem:[%s988 + $0x58] sm:$0xff]
    %v2959 = vld [vmem:[%s988 + $0x60] sm:$0xff]
    %v2960 = vld [vmem:[%s988 + $0x68] sm:$0xff]
    %v2961 = vld [vmem:[%s988 + $0x70] sm:$0xff]
    %v2962 = vld [vmem:[%s988 + $0x78] sm:$0xff]
    %v2963 = vld [vmem:[%s988 + $0x80] sm:$0xff]
    %v2964 = vld [vmem:[%s988 + $0x88] sm:$0xff]
    %v2965 = vld [vmem:[%s988 + $0x90] sm:$0xff]
    %v2966 = vld [vmem:[%s988 + $0x98] sm:$0xff]
    %v2967 = vld [vmem:[%s988 + $0xa0] sm:$0xff]
    %v2968 = vld [vmem:[%s988 + $0xa8] sm:$0xff]
    %v2969 = vld [vmem:[%s988 + $0xb0] sm:$0xff]
    %v2970 = vld [vmem:[%s988 + $0xb8] sm:$0xff]
    %2971 = vmatprep.subr.mxu0 0.0
    %2972 = vmatpush1.msra.mxu0 %v2939
    %2973 = vmatprep.subr.mxu0 0.0
    %2974 = vmatpush1.msra.mxu0 %v2940
    %2975 = vmatprep.subr.mxu0 0.0
    %2976 = vmatpush1.msra.mxu0 %v2941
    %2977 = vmatprep.subr.mxu0 0.0
    %2978 = vmatpush1.msra.mxu0 %v2942
    %2979 = vmatprep.subr.mxu0 0.0
    %2980 = vmatpush1.msra.mxu0 %v2943
    %2981 = vmatprep.subr.mxu0 0.0
    %2982 = vmatpush1.msra.mxu0 %v2944
    %2983 = vmatprep.subr.mxu0 0.0
    %2984 = vmatpush1.msra.mxu0 %v2945
    %2985 = vmatprep.subr.mxu0 0.0
    %2986 = vmatpush1.msra.mxu0 %v2946
    %2987 = vmatprep.subr.mxu0 0.0
    %2988 = vmatpush1.msra.mxu0 0.0
    %2989 = vmatprep.subr.mxu0 0.0
    %2990 = vmatpush1.msra.mxu0 0.0
    %2991 = vmatprep.subr.mxu0 0.0
    %2992 = vmatpush1.msra.mxu0 0.0
    %2993 = vmatprep.subr.mxu0 0.0
    %2994 = vmatpush1.msra.mxu0 0.0
    %2995 = vmatprep.subr.mxu0 0.0
    %2996 = vmatpush1.msra.mxu0 0.0
    %2997 = vmatprep.subr.mxu0 0.0
    %2998 = vmatpush1.msra.mxu0 0.0
    %2999 = vmatprep.subr.mxu0 0.0
    %3000 = vmatpush1.msra.mxu0 0.0
    %3001 = vmatprep.subr.mxu0 0.0
    %3002 = vmatpush1.msra.mxu0 0.0
    %3003 = vmatprep.subr.mxu0 0.0
    %3004 = vmatpush1.msra.mxu0 0.0
    %3005 = vmatprep.subr.mxu0 0.0
    %3006 = vmatpush1.msra.mxu0 0.0
    %3007 = vmatprep.subr.mxu0 0.0
    %3008 = vmatpush1.msra.mxu0 0.0
    %3009 = vmatprep.subr.mxu0 0.0
    %3010 = vmatpush1.msra.mxu0 0.0
    %3011 = vmatprep.subr.mxu0 0.0
    %3012 = vmatpush1.msra.mxu0 0.0
    %3013 = vmatprep.subr.mxu0 0.0
    %3014 = vmatpush1.msra.mxu0 0.0
    %3015 = vmatprep.subr.mxu0 0.0
    %3016 = vmatpush1.msra.mxu0 0.0
    %3017 = vmatprep.subr.mxu0 0.0
    %3018 = vmatpush1.msra.mxu0 0.0
    %3019 = vmatprep.subr.mxu0 0.0
    %3020 = vmatpush1.msra.mxu0 0.0
    %3021 = vmatprep.subr.mxu0 0.0
    %3022 = vmatpush1.msra.mxu0 0.0
    %3023 = vmatprep.subr.mxu0 0.0
    %3024 = vmatpush1.msra.mxu0 0.0
    %3025 = vmatprep.subr.mxu0 0.0
    %3026 = vmatpush1.msra.mxu0 0.0
    %3027 = vmatprep.subr.mxu0 0.0
    %3028 = vmatpush1.msra.mxu0 0.0
    %3029 = vmatprep.subr.mxu0 0.0
    %3030 = vmatpush1.msra.mxu0 0.0
    %3031 = vmatprep.subr.mxu0 0.0
    %3032 = vmatpush1.msra.mxu0 0.0
    %3033 = vmatprep.subr.mxu0 0.0
    %3034 = vmatpush1.msra.mxu0 0.0
    %3035 = vmatprep.mubr.f32.mxu0 0.0
    %3036 = vmatmul.mubr.f32.gmra.mrb[0].mxu0 %v1669
    %v3037 = vpop.f32.mrb[0].mxu0
    %v3038 = vadd.f32 0.0, %v3037
    %v3039 = vpop.f32.mrb[0].mxu0
    %3040 = vmatprep.mubr.f32.mxu0 0.0
    %3041 = vmatmul.mubr.f32.gmra.mrb[0].mxu0 %v1672
    %v3042 = vpop.f32.mrb[0].mxu0
    %v3043 = vadd.f32 0.0, %v3042
    %v3044 = vpop.f32.mrb[0].mxu0
    %3045 = vmatprep.mubr.f32.mxu0 0.0
    %3046 = vmatmul.mubr.f32.gmra.mrb[0].mxu0 %v1675
    %v3047 = vpop.f32.mrb[0].mxu0
    %v3048 = vadd.f32 0.0, %v3047
    %v3049 = vpop.f32.mrb[0].mxu0
    %3050 = vmatprep.mubr.f32.mxu0 0.0
    %3051 = vmatmul.mubr.f32.gmra.mrb[0].mxu0 %v1678
    %v3052 = vpop.f32.mrb[0].mxu0
    %v3053 = vadd.f32 0.0, %v3052
    %v3054 = vpop.f32.mrb[0].mxu0
    %3055 = vmatprep.mubr.f32.mxu0 0.0
    %3056 = vmatmul.mubr.f32.gmra.mrb[0].mxu0 %v1681
    %v3057 = vpop.f32.mrb[0].mxu0
    %v3058 = vadd.f32 0.0, %v3057
    %v3059 = vpop.f32.mrb[0].mxu0
    %3060 = vmatprep.mubr.f32.mxu0 0.0
    %3061 = vmatmul.mubr.f32.gmra.mrb[0].mxu0 %v1684
    %v3062 = vpop.f32.mrb[0].mxu0
    %v3063 = vadd.f32 0.0, %v3062
    %v3064 = vpop.f32.mrb[0].mxu0
    %3065 = vmatprep.mubr.f32.mxu0 0.0
    %3066 = vmatmul.mubr.f32.gmra.mrb[0].mxu0 %v1687
    %v3067 = vpop.f32.mrb[0].mxu0
    %v3068 = vadd.f32 0.0, %v3067
    %v3069 = vpop.f32.mrb[0].mxu0
    %3070 = vmatprep.mubr.f32.mxu0 0.0
    %3071 = vmatmul.mubr.f32.gmra.mrb[0].mxu0 %v1690
    %v3072 = vpop.f32.mrb[0].mxu0
    %v3073 = vadd.f32 0.0, %v3072
    %v3074 = vpop.f32.mrb[0].mxu0
    %3075 = vmatprep.mubr.f32.mxu0 0.0
    %3076 = vmatmul.mubr.f32.gmra.mrb[0].mxu0 %v1693
    %v3077 = vpop.f32.mrb[0].mxu0
    %v3078 = vadd.f32 0.0, %v3077
    %v3079 = vpop.f32.mrb[0].mxu0
    %3080 = vmatprep.mubr.f32.mxu0 0.0
    %3081 = vmatmul.mubr.f32.gmra.mrb[0].mxu0 %v1696
    %v3082 = vpop.f32.mrb[0].mxu0
    %v3083 = vadd.f32 0.0, %v3082
    %v3084 = vpop.f32.mrb[0].mxu0
    %3085 = vmatprep.mubr.f32.mxu0 0.0
    %3086 = vmatmul.mubr.f32.gmra.mrb[0].mxu0 %v1699
    %v3087 = vpop.f32.mrb[0].mxu0
    %v3088 = vadd.f32 0.0, %v3087
    %v3089 = vpop.f32.mrb[0].mxu0
    %3090 = vmatprep.mubr.f32.mxu0 0.0
    %3091 = vmatmul.mubr.f32.gmra.mrb[0].mxu0 %v1702
    %v3092 = vpop.f32.mrb[0].mxu0
    %v3093 = vadd.f32 0.0, %v3092
    %v3094 = vpop.f32.mrb[0].mxu0
    %3095 = vmatprep.mubr.f32.mxu0 0.0
    %3096 = vmatmul.mubr.f32.gmra.mrb[0].mxu0 %v1705
    %v3097 = vpop.f32.mrb[0].mxu0
    %v3098 = vadd.f32 0.0, %v3097
    %v3099 = vpop.f32.mrb[0].mxu0
    %3100 = vmatprep.mubr.f32.mxu0 0.0
    %3101 = vmatmul.mubr.f32.gmra.mrb[0].mxu0 %v1708
    %v3102 = vpop.f32.mrb[0].mxu0
    %v3103 = vadd.f32 0.0, %v3102
    %v3104 = vpop.f32.mrb[0].mxu0
    %3105 = vmatprep.mubr.f32.mxu0 0.0
    %3106 = vmatmul.mubr.f32.gmra.mrb[0].mxu0 %v1711
    %v3107 = vpop.f32.mrb[0].mxu0
    %v3108 = vadd.f32 0.0, %v3107
    %v3109 = vpop.f32.mrb[0].mxu0
    %3110 = vmatprep.mubr.f32.mxu0 0.0
    %3111 = vmatmul.mubr.f32.gmra.mrb[0].mxu0 %v1714
    %v3112 = vpop.f32.mrb[0].mxu0
    %v3113 = vadd.f32 0.0, %v3112
    %v3114 = vpop.f32.mrb[0].mxu0
    %3115 = vmatprep.mubr.f32.mxu0 0.0
    %3116 = vmatmul.mubr.f32.gmra.mrb[0].mxu0 %v1717
    %v3117 = vpop.f32.mrb[0].mxu0
    %v3118 = vadd.f32 0.0, %v3117
    %v3119 = vpop.f32.mrb[0].mxu0
    %3120 = vmatprep.mubr.f32.mxu0 0.0
    %3121 = vmatmul.mubr.f32.gmra.mrb[0].mxu0 %v1720
    %v3122 = vpop.f32.mrb[0].mxu0
    %v3123 = vadd.f32 0.0, %v3122
    %v3124 = vpop.f32.mrb[0].mxu0
    %3125 = vmatprep.mubr.f32.mxu0 0.0
    %3126 = vmatmul.mubr.f32.gmra.mrb[0].mxu0 %v1723
    %v3127 = vpop.f32.mrb[0].mxu0
    %v3128 = vadd.f32 0.0, %v3127
    %v3129 = vpop.f32.mrb[0].mxu0
    %3130 = vmatprep.mubr.f32.mxu0 0.0
    %3131 = vmatmul.mubr.f32.gmra.mrb[0].mxu0 %v1726
    %v3132 = vpop.f32.mrb[0].mxu0
    %v3133 = vadd.f32 0.0, %v3132
    %v3134 = vpop.f32.mrb[0].mxu0
    %3135 = vmatprep.mubr.f32.mxu0 0.0
    %3136 = vmatmul.mubr.f32.gmra.mrb[0].mxu0 %v1729
    %v3137 = vpop.f32.mrb[0].mxu0
    %v3138 = vadd.f32 0.0, %v3137
    %v3139 = vpop.f32.mrb[0].mxu0
    %3140 = vmatprep.mubr.f32.mxu0 0.0
    %3141 = vmatmul.mubr.f32.gmra.mrb[0].mxu0 %v1732
    %v3142 = vpop.f32.mrb[0].mxu0
    %v3143 = vadd.f32 0.0, %v3142
    %v3144 = vpop.f32.mrb[0].mxu0
    %3145 = vmatprep.mubr.f32.mxu0 0.0
    %3146 = vmatmul.mubr.f32.gmra.mrb[0].mxu0 %v1735
    %v3147 = vpop.f32.mrb[0].mxu0
    %v3148 = vadd.f32 0.0, %v3147
    %v3149 = vpop.f32.mrb[0].mxu0
    %3150 = vmatprep.mubr.f32.mxu0 0.0
    %3151 = vmatmul.mubr.f32.gmra.mrb[0].mxu0 %v1738
    %v3152 = vpop.f32.mrb[0].mxu0
    %v3153 = vadd.f32 0.0, %v3152
    %v3154 = vpop.f32.mrb[0].mxu0
    %3155 = vdwg.mxu0
    %v3156 = vadd.f32 %v2947, %v3038
    %v3157 = vadd.f32 %v2948, %v3043
    %v3158 = vadd.f32 %v2949, %v3048
    %v3159 = vadd.f32 %v2950, %v3053
    %v3160 = vadd.f32 %v2951, %v3058
    %v3161 = vadd.f32 %v2952, %v3063
    %v3162 = vadd.f32 %v2953, %v3068
    %v3163 = vadd.f32 %v2954, %v3073
    %v3164 = vxor.u32 %v3156, 2147483648
    %v3165 = vxor.u32 %v3157, 2147483648
    %v3166 = vxor.u32 %v3158, 2147483648
    %v3167 = vxor.u32 %v3159, 2147483648
    %v3168 = vxor.u32 %v3160, 2147483648
    %v3169 = vxor.u32 %v3161, 2147483648
    %v3170 = vxor.u32 %v3162, 2147483648
    %v3171 = vxor.u32 %v3163, 2147483648
    %v3172 = vmul.f32 %v3164, 1.442695
    %v3173 = vpow.pop %v3172
    %v3174 = vmul.f32 %v3165, 1.442695
    %v3175 = vpow.pop %v3174
    %v3176 = vmul.f32 %v3166, 1.442695
    %v3177 = vpow.pop %v3176
    %v3178 = vmul.f32 %v3167, 1.442695
    %v3179 = vpow.pop %v3178
    %v3180 = vmul.f32 %v3168, 1.442695
    %v3181 = vpow.pop %v3180
    %v3182 = vmul.f32 %v3169, 1.442695
    %v3183 = vpow.pop %v3182
    %v3184 = vmul.f32 %v3170, 1.442695
    %v3185 = vpow.pop %v3184
    %v3186 = vmul.f32 %v3171, 1.442695
    %v3187 = vpow.pop %v3186
    %v3188 = vadd.f32 %v3173, 1.0
    %v3189 = vadd.f32 %v3175, 1.0
    %v3190 = vadd.f32 %v3177, 1.0
    %v3191 = vadd.f32 %v3179, 1.0
    %v3192 = vadd.f32 %v3181, 1.0
    %v3193 = vadd.f32 %v3183, 1.0
    %v3194 = vadd.f32 %v3185, 1.0
    %v3195 = vadd.f32 %v3187, 1.0
    %v3196 = vrcp.pop %v3188
    %v3197 = vmul.f32 1.0, %v3196
    %v3198 = vrcp.pop %v3189
    %v3199 = vmul.f32 1.0, %v3198
    %v3200 = vrcp.pop %v3190
    %v3201 = vmul.f32 1.0, %v3200
    %v3202 = vrcp.pop %v3191
    %v3203 = vmul.f32 1.0, %v3202
    %v3204 = vrcp.pop %v3192
    %v3205 = vmul.f32 1.0, %v3204
    %v3206 = vrcp.pop %v3193
    %v3207 = vmul.f32 1.0, %v3206
    %v3208 = vrcp.pop %v3194
    %v3209 = vmul.f32 1.0, %v3208
    %v3210 = vrcp.pop %v3195
    %v3211 = vmul.f32 1.0, %v3210
    %v3212 = vadd.f32 %v2955, %v3078
    %v3213 = vadd.f32 %v2956, %v3083
    %v3214 = vadd.f32 %v2957, %v3088
    %v3215 = vadd.f32 %v2958, %v3093
    %v3216 = vadd.f32 %v2959, %v3098
    %v3217 = vadd.f32 %v2960, %v3103
    %v3218 = vadd.f32 %v2961, %v3108
    %v3219 = vadd.f32 %v2962, %v3113
    %v3220 = vxor.u32 %v3212, 2147483648
    %v3221 = vxor.u32 %v3213, 2147483648
    %v3222 = vxor.u32 %v3214, 2147483648
    %v3223 = vxor.u32 %v3215, 2147483648
    %v3224 = vxor.u32 %v3216, 2147483648
    %v3225 = vxor.u32 %v3217, 2147483648
    %v3226 = vxor.u32 %v3218, 2147483648
    %v3227 = vxor.u32 %v3219, 2147483648
    %v3228 = vmul.f32 %v3220, 1.442695
    %v3229 = vpow.pop %v3228
    %v3230 = vmul.f32 %v3221, 1.442695
    %v3231 = vpow.pop %v3230
    %v3232 = vmul.f32 %v3222, 1.442695
    %v3233 = vpow.pop %v3232
    %v3234 = vmul.f32 %v3223, 1.442695
    %v3235 = vpow.pop %v3234
    %v3236 = vmul.f32 %v3224, 1.442695
    %v3237 = vpow.pop %v3236
    %v3238 = vmul.f32 %v3225, 1.442695
    %v3239 = vpow.pop %v3238
    %v3240 = vmul.f32 %v3226, 1.442695
    %v3241 = vpow.pop %v3240
    %v3242 = vmul.f32 %v3227, 1.442695
    %v3243 = vpow.pop %v3242
    %v3244 = vadd.f32 %v3229, 1.0
    %v3245 = vadd.f32 %v3231, 1.0
    %v3246 = vadd.f32 %v3233, 1.0
    %v3247 = vadd.f32 %v3235, 1.0
    %v3248 = vadd.f32 %v3237, 1.0
    %v3249 = vadd.f32 %v3239, 1.0
    %v3250 = vadd.f32 %v3241, 1.0
    %v3251 = vadd.f32 %v3243, 1.0
    %v3252 = vrcp.pop %v3244
    %v3253 = vmul.f32 1.0, %v3252
    %v3254 = vrcp.pop %v3245
    %v3255 = vmul.f32 1.0, %v3254
    %v3256 = vrcp.pop %v3246
    %v3257 = vmul.f32 1.0, %v3256
    %v3258 = vrcp.pop %v3247
    %v3259 = vmul.f32 1.0, %v3258
    %v3260 = vrcp.pop %v3248
    %v3261 = vmul.f32 1.0, %v3260
    %v3262 = vrcp.pop %v3249
    %v3263 = vmul.f32 1.0, %v3262
    %v3264 = vrcp.pop %v3250
    %v3265 = vmul.f32 1.0, %v3264
    %v3266 = vrcp.pop %v3251
    %v3267 = vmul.f32 1.0, %v3266
    %v3268 = vadd.f32 %v3118, %v228
    %v3269 = vadd.f32 %v3123, %v233
    %v3270 = vadd.f32 %v3128, %v238
    %v3271 = vadd.f32 %v3133, %v243
    %v3272 = vadd.f32 %v3138, %v248
    %v3273 = vadd.f32 %v3143, %v253
    %v3274 = vadd.f32 %v3148, %v258
    %v3275 = vadd.f32 %v3153, %v263
    %v3276 = vmul.f32 %v3197, %v3268
    %v3277 = vmul.f32 %v3199, %v3269
    %v3278 = vmul.f32 %v3201, %v3270
    %v3279 = vmul.f32 %v3203, %v3271
    %v3280 = vmul.f32 %v3205, %v3272
    %v3281 = vmul.f32 %v3207, %v3273
    %v3282 = vmul.f32 %v3209, %v3274
    %v3283 = vmul.f32 %v3211, %v3275
    %v3284 = vadd.f32 %v2963, %v3276
    %v3285 = vadd.f32 %v2964, %v3277
    %v3286 = vadd.f32 %v2965, %v3278
    %v3287 = vadd.f32 %v2966, %v3279
    %v3288 = vadd.f32 %v2967, %v3280
    %v3289 = vadd.f32 %v2968, %v3281
    %v3290 = vadd.f32 %v2969, %v3282
    %v3291 = vadd.f32 %v2970, %v3283
    %v3292 = vtanh.pop %v3284
    %v3293 = vtanh.pop %v3285
    %v3294 = vtanh.pop %v3286
    %v3295 = vtanh.pop %v3287
    %v3296 = vtanh.pop %v3288
    %v3297 = vtanh.pop %v3289
    %v3298 = vtanh.pop %v3290
    %v3299 = vtanh.pop %v3291
    %v3300 = vsub.f32 1.0, %v3253
    %v3301 = vsub.f32 1.0, %v3255
    %v3302 = vsub.f32 1.0, %v3257
    %v3303 = vsub.f32 1.0, %v3259
    %v3304 = vsub.f32 1.0, %v3261
    %v3305 = vsub.f32 1.0, %v3263
    %v3306 = vsub.f32 1.0, %v3265
    %v3307 = vsub.f32 1.0, %v3267
    %v3308 = vmul.f32 %v3300, %v3292
    %v3309 = vmul.f32 %v3301, %v3293
    %v3310 = vmul.f32 %v3302, %v3294
    %v3311 = vmul.f32 %v3303, %v3295
    %v3312 = vmul.f32 %v3304, %v3296
    %v3313 = vmul.f32 %v3305, %v3297
    %v3314 = vmul.f32 %v3306, %v3298
    %v3315 = vmul.f32 %v3307, %v3299
    %v3316 = vmul.f32 %v3253, %v2939
    %v3317 = vmul.f32 %v3255, %v2940
    %v3318 = vmul.f32 %v3257, %v2941
    %v3319 = vmul.f32 %v3259, %v2942
    %v3320 = vmul.f32 %v3261, %v2943
    %v3321 = vmul.f32 %v3263, %v2944
    %v3322 = vmul.f32 %v3265, %v2945
    %v3323 = vmul.f32 %v3267, %v2946
    %v3324 = vadd.f32 %v3308, %v3316
    %v3325 = vadd.f32 %v3309, %v3317
    %v3326 = vadd.f32 %v3310, %v3318
    %v3327 = vadd.f32 %v3311, %v3319
    %v3328 = vadd.f32 %v3312, %v3320
    %v3329 = vadd.f32 %v3313, %v3321
    %v3330 = vadd.f32 %v3314, %v3322
    %v3331 = vadd.f32 %v3315, %v3323
    %v3332 = vsel %vm274, 3, 2
    %v3333 = vsel %vm275, 3, 2
    %v3334 = vsel %vm276, 3, 2
    %v3335 = vsel %vm277, 3, 2
    %v3336 = vsel %vm278, 3, 2
    %v3337 = vsel %vm279, 3, 2
    %v3338 = vsel %vm280, 3, 2
    %v3339 = vsel %vm281, 3, 2
    %vm3340 = vcmp.lt.s32.totalorder %v3332, %v2112
    %vm3341 = vcmp.lt.s32.totalorder %v3333, %v2112
    %vm3342 = vcmp.lt.s32.totalorder %v3334, %v2112
    %vm3343 = vcmp.lt.s32.totalorder %v3335, %v2112
    %vm3344 = vcmp.lt.s32.totalorder %v3336, %v2112
    %vm3345 = vcmp.lt.s32.totalorder %v3337, %v2112
    %vm3346 = vcmp.lt.s32.totalorder %v3338, %v2112
    %vm3347 = vcmp.lt.s32.totalorder %v3339, %v2112
    %v3348 = vsel %vm3340, %v3324, %v2939
    %v3349 = vsel %vm3341, %v3325, %v2940
    %v3350 = vsel %vm3342, %v3326, %v2941
    %v3351 = vsel %vm3343, %v3327, %v2942
    %v3352 = vsel %vm3344, %v3328, %v2943
    %v3353 = vsel %vm3345, %v3329, %v2944
    %v3354 = vsel %vm3346, %v3330, %v2945
    %v3355 = vsel %vm3347, %v3331, %v2946
    %v3356 = vld [vmem:[%s772] sm:$0xff]
    %v3357 = vld [vmem:[%s772 + $0x8] sm:$0xff]
    %v3358 = vld [vmem:[%s772 + $0x10] sm:$0xff]
    %v3359 = vld [vmem:[%s772 + $0x18] sm:$0xff]
    %v3360 = vld [vmem:[%s772 + $0x20] sm:$0xff]
    %v3361 = vld [vmem:[%s772 + $0x28] sm:$0xff]
    %v3362 = vld [vmem:[%s772 + $0x30] sm:$0xff]
    %v3363 = vld [vmem:[%s772 + $0x38] sm:$0xff]
    %v3364 = vld [vmem:[%s772 + $0x40] sm:$0xff]
    %v3365 = vld [vmem:[%s772 + $0x48] sm:$0xff]
    %v3366 = vld [vmem:[%s772 + $0x50] sm:$0xff]
    %v3367 = vld [vmem:[%s772 + $0x58] sm:$0xff]
    %v3368 = vld [vmem:[%s772 + $0x60] sm:$0xff]
    %v3369 = vld [vmem:[%s772 + $0x68] sm:$0xff]
    %v3370 = vld [vmem:[%s772 + $0x70] sm:$0xff]
    %v3371 = vld [vmem:[%s772 + $0x78] sm:$0xff]
    %v3372 = vld [vmem:[%s772 + $0x80] sm:$0xff]
    %v3373 = vld [vmem:[%s772 + $0x88] sm:$0xff]
    %v3374 = vld [vmem:[%s772 + $0x90] sm:$0xff]
    %v3375 = vld [vmem:[%s772 + $0x98] sm:$0xff]
    %v3376 = vld [vmem:[%s772 + $0xa0] sm:$0xff]
    %v3377 = vld [vmem:[%s772 + $0xa8] sm:$0xff]
    %v3378 = vld [vmem:[%s772 + $0xb0] sm:$0xff]
    %v3379 = vld [vmem:[%s772 + $0xb8] sm:$0xff]
    %3380 = vmatprep.subr.mxu0 0.0
    %3381 = vmatpush1.msra.mxu0 %v3348
    %3382 = vmatprep.subr.mxu0 0.0
    %3383 = vmatpush1.msra.mxu0 %v3349
    %3384 = vmatprep.subr.mxu0 0.0
    %3385 = vmatpush1.msra.mxu0 %v3350
    %3386 = vmatprep.subr.mxu0 0.0
    %3387 = vmatpush1.msra.mxu0 %v3351
    %3388 = vmatprep.subr.mxu0 0.0
    %3389 = vmatpush1.msra.mxu0 %v3352
    %3390 = vmatprep.subr.mxu0 0.0
    %3391 = vmatpush1.msra.mxu0 %v3353
    %3392 = vmatprep.subr.mxu0 0.0
    %3393 = vmatpush1.msra.mxu0 %v3354
    %3394 = vmatprep.subr.mxu0 0.0
    %3395 = vmatpush1.msra.mxu0 %v3355
    %3396 = vmatprep.subr.mxu0 0.0
    %3397 = vmatpush1.msra.mxu0 0.0
    %3398 = vmatprep.subr.mxu0 0.0
    %3399 = vmatpush1.msra.mxu0 0.0
    %3400 = vmatprep.subr.mxu0 0.0
    %3401 = vmatpush1.msra.mxu0 0.0
    %3402 = vmatprep.subr.mxu0 0.0
    %3403 = vmatpush1.msra.mxu0 0.0
    %3404 = vmatprep.subr.mxu0 0.0
    %3405 = vmatpush1.msra.mxu0 0.0
    %3406 = vmatprep.subr.mxu0 0.0
    %3407 = vmatpush1.msra.mxu0 0.0
    %3408 = vmatprep.subr.mxu0 0.0
    %3409 = vmatpush1.msra.mxu0 0.0
    %3410 = vmatprep.subr.mxu0 0.0
    %3411 = vmatpush1.msra.mxu0 0.0
    %3412 = vmatprep.subr.mxu0 0.0
    %3413 = vmatpush1.msra.mxu0 0.0
    %3414 = vmatprep.subr.mxu0 0.0
    %3415 = vmatpush1.msra.mxu0 0.0
    %3416 = vmatprep.subr.mxu0 0.0
    %3417 = vmatpush1.msra.mxu0 0.0
    %3418 = vmatprep.subr.mxu0 0.0
    %3419 = vmatpush1.msra.mxu0 0.0
    %3420 = vmatprep.subr.mxu0 0.0
    %3421 = vmatpush1.msra.mxu0 0.0
    %3422 = vmatprep.subr.mxu0 0.0
    %3423 = vmatpush1.msra.mxu0 0.0
    %3424 = vmatprep.subr.mxu0 0.0
    %3425 = vmatpush1.msra.mxu0 0.0
    %3426 = vmatprep.subr.mxu0 0.0
    %3427 = vmatpush1.msra.mxu0 0.0
    %3428 = vmatprep.subr.mxu0 0.0
    %3429 = vmatpush1.msra.mxu0 0.0
    %3430 = vmatprep.subr.mxu0 0.0
    %3431 = vmatpush1.msra.mxu0 0.0
    %3432 = vmatprep.subr.mxu0 0.0
    %3433 = vmatpush1.msra.mxu0 0.0
    %3434 = vmatprep.subr.mxu0 0.0
    %3435 = vmatpush1.msra.mxu0 0.0
    %3436 = vmatprep.subr.mxu0 0.0
    %3437 = vmatpush1.msra.mxu0 0.0
    %3438 = vmatprep.subr.mxu0 0.0
    %3439 = vmatpush1.msra.mxu0 0.0
    %3440 = vmatprep.subr.mxu0 0.0
    %3441 = vmatpush1.msra.mxu0 0.0
    %3442 = vmatprep.subr.mxu0 0.0
    %3443 = vmatpush1.msra.mxu0 0.0
    %3444 = vmatprep.mubr.f32.mxu0 0.0
    %3445 = vmatmul.mubr.f32.gmra.mrb[0].mxu0 %v1669
    %v3446 = vpop.f32.mrb[0].mxu0
    %v3447 = vadd.f32 0.0, %v3446
    %v3448 = vpop.f32.mrb[0].mxu0
    %3449 = vmatprep.mubr.f32.mxu0 0.0
    %3450 = vmatmul.mubr.f32.gmra.mrb[0].mxu0 %v1672
    %v3451 = vpop.f32.mrb[0].mxu0
    %v3452 = vadd.f32 0.0, %v3451
    %v3453 = vpop.f32.mrb[0].mxu0
    %3454 = vmatprep.mubr.f32.mxu0 0.0
    %3455 = vmatmul.mubr.f32.gmra.mrb[0].mxu0 %v1675
    %v3456 = vpop.f32.mrb[0].mxu0
    %v3457 = vadd.f32 0.0, %v3456
    %v3458 = vpop.f32.mrb[0].mxu0
    %3459 = vmatprep.mubr.f32.mxu0 0.0
    %3460 = vmatmul.mubr.f32.gmra.mrb[0].mxu0 %v1678
    %v3461 = vpop.f32.mrb[0].mxu0
    %v3462 = vadd.f32 0.0, %v3461
    %v3463 = vpop.f32.mrb[0].mxu0
    %3464 = vmatprep.mubr.f32.mxu0 0.0
    %3465 = vmatmul.mubr.f32.gmra.mrb[0].mxu0 %v1681
    %v3466 = vpop.f32.mrb[0].mxu0
    %v3467 = vadd.f32 0.0, %v3466
    %v3468 = vpop.f32.mrb[0].mxu0
    %3469 = vmatprep.mubr.f32.mxu0 0.0
    %3470 = vmatmul.mubr.f32.gmra.mrb[0].mxu0 %v1684
    %v3471 = vpop.f32.mrb[0].mxu0
    %v3472 = vadd.f32 0.0, %v3471
    %v3473 = vpop.f32.mrb[0].mxu0
    %3474 = vmatprep.mubr.f32.mxu0 0.0
    %3475 = vmatmul.mubr.f32.gmra.mrb[0].mxu0 %v1687
    %v3476 = vpop.f32.mrb[0].mxu0
    %v3477 = vadd.f32 0.0, %v3476
    %v3478 = vpop.f32.mrb[0].mxu0
    %3479 = vmatprep.mubr.f32.mxu0 0.0
    %3480 = vmatmul.mubr.f32.gmra.mrb[0].mxu0 %v1690
    %v3481 = vpop.f32.mrb[0].mxu0
    %v3482 = vadd.f32 0.0, %v3481
    %v3483 = vpop.f32.mrb[0].mxu0
    %3484 = vmatprep.mubr.f32.mxu0 0.0
    %3485 = vmatmul.mubr.f32.gmra.mrb[0].mxu0 %v1693
    %v3486 = vpop.f32.mrb[0].mxu0
    %v3487 = vadd.f32 0.0, %v3486
    %v3488 = vpop.f32.mrb[0].mxu0
    %3489 = vmatprep.mubr.f32.mxu0 0.0
    %3490 = vmatmul.mubr.f32.gmra.mrb[0].mxu0 %v1696
    %v3491 = vpop.f32.mrb[0].mxu0
    %v3492 = vadd.f32 0.0, %v3491
    %v3493 = vpop.f32.mrb[0].mxu0
    %3494 = vmatprep.mubr.f32.mxu0 0.0
    %3495 = vmatmul.mubr.f32.gmra.mrb[0].mxu0 %v1699
    %v3496 = vpop.f32.mrb[0].mxu0
    %v3497 = vadd.f32 0.0, %v3496
    %v3498 = vpop.f32.mrb[0].mxu0
    %3499 = vmatprep.mubr.f32.mxu0 0.0
    %3500 = vmatmul.mubr.f32.gmra.mrb[0].mxu0 %v1702
    %v3501 = vpop.f32.mrb[0].mxu0
    %v3502 = vadd.f32 0.0, %v3501
    %v3503 = vpop.f32.mrb[0].mxu0
    %3504 = vmatprep.mubr.f32.mxu0 0.0
    %3505 = vmatmul.mubr.f32.gmra.mrb[0].mxu0 %v1705
    %v3506 = vpop.f32.mrb[0].mxu0
    %v3507 = vadd.f32 0.0, %v3506
    %v3508 = vpop.f32.mrb[0].mxu0
    %3509 = vmatprep.mubr.f32.mxu0 0.0
    %3510 = vmatmul.mubr.f32.gmra.mrb[0].mxu0 %v1708
    %v3511 = vpop.f32.mrb[0].mxu0
    %v3512 = vadd.f32 0.0, %v3511
    %v3513 = vpop.f32.mrb[0].mxu0
    %3514 = vmatprep.mubr.f32.mxu0 0.0
    %3515 = vmatmul.mubr.f32.gmra.mrb[0].mxu0 %v1711
    %v3516 = vpop.f32.mrb[0].mxu0
    %v3517 = vadd.f32 0.0, %v3516
    %v3518 = vpop.f32.mrb[0].mxu0
    %3519 = vmatprep.mubr.f32.mxu0 0.0
    %3520 = vmatmul.mubr.f32.gmra.mrb[0].mxu0 %v1714
    %v3521 = vpop.f32.mrb[0].mxu0
    %v3522 = vadd.f32 0.0, %v3521
    %v3523 = vpop.f32.mrb[0].mxu0
    %3524 = vmatprep.mubr.f32.mxu0 0.0
    %3525 = vmatmul.mubr.f32.gmra.mrb[0].mxu0 %v1717
    %v3526 = vpop.f32.mrb[0].mxu0
    %v3527 = vadd.f32 0.0, %v3526
    %v3528 = vpop.f32.mrb[0].mxu0
    %3529 = vmatprep.mubr.f32.mxu0 0.0
    %3530 = vmatmul.mubr.f32.gmra.mrb[0].mxu0 %v1720
    %v3531 = vpop.f32.mrb[0].mxu0
    %v3532 = vadd.f32 0.0, %v3531
    %v3533 = vpop.f32.mrb[0].mxu0
    %3534 = vmatprep.mubr.f32.mxu0 0.0
    %3535 = vmatmul.mubr.f32.gmra.mrb[0].mxu0 %v1723
    %v3536 = vpop.f32.mrb[0].mxu0
    %v3537 = vadd.f32 0.0, %v3536
    %v3538 = vpop.f32.mrb[0].mxu0
    %3539 = vmatprep.mubr.f32.mxu0 0.0
    %3540 = vmatmul.mubr.f32.gmra.mrb[0].mxu0 %v1726
    %v3541 = vpop.f32.mrb[0].mxu0
    %v3542 = vadd.f32 0.0, %v3541
    %v3543 = vpop.f32.mrb[0].mxu0
    %3544 = vmatprep.mubr.f32.mxu0 0.0
    %3545 = vmatmul.mubr.f32.gmra.mrb[0].mxu0 %v1729
    %v3546 = vpop.f32.mrb[0].mxu0
    %v3547 = vadd.f32 0.0, %v3546
    %v3548 = vpop.f32.mrb[0].mxu0
    %3549 = vmatprep.mubr.f32.mxu0 0.0
    %3550 = vmatmul.mubr.f32.gmra.mrb[0].mxu0 %v1732
    %v3551 = vpop.f32.mrb[0].mxu0
    %v3552 = vadd.f32 0.0, %v3551
    %v3553 = vpop.f32.mrb[0].mxu0
    %3554 = vmatprep.mubr.f32.mxu0 0.0
    %3555 = vmatmul.mubr.f32.gmra.mrb[0].mxu0 %v1735
    %v3556 = vpop.f32.mrb[0].mxu0
    %v3557 = vadd.f32 0.0, %v3556
    %v3558 = vpop.f32.mrb[0].mxu0
    %3559 = vmatprep.mubr.f32.mxu0 0.0
    %3560 = vmatmul.mubr.f32.gmra.mrb[0].mxu0 %v1738
    %v3561 = vpop.f32.mrb[0].mxu0
    %v3562 = vadd.f32 0.0, %v3561
    %v3563 = vpop.f32.mrb[0].mxu0
    %3564 = vdwg.mxu0
    %v3565 = vadd.f32 %v3356, %v3447
    %v3566 = vadd.f32 %v3357, %v3452
    %v3567 = vadd.f32 %v3358, %v3457
    %v3568 = vadd.f32 %v3359, %v3462
    %v3569 = vadd.f32 %v3360, %v3467
    %v3570 = vadd.f32 %v3361, %v3472
    %v3571 = vadd.f32 %v3362, %v3477
    %v3572 = vadd.f32 %v3363, %v3482
    %v3573 = vxor.u32 %v3565, 2147483648
    %v3574 = vxor.u32 %v3566, 2147483648
    %v3575 = vxor.u32 %v3567, 2147483648
    %v3576 = vxor.u32 %v3568, 2147483648
    %v3577 = vxor.u32 %v3569, 2147483648
    %v3578 = vxor.u32 %v3570, 2147483648
    %v3579 = vxor.u32 %v3571, 2147483648
    %v3580 = vxor.u32 %v3572, 2147483648
    %v3581 = vmul.f32 %v3573, 1.442695
    %v3582 = vpow.pop %v3581
    %v3583 = vmul.f32 %v3574, 1.442695
    %v3584 = vpow.pop %v3583
    %v3585 = vmul.f32 %v3575, 1.442695
    %v3586 = vpow.pop %v3585
    %v3587 = vmul.f32 %v3576, 1.442695
    %v3588 = vpow.pop %v3587
    %v3589 = vmul.f32 %v3577, 1.442695
    %v3590 = vpow.pop %v3589
    %v3591 = vmul.f32 %v3578, 1.442695
    %v3592 = vpow.pop %v3591
    %v3593 = vmul.f32 %v3579, 1.442695
    %v3594 = vpow.pop %v3593
    %v3595 = vmul.f32 %v3580, 1.442695
    %v3596 = vpow.pop %v3595
    %v3597 = vadd.f32 %v3582, 1.0
    %v3598 = vadd.f32 %v3584, 1.0
    %v3599 = vadd.f32 %v3586, 1.0
    %v3600 = vadd.f32 %v3588, 1.0
    %v3601 = vadd.f32 %v3590, 1.0
    %v3602 = vadd.f32 %v3592, 1.0
    %v3603 = vadd.f32 %v3594, 1.0
    %v3604 = vadd.f32 %v3596, 1.0
    %v3605 = vrcp.pop %v3597
    %v3606 = vmul.f32 1.0, %v3605
    %v3607 = vrcp.pop %v3598
    %v3608 = vmul.f32 1.0, %v3607
    %v3609 = vrcp.pop %v3599
    %v3610 = vmul.f32 1.0, %v3609
    %v3611 = vrcp.pop %v3600
    %v3612 = vmul.f32 1.0, %v3611
    %v3613 = vrcp.pop %v3601
    %v3614 = vmul.f32 1.0, %v3613
    %v3615 = vrcp.pop %v3602
    %v3616 = vmul.f32 1.0, %v3615
    %v3617 = vrcp.pop %v3603
    %v3618 = vmul.f32 1.0, %v3617
    %v3619 = vrcp.pop %v3604
    %v3620 = vmul.f32 1.0, %v3619
    %v3621 = vadd.f32 %v3364, %v3487
    %v3622 = vadd.f32 %v3365, %v3492
    %v3623 = vadd.f32 %v3366, %v3497
    %v3624 = vadd.f32 %v3367, %v3502
    %v3625 = vadd.f32 %v3368, %v3507
    %v3626 = vadd.f32 %v3369, %v3512
    %v3627 = vadd.f32 %v3370, %v3517
    %v3628 = vadd.f32 %v3371, %v3522
    %v3629 = vxor.u32 %v3621, 2147483648
    %v3630 = vxor.u32 %v3622, 2147483648
    %v3631 = vxor.u32 %v3623, 2147483648
    %v3632 = vxor.u32 %v3624, 2147483648
    %v3633 = vxor.u32 %v3625, 2147483648
    %v3634 = vxor.u32 %v3626, 2147483648
    %v3635 = vxor.u32 %v3627, 2147483648
    %v3636 = vxor.u32 %v3628, 2147483648
    %v3637 = vmul.f32 %v3629, 1.442695
    %v3638 = vpow.pop %v3637
    %v3639 = vmul.f32 %v3630, 1.442695
    %v3640 = vpow.pop %v3639
    %v3641 = vmul.f32 %v3631, 1.442695
    %v3642 = vpow.pop %v3641
    %v3643 = vmul.f32 %v3632, 1.442695
    %v3644 = vpow.pop %v3643
    %v3645 = vmul.f32 %v3633, 1.442695
    %v3646 = vpow.pop %v3645
    %v3647 = vmul.f32 %v3634, 1.442695
    %v3648 = vpow.pop %v3647
    %v3649 = vmul.f32 %v3635, 1.442695
    %v3650 = vpow.pop %v3649
    %v3651 = vmul.f32 %v3636, 1.442695
    %v3652 = vpow.pop %v3651
    %v3653 = vadd.f32 %v3638, 1.0
    %v3654 = vadd.f32 %v3640, 1.0
    %v3655 = vadd.f32 %v3642, 1.0
    %v3656 = vadd.f32 %v3644, 1.0
    %v3657 = vadd.f32 %v3646, 1.0
    %v3658 = vadd.f32 %v3648, 1.0
    %v3659 = vadd.f32 %v3650, 1.0
    %v3660 = vadd.f32 %v3652, 1.0
    %v3661 = vrcp.pop %v3653
    %v3662 = vmul.f32 1.0, %v3661
    %v3663 = vrcp.pop %v3654
    %v3664 = vmul.f32 1.0, %v3663
    %v3665 = vrcp.pop %v3655
    %v3666 = vmul.f32 1.0, %v3665
    %v3667 = vrcp.pop %v3656
    %v3668 = vmul.f32 1.0, %v3667
    %v3669 = vrcp.pop %v3657
    %v3670 = vmul.f32 1.0, %v3669
    %v3671 = vrcp.pop %v3658
    %v3672 = vmul.f32 1.0, %v3671
    %v3673 = vrcp.pop %v3659
    %v3674 = vmul.f32 1.0, %v3673
    %v3675 = vrcp.pop %v3660
    %v3676 = vmul.f32 1.0, %v3675
    %v3677 = vadd.f32 %v3527, %v228
    %v3678 = vadd.f32 %v3532, %v233
    %v3679 = vadd.f32 %v3537, %v238
    %v3680 = vadd.f32 %v3542, %v243
    %v3681 = vadd.f32 %v3547, %v248
    %v3682 = vadd.f32 %v3552, %v253
    %v3683 = vadd.f32 %v3557, %v258
    %v3684 = vadd.f32 %v3562, %v263
    %v3685 = vmul.f32 %v3606, %v3677
    %v3686 = vmul.f32 %v3608, %v3678
    %v3687 = vmul.f32 %v3610, %v3679
    %v3688 = vmul.f32 %v3612, %v3680
    %v3689 = vmul.f32 %v3614, %v3681
    %v3690 = vmul.f32 %v3616, %v3682
    %v3691 = vmul.f32 %v3618, %v3683
    %v3692 = vmul.f32 %v3620, %v3684
    %v3693 = vadd.f32 %v3372, %v3685
    %v3694 = vadd.f32 %v3373, %v3686
    %v3695 = vadd.f32 %v3374, %v3687
    %v3696 = vadd.f32 %v3375, %v3688
    %v3697 = vadd.f32 %v3376, %v3689
    %v3698 = vadd.f32 %v3377, %v3690
    %v3699 = vadd.f32 %v3378, %v3691
    %v3700 = vadd.f32 %v3379, %v3692
    %v3701 = vtanh.pop %v3693
    %v3702 = vtanh.pop %v3694
    %v3703 = vtanh.pop %v3695
    %v3704 = vtanh.pop %v3696
    %v3705 = vtanh.pop %v3697
    %v3706 = vtanh.pop %v3698
    %v3707 = vtanh.pop %v3699
    %v3708 = vtanh.pop %v3700
    %v3709 = vsub.f32 1.0, %v3662
    %v3710 = vsub.f32 1.0, %v3664
    %v3711 = vsub.f32 1.0, %v3666
    %v3712 = vsub.f32 1.0, %v3668
    %v3713 = vsub.f32 1.0, %v3670
    %v3714 = vsub.f32 1.0, %v3672
    %v3715 = vsub.f32 1.0, %v3674
    %v3716 = vsub.f32 1.0, %v3676
    %v3717 = vmul.f32 %v3709, %v3701
    %v3718 = vmul.f32 %v3710, %v3702
    %v3719 = vmul.f32 %v3711, %v3703
    %v3720 = vmul.f32 %v3712, %v3704
    %v3721 = vmul.f32 %v3713, %v3705
    %v3722 = vmul.f32 %v3714, %v3706
    %v3723 = vmul.f32 %v3715, %v3707
    %v3724 = vmul.f32 %v3716, %v3708
    %v3725 = vmul.f32 %v3662, %v3348
    %v3726 = vmul.f32 %v3664, %v3349
    %v3727 = vmul.f32 %v3666, %v3350
    %v3728 = vmul.f32 %v3668, %v3351
    %v3729 = vmul.f32 %v3670, %v3352
    %v3730 = vmul.f32 %v3672, %v3353
    %v3731 = vmul.f32 %v3674, %v3354
    %v3732 = vmul.f32 %v3676, %v3355
    %v3733 = vadd.f32 %v3717, %v3725
    %v3734 = vadd.f32 %v3718, %v3726
    %v3735 = vadd.f32 %v3719, %v3727
    %v3736 = vadd.f32 %v3720, %v3728
    %v3737 = vadd.f32 %v3721, %v3729
    %v3738 = vadd.f32 %v3722, %v3730
    %v3739 = vadd.f32 %v3723, %v3731
    %v3740 = vadd.f32 %v3724, %v3732
    %v3741 = vsel %vm274, 4, 1
    %v3742 = vsel %vm275, 4, 1
    %v3743 = vsel %vm276, 4, 1
    %v3744 = vsel %vm277, 4, 1
    %v3745 = vsel %vm278, 4, 1
    %v3746 = vsel %vm279, 4, 1
    %v3747 = vsel %vm280, 4, 1
    %v3748 = vsel %vm281, 4, 1
    %vm3749 = vcmp.lt.s32.totalorder %v3741, %v2112
    %vm3750 = vcmp.lt.s32.totalorder %v3742, %v2112
    %vm3751 = vcmp.lt.s32.totalorder %v3743, %v2112
    %vm3752 = vcmp.lt.s32.totalorder %v3744, %v2112
    %vm3753 = vcmp.lt.s32.totalorder %v3745, %v2112
    %vm3754 = vcmp.lt.s32.totalorder %v3746, %v2112
    %vm3755 = vcmp.lt.s32.totalorder %v3747, %v2112
    %vm3756 = vcmp.lt.s32.totalorder %v3748, %v2112
    %v3757 = vsel %vm3749, %v3733, %v3348
    %v3758 = vsel %vm3750, %v3734, %v3349
    %v3759 = vsel %vm3751, %v3735, %v3350
    %v3760 = vsel %vm3752, %v3736, %v3351
    %v3761 = vsel %vm3753, %v3737, %v3352
    %v3762 = vsel %vm3754, %v3738, %v3353
    %v3763 = vsel %vm3755, %v3739, %v3354
    %v3764 = vsel %vm3756, %v3740, %v3355
    %v3765 = vld [vmem:[%s556] sm:$0xff]
    %v3766 = vld [vmem:[%s556 + $0x8] sm:$0xff]
    %v3767 = vld [vmem:[%s556 + $0x10] sm:$0xff]
    %v3768 = vld [vmem:[%s556 + $0x18] sm:$0xff]
    %v3769 = vld [vmem:[%s556 + $0x20] sm:$0xff]
    %v3770 = vld [vmem:[%s556 + $0x28] sm:$0xff]
    %v3771 = vld [vmem:[%s556 + $0x30] sm:$0xff]
    %v3772 = vld [vmem:[%s556 + $0x38] sm:$0xff]
    %v3773 = vld [vmem:[%s556 + $0x40] sm:$0xff]
    %v3774 = vld [vmem:[%s556 + $0x48] sm:$0xff]
    %v3775 = vld [vmem:[%s556 + $0x50] sm:$0xff]
    %v3776 = vld [vmem:[%s556 + $0x58] sm:$0xff]
    %v3777 = vld [vmem:[%s556 + $0x60] sm:$0xff]
    %v3778 = vld [vmem:[%s556 + $0x68] sm:$0xff]
    %v3779 = vld [vmem:[%s556 + $0x70] sm:$0xff]
    %v3780 = vld [vmem:[%s556 + $0x78] sm:$0xff]
    %v3781 = vld [vmem:[%s556 + $0x80] sm:$0xff]
    %v3782 = vld [vmem:[%s556 + $0x88] sm:$0xff]
    %v3783 = vld [vmem:[%s556 + $0x90] sm:$0xff]
    %v3784 = vld [vmem:[%s556 + $0x98] sm:$0xff]
    %v3785 = vld [vmem:[%s556 + $0xa0] sm:$0xff]
    %v3786 = vld [vmem:[%s556 + $0xa8] sm:$0xff]
    %v3787 = vld [vmem:[%s556 + $0xb0] sm:$0xff]
    %v3788 = vld [vmem:[%s556 + $0xb8] sm:$0xff]
    %3789 = vmatprep.subr.mxu0 0.0
    %3790 = vmatpush1.msra.mxu0 %v3757
    %3791 = vmatprep.subr.mxu0 0.0
    %3792 = vmatpush1.msra.mxu0 %v3758
    %3793 = vmatprep.subr.mxu0 0.0
    %3794 = vmatpush1.msra.mxu0 %v3759
    %3795 = vmatprep.subr.mxu0 0.0
    %3796 = vmatpush1.msra.mxu0 %v3760
    %3797 = vmatprep.subr.mxu0 0.0
    %3798 = vmatpush1.msra.mxu0 %v3761
    %3799 = vmatprep.subr.mxu0 0.0
    %3800 = vmatpush1.msra.mxu0 %v3762
    %3801 = vmatprep.subr.mxu0 0.0
    %3802 = vmatpush1.msra.mxu0 %v3763
    %3803 = vmatprep.subr.mxu0 0.0
    %3804 = vmatpush1.msra.mxu0 %v3764
    %3805 = vmatprep.subr.mxu0 0.0
    %3806 = vmatpush1.msra.mxu0 0.0
    %3807 = vmatprep.subr.mxu0 0.0
    %3808 = vmatpush1.msra.mxu0 0.0
    %3809 = vmatprep.subr.mxu0 0.0
    %3810 = vmatpush1.msra.mxu0 0.0
    %3811 = vmatprep.subr.mxu0 0.0
    %3812 = vmatpush1.msra.mxu0 0.0
    %3813 = vmatprep.subr.mxu0 0.0
    %3814 = vmatpush1.msra.mxu0 0.0
    %3815 = vmatprep.subr.mxu0 0.0
    %3816 = vmatpush1.msra.mxu0 0.0
    %3817 = vmatprep.subr.mxu0 0.0
    %3818 = vmatpush1.msra.mxu0 0.0
    %3819 = vmatprep.subr.mxu0 0.0
    %3820 = vmatpush1.msra.mxu0 0.0
    %3821 = vmatprep.subr.mxu0 0.0
    %3822 = vmatpush1.msra.mxu0 0.0
    %3823 = vmatprep.subr.mxu0 0.0
    %3824 = vmatpush1.msra.mxu0 0.0
    %3825 = vmatprep.subr.mxu0 0.0
    %3826 = vmatpush1.msra.mxu0 0.0
    %3827 = vmatprep.subr.mxu0 0.0
    %3828 = vmatpush1.msra.mxu0 0.0
    %3829 = vmatprep.subr.mxu0 0.0
    %3830 = vmatpush1.msra.mxu0 0.0
    %3831 = vmatprep.subr.mxu0 0.0
    %3832 = vmatpush1.msra.mxu0 0.0
    %3833 = vmatprep.subr.mxu0 0.0
    %3834 = vmatpush1.msra.mxu0 0.0
    %3835 = vmatprep.subr.mxu0 0.0
    %3836 = vmatpush1.msra.mxu0 0.0
    %3837 = vmatprep.subr.mxu0 0.0
    %3838 = vmatpush1.msra.mxu0 0.0
    %3839 = vmatprep.subr.mxu0 0.0
    %3840 = vmatpush1.msra.mxu0 0.0
    %3841 = vmatprep.subr.mxu0 0.0
    %3842 = vmatpush1.msra.mxu0 0.0
    %3843 = vmatprep.subr.mxu0 0.0
    %3844 = vmatpush1.msra.mxu0 0.0
    %3845 = vmatprep.subr.mxu0 0.0
    %3846 = vmatpush1.msra.mxu0 0.0
    %3847 = vmatprep.subr.mxu0 0.0
    %3848 = vmatpush1.msra.mxu0 0.0
    %3849 = vmatprep.subr.mxu0 0.0
    %3850 = vmatpush1.msra.mxu0 0.0
    %3851 = vmatprep.subr.mxu0 0.0
    %3852 = vmatpush1.msra.mxu0 0.0
    %3853 = vmatprep.mubr.f32.mxu0 0.0
    %3854 = vmatmul.mubr.f32.gmra.mrb[0].mxu0 %v1669
    %v3855 = vpop.f32.mrb[0].mxu0
    %v3856 = vadd.f32 0.0, %v3855
    %v3857 = vpop.f32.mrb[0].mxu0
    %3858 = vmatprep.mubr.f32.mxu0 0.0
    %3859 = vmatmul.mubr.f32.gmra.mrb[0].mxu0 %v1672
    %v3860 = vpop.f32.mrb[0].mxu0
    %v3861 = vadd.f32 0.0, %v3860
    %v3862 = vpop.f32.mrb[0].mxu0
    %3863 = vmatprep.mubr.f32.mxu0 0.0
    %3864 = vmatmul.mubr.f32.gmra.mrb[0].mxu0 %v1675
    %v3865 = vpop.f32.mrb[0].mxu0
    %v3866 = vadd.f32 0.0, %v3865
    %v3867 = vpop.f32.mrb[0].mxu0
    %3868 = vmatprep.mubr.f32.mxu0 0.0
    %3869 = vmatmul.mubr.f32.gmra.mrb[0].mxu0 %v1678
    %v3870 = vpop.f32.mrb[0].mxu0
    %v3871 = vadd.f32 0.0, %v3870
    %v3872 = vpop.f32.mrb[0].mxu0
    %3873 = vmatprep.mubr.f32.mxu0 0.0
    %3874 = vmatmul.mubr.f32.gmra.mrb[0].mxu0 %v1681
    %v3875 = vpop.f32.mrb[0].mxu0
    %v3876 = vadd.f32 0.0, %v3875
    %v3877 = vpop.f32.mrb[0].mxu0
    %3878 = vmatprep.mubr.f32.mxu0 0.0
    %3879 = vmatmul.mubr.f32.gmra.mrb[0].mxu0 %v1684
    %v3880 = vpop.f32.mrb[0].mxu0
    %v3881 = vadd.f32 0.0, %v3880
    %v3882 = vpop.f32.mrb[0].mxu0
    %3883 = vmatprep.mubr.f32.mxu0 0.0
    %3884 = vmatmul.mubr.f32.gmra.mrb[0].mxu0 %v1687
    %v3885 = vpop.f32.mrb[0].mxu0
    %v3886 = vadd.f32 0.0, %v3885
    %v3887 = vpop.f32.mrb[0].mxu0
    %3888 = vmatprep.mubr.f32.mxu0 0.0
    %3889 = vmatmul.mubr.f32.gmra.mrb[0].mxu0 %v1690
    %v3890 = vpop.f32.mrb[0].mxu0
    %v3891 = vadd.f32 0.0, %v3890
    %v3892 = vpop.f32.mrb[0].mxu0
    %3893 = vmatprep.mubr.f32.mxu0 0.0
    %3894 = vmatmul.mubr.f32.gmra.mrb[0].mxu0 %v1693
    %v3895 = vpop.f32.mrb[0].mxu0
    %v3896 = vadd.f32 0.0, %v3895
    %v3897 = vpop.f32.mrb[0].mxu0
    %3898 = vmatprep.mubr.f32.mxu0 0.0
    %3899 = vmatmul.mubr.f32.gmra.mrb[0].mxu0 %v1696
    %v3900 = vpop.f32.mrb[0].mxu0
    %v3901 = vadd.f32 0.0, %v3900
    %v3902 = vpop.f32.mrb[0].mxu0
    %3903 = vmatprep.mubr.f32.mxu0 0.0
    %3904 = vmatmul.mubr.f32.gmra.mrb[0].mxu0 %v1699
    %v3905 = vpop.f32.mrb[0].mxu0
    %v3906 = vadd.f32 0.0, %v3905
    %v3907 = vpop.f32.mrb[0].mxu0
    %3908 = vmatprep.mubr.f32.mxu0 0.0
    %3909 = vmatmul.mubr.f32.gmra.mrb[0].mxu0 %v1702
    %v3910 = vpop.f32.mrb[0].mxu0
    %v3911 = vadd.f32 0.0, %v3910
    %v3912 = vpop.f32.mrb[0].mxu0
    %3913 = vmatprep.mubr.f32.mxu0 0.0
    %3914 = vmatmul.mubr.f32.gmra.mrb[0].mxu0 %v1705
    %v3915 = vpop.f32.mrb[0].mxu0
    %v3916 = vadd.f32 0.0, %v3915
    %v3917 = vpop.f32.mrb[0].mxu0
    %3918 = vmatprep.mubr.f32.mxu0 0.0
    %3919 = vmatmul.mubr.f32.gmra.mrb[0].mxu0 %v1708
    %v3920 = vpop.f32.mrb[0].mxu0
    %v3921 = vadd.f32 0.0, %v3920
    %v3922 = vpop.f32.mrb[0].mxu0
    %3923 = vmatprep.mubr.f32.mxu0 0.0
    %3924 = vmatmul.mubr.f32.gmra.mrb[0].mxu0 %v1711
    %v3925 = vpop.f32.mrb[0].mxu0
    %v3926 = vadd.f32 0.0, %v3925
    %v3927 = vpop.f32.mrb[0].mxu0
    %3928 = vmatprep.mubr.f32.mxu0 0.0
    %3929 = vmatmul.mubr.f32.gmra.mrb[0].mxu0 %v1714
    %v3930 = vpop.f32.mrb[0].mxu0
    %v3931 = vadd.f32 0.0, %v3930
    %v3932 = vpop.f32.mrb[0].mxu0
    %3933 = vmatprep.mubr.f32.mxu0 0.0
    %3934 = vmatmul.mubr.f32.gmra.mrb[0].mxu0 %v1717
    %v3935 = vpop.f32.mrb[0].mxu0
    %v3936 = vadd.f32 0.0, %v3935
    %v3937 = vpop.f32.mrb[0].mxu0
    %3938 = vmatprep.mubr.f32.mxu0 0.0
    %3939 = vmatmul.mubr.f32.gmra.mrb[0].mxu0 %v1720
    %v3940 = vpop.f32.mrb[0].mxu0
    %v3941 = vadd.f32 0.0, %v3940
    %v3942 = vpop.f32.mrb[0].mxu0
    %3943 = vmatprep.mubr.f32.mxu0 0.0
    %3944 = vmatmul.mubr.f32.gmra.mrb[0].mxu0 %v1723
    %v3945 = vpop.f32.mrb[0].mxu0
    %v3946 = vadd.f32 0.0, %v3945
    %v3947 = vpop.f32.mrb[0].mxu0
    %3948 = vmatprep.mubr.f32.mxu0 0.0
    %3949 = vmatmul.mubr.f32.gmra.mrb[0].mxu0 %v1726
    %v3950 = vpop.f32.mrb[0].mxu0
    %v3951 = vadd.f32 0.0, %v3950
    %v3952 = vpop.f32.mrb[0].mxu0
    %3953 = vmatprep.mubr.f32.mxu0 0.0
    %3954 = vmatmul.mubr.f32.gmra.mrb[0].mxu0 %v1729
    %v3955 = vpop.f32.mrb[0].mxu0
    %v3956 = vadd.f32 0.0, %v3955
    %v3957 = vpop.f32.mrb[0].mxu0
    %3958 = vmatprep.mubr.f32.mxu0 0.0
    %3959 = vmatmul.mubr.f32.gmra.mrb[0].mxu0 %v1732
    %v3960 = vpop.f32.mrb[0].mxu0
    %v3961 = vadd.f32 0.0, %v3960
    %v3962 = vpop.f32.mrb[0].mxu0
    %3963 = vmatprep.mubr.f32.mxu0 0.0
    %3964 = vmatmul.mubr.f32.gmra.mrb[0].mxu0 %v1735
    %v3965 = vpop.f32.mrb[0].mxu0
    %v3966 = vadd.f32 0.0, %v3965
    %v3967 = vpop.f32.mrb[0].mxu0
    %3968 = vmatprep.mubr.f32.mxu0 0.0
    %3969 = vmatmul.mubr.f32.gmra.mrb[0].mxu0 %v1738
    %v3970 = vpop.f32.mrb[0].mxu0
    %v3971 = vadd.f32 0.0, %v3970
    %v3972 = vpop.f32.mrb[0].mxu0
    %3973 = vdwg.mxu0
    %v3974 = vadd.f32 %v3765, %v3856
    %v3975 = vadd.f32 %v3766, %v3861
    %v3976 = vadd.f32 %v3767, %v3866
    %v3977 = vadd.f32 %v3768, %v3871
    %v3978 = vadd.f32 %v3769, %v3876
    %v3979 = vadd.f32 %v3770, %v3881
    %v3980 = vadd.f32 %v3771, %v3886
    %v3981 = vadd.f32 %v3772, %v3891
    %v3982 = vxor.u32 %v3974, 2147483648
    %v3983 = vxor.u32 %v3975, 2147483648
    %v3984 = vxor.u32 %v3976, 2147483648
    %v3985 = vxor.u32 %v3977, 2147483648
    %v3986 = vxor.u32 %v3978, 2147483648
    %v3987 = vxor.u32 %v3979, 2147483648
    %v3988 = vxor.u32 %v3980, 2147483648
    %v3989 = vxor.u32 %v3981, 2147483648
    %v3990 = vmul.f32 %v3982, 1.442695
    %v3991 = vpow.pop %v3990
    %v3992 = vmul.f32 %v3983, 1.442695
    %v3993 = vpow.pop %v3992
    %v3994 = vmul.f32 %v3984, 1.442695
    %v3995 = vpow.pop %v3994
    %v3996 = vmul.f32 %v3985, 1.442695
    %v3997 = vpow.pop %v3996
    %v3998 = vmul.f32 %v3986, 1.442695
    %v3999 = vpow.pop %v3998
    %v4000 = vmul.f32 %v3987, 1.442695
    %v4001 = vpow.pop %v4000
    %v4002 = vmul.f32 %v3988, 1.442695
    %v4003 = vpow.pop %v4002
    %v4004 = vmul.f32 %v3989, 1.442695
    %v4005 = vpow.pop %v4004
    %v4006 = vadd.f32 %v3991, 1.0
    %v4007 = vadd.f32 %v3993, 1.0
    %v4008 = vadd.f32 %v3995, 1.0
    %v4009 = vadd.f32 %v3997, 1.0
    %v4010 = vadd.f32 %v3999, 1.0
    %v4011 = vadd.f32 %v4001, 1.0
    %v4012 = vadd.f32 %v4003, 1.0
    %v4013 = vadd.f32 %v4005, 1.0
    %v4014 = vrcp.pop %v4006
    %v4015 = vmul.f32 1.0, %v4014
    %v4016 = vrcp.pop %v4007
    %v4017 = vmul.f32 1.0, %v4016
    %v4018 = vrcp.pop %v4008
    %v4019 = vmul.f32 1.0, %v4018
    %v4020 = vrcp.pop %v4009
    %v4021 = vmul.f32 1.0, %v4020
    %v4022 = vrcp.pop %v4010
    %v4023 = vmul.f32 1.0, %v4022
    %v4024 = vrcp.pop %v4011
    %v4025 = vmul.f32 1.0, %v4024
    %v4026 = vrcp.pop %v4012
    %v4027 = vmul.f32 1.0, %v4026
    %v4028 = vrcp.pop %v4013
    %v4029 = vmul.f32 1.0, %v4028
    %v4030 = vadd.f32 %v3773, %v3896
    %v4031 = vadd.f32 %v3774, %v3901
    %v4032 = vadd.f32 %v3775, %v3906
    %v4033 = vadd.f32 %v3776, %v3911
    %v4034 = vadd.f32 %v3777, %v3916
    %v4035 = vadd.f32 %v3778, %v3921
    %v4036 = vadd.f32 %v3779, %v3926
    %v4037 = vadd.f32 %v3780, %v3931
    %v4038 = vxor.u32 %v4030, 2147483648
    %v4039 = vxor.u32 %v4031, 2147483648
    %v4040 = vxor.u32 %v4032, 2147483648
    %v4041 = vxor.u32 %v4033, 2147483648
    %v4042 = vxor.u32 %v4034, 2147483648
    %v4043 = vxor.u32 %v4035, 2147483648
    %v4044 = vxor.u32 %v4036, 2147483648
    %v4045 = vxor.u32 %v4037, 2147483648
    %v4046 = vmul.f32 %v4038, 1.442695
    %v4047 = vpow.pop %v4046
    %v4048 = vmul.f32 %v4039, 1.442695
    %v4049 = vpow.pop %v4048
    %v4050 = vmul.f32 %v4040, 1.442695
    %v4051 = vpow.pop %v4050
    %v4052 = vmul.f32 %v4041, 1.442695
    %v4053 = vpow.pop %v4052
    %v4054 = vmul.f32 %v4042, 1.442695
    %v4055 = vpow.pop %v4054
    %v4056 = vmul.f32 %v4043, 1.442695
    %v4057 = vpow.pop %v4056
    %v4058 = vmul.f32 %v4044, 1.442695
    %v4059 = vpow.pop %v4058
    %v4060 = vmul.f32 %v4045, 1.442695
    %v4061 = vpow.pop %v4060
    %v4062 = vadd.f32 %v4047, 1.0
    %v4063 = vadd.f32 %v4049, 1.0
    %v4064 = vadd.f32 %v4051, 1.0
    %v4065 = vadd.f32 %v4053, 1.0
    %v4066 = vadd.f32 %v4055, 1.0
    %v4067 = vadd.f32 %v4057, 1.0
    %v4068 = vadd.f32 %v4059, 1.0
    %v4069 = vadd.f32 %v4061, 1.0
    %v4070 = vrcp.pop %v4062
    %v4071 = vmul.f32 1.0, %v4070
    %v4072 = vrcp.pop %v4063
    %v4073 = vmul.f32 1.0, %v4072
    %v4074 = vrcp.pop %v4064
    %v4075 = vmul.f32 1.0, %v4074
    %v4076 = vrcp.pop %v4065
    %v4077 = vmul.f32 1.0, %v4076
    %v4078 = vrcp.pop %v4066
    %v4079 = vmul.f32 1.0, %v4078
    %v4080 = vrcp.pop %v4067
    %v4081 = vmul.f32 1.0, %v4080
    %v4082 = vrcp.pop %v4068
    %v4083 = vmul.f32 1.0, %v4082
    %v4084 = vrcp.pop %v4069
    %v4085 = vmul.f32 1.0, %v4084
    %v4086 = vadd.f32 %v3936, %v228
    %v4087 = vadd.f32 %v3941, %v233
    %v4088 = vadd.f32 %v3946, %v238
    %v4089 = vadd.f32 %v3951, %v243
    %v4090 = vadd.f32 %v3956, %v248
    %v4091 = vadd.f32 %v3961, %v253
    %v4092 = vadd.f32 %v3966, %v258
    %v4093 = vadd.f32 %v3971, %v263
    %v4094 = vmul.f32 %v4015, %v4086
    %v4095 = vmul.f32 %v4017, %v4087
    %v4096 = vmul.f32 %v4019, %v4088
    %v4097 = vmul.f32 %v4021, %v4089
    %v4098 = vmul.f32 %v4023, %v4090
    %v4099 = vmul.f32 %v4025, %v4091
    %v4100 = vmul.f32 %v4027, %v4092
    %v4101 = vmul.f32 %v4029, %v4093
    %v4102 = vadd.f32 %v3781, %v4094
    %v4103 = vadd.f32 %v3782, %v4095
    %v4104 = vadd.f32 %v3783, %v4096
    %v4105 = vadd.f32 %v3784, %v4097
    %v4106 = vadd.f32 %v3785, %v4098
    %v4107 = vadd.f32 %v3786, %v4099
    %v4108 = vadd.f32 %v3787, %v4100
    %v4109 = vadd.f32 %v3788, %v4101
    %v4110 = vtanh.pop %v4102
    %v4111 = vtanh.pop %v4103
    %v4112 = vtanh.pop %v4104
    %v4113 = vtanh.pop %v4105
    %v4114 = vtanh.pop %v4106
    %v4115 = vtanh.pop %v4107
    %v4116 = vtanh.pop %v4108
    %v4117 = vtanh.pop %v4109
    %v4118 = vsub.f32 1.0, %v4071
    %v4119 = vsub.f32 1.0, %v4073
    %v4120 = vsub.f32 1.0, %v4075
    %v4121 = vsub.f32 1.0, %v4077
    %v4122 = vsub.f32 1.0, %v4079
    %v4123 = vsub.f32 1.0, %v4081
    %v4124 = vsub.f32 1.0, %v4083
    %v4125 = vsub.f32 1.0, %v4085
    %v4126 = vmul.f32 %v4118, %v4110
    %v4127 = vmul.f32 %v4119, %v4111
    %v4128 = vmul.f32 %v4120, %v4112
    %v4129 = vmul.f32 %v4121, %v4113
    %v4130 = vmul.f32 %v4122, %v4114
    %v4131 = vmul.f32 %v4123, %v4115
    %v4132 = vmul.f32 %v4124, %v4116
    %v4133 = vmul.f32 %v4125, %v4117
    %v4134 = vmul.f32 %v4071, %v3757
    %v4135 = vmul.f32 %v4073, %v3758
    %v4136 = vmul.f32 %v4075, %v3759
    %v4137 = vmul.f32 %v4077, %v3760
    %v4138 = vmul.f32 %v4079, %v3761
    %v4139 = vmul.f32 %v4081, %v3762
    %v4140 = vmul.f32 %v4083, %v3763
    %v4141 = vmul.f32 %v4085, %v3764
    %v4142 = vadd.f32 %v4126, %v4134
    %v4143 = vadd.f32 %v4127, %v4135
    %v4144 = vadd.f32 %v4128, %v4136
    %v4145 = vadd.f32 %v4129, %v4137
    %v4146 = vadd.f32 %v4130, %v4138
    %v4147 = vadd.f32 %v4131, %v4139
    %v4148 = vadd.f32 %v4132, %v4140
    %v4149 = vadd.f32 %v4133, %v4141
    %v4150 = vsel %vm274, 5, 0
    %v4151 = vsel %vm275, 5, 0
    %v4152 = vsel %vm276, 5, 0
    %v4153 = vsel %vm277, 5, 0
    %v4154 = vsel %vm278, 5, 0
    %v4155 = vsel %vm279, 5, 0
    %v4156 = vsel %vm280, 5, 0
    %v4157 = vsel %vm281, 5, 0
    %vm4158 = vcmp.lt.s32.totalorder %v4150, %v2112
    %vm4159 = vcmp.lt.s32.totalorder %v4151, %v2112
    %vm4160 = vcmp.lt.s32.totalorder %v4152, %v2112
    %vm4161 = vcmp.lt.s32.totalorder %v4153, %v2112
    %vm4162 = vcmp.lt.s32.totalorder %v4154, %v2112
    %vm4163 = vcmp.lt.s32.totalorder %v4155, %v2112
    %vm4164 = vcmp.lt.s32.totalorder %v4156, %v2112
    %vm4165 = vcmp.lt.s32.totalorder %v4157, %v2112
    %v4166 = vsel %vm4158, %v4142, %v3757
    %v4167 = vsel %vm4159, %v4143, %v3758
    %v4168 = vsel %vm4160, %v4144, %v3759
    %v4169 = vsel %vm4161, %v4145, %v3760
    %v4170 = vsel %vm4162, %v4146, %v3761
    %v4171 = vsel %vm4163, %v4147, %v3762
    %v4172 = vsel %vm4164, %v4148, %v3763
    %v4173 = vsel %vm4165, %v4149, %v3764
    %4174 = vst [vmem:[#allocation3] sm:$0xff] %v4166
    %4175 = vst [vmem:[#allocation3 + $0x8] sm:$0xff] %v4167
    %4176 = vst [vmem:[#allocation3 + $0x10] sm:$0xff] %v4168
    %4177 = vst [vmem:[#allocation3 + $0x18] sm:$0xff] %v4169
    %4178 = vst [vmem:[#allocation3 + $0x20] sm:$0xff] %v4170
    %4179 = vst [vmem:[#allocation3 + $0x28] sm:$0xff] %v4171
    %4180 = vst [vmem:[#allocation3 + $0x30] sm:$0xff] %v4172
    %4181 = vst [vmem:[#allocation3 + $0x38] sm:$0xff] %v4173
    // Predicated region
    $region26: #{tpu_custom_call.1} parent=1 // pred_check
      _
    $region27: #{tpu_custom_call.1} parent=1 // pred_check_branch
      %4183 = sbr.rel (0) target = $region29
    $region28: #{tpu_custom_call.1} parent=1 // pred_region
      %s4185 = ssub.s32 1024, 1024
      %4186 = vsyncadd [#allocation4], %s4185
      %s4187 = sshll.u32 [#allocation3], 4
      %s4188 = int_to_ptr.vmem [resolvable:$true] %s4187
      %4193 = dma.vmem_to_hbm [thread:$0]  %s4188, 1024, %s6, [#allocation4], 128, 128, 8
    $region29: #{tpu_custom_call.1} parent=1 // pred_fallthru
      _
    // Predicated region
    $region30: #{tpu_custom_call.1} parent=1 // pred_check
      _
    $region31: #{tpu_custom_call.1} parent=1 // pred_check_branch
      %4195 = sbr.rel (0) target = $region33
    $region32: #{tpu_custom_call.1} parent=1 // pred_region
      %4196 = dma.done [#allocation4], 1024
    $region33: #{tpu_custom_call.1} parent=1 // pred_fallthru
      _
    %4197 = vsyncpa [#allocation4], 1

</llo_original>
